<compile_context>
chip_gen: v7x
topology: tpu7x:2x2x1
jax: 0.10.0
libtpu: 0.0.40
codegen_flags: <defaults>
</compile_context>

<pallas_src>
import functools

import jax
import jax.numpy as jnp
from jax.experimental import pallas as pl
from jax.experimental.pallas import tpu as pltpu

D_IN = 28 * 28          # 784
ENC_PAD = 128           # encoded width padded 3 -> 128 for lane-dense stores

# Logical (PyTorch) layer dims: encoder 784->128->64->12->3, decoder 3->12->64->128->784
DIMS_ENC = [(D_IN, 128), (128, 64), (64, 12), (12, 3)]
DIMS_DEC = [(3, 12), (12, 64), (64, 128), (128, D_IN)]
ALL_DIMS = DIMS_ENC + DIMS_DEC  # 8 layers

# Dims as actually seen by the kernel (bottleneck padded 3 -> ENC_PAD with zeros;
# mathematically identical since the padded weight rows/cols are zero).
PADDED_DIMS = [
    (D_IN, 128), (128, 64), (64, 12), (12, ENC_PAD),
    (ENC_PAD, 12), (12, 64), (64, 128), (128, D_IN),
]


def _autoencode_kernel(x_ref, *refs):
    # refs = (w1, b1, ..., w8, b8, enc_ref, dec_ref)
    param_refs = refs[:-2]
    enc_ref, dec_ref = refs[-2], refs[-1]

    def linear(h, layer_idx):
        # bf16 x bf16 matmul on the MXU, f32 accumulation, f32 bias add.
        w = param_refs[2 * layer_idx][...].astype(jnp.bfloat16)
        b = param_refs[2 * layer_idx + 1][...].astype(jnp.float32)
        return jnp.dot(h.astype(jnp.bfloat16), w,
                       preferred_element_type=jnp.float32) + b

    h = x_ref[...].astype(jnp.float32)

    # ----- encoder -----
    h = jnp.tanh(linear(h, 0))
    h = jnp.tanh(linear(h, 1))
    h = jnp.tanh(linear(h, 2))
    encoded = linear(h, 3)                 # (tile_b, 128); cols 3.. are exactly zero
    enc_ref[...] = encoded.astype(enc_ref.dtype)

    # ----- decoder -----
    h = jnp.tanh(linear(encoded, 4))       # padded rows of W5 are zero -> identical math
    h = jnp.tanh(linear(h, 5))
    h = jnp.tanh(linear(h, 6))
    z = linear(h, 7)
    # sigmoid(z) = 0.5 * (tanh(0.5*z) + 1): keeps the transcendental on the EUP slot.
    dec_ref[...] = (0.5 * (jnp.tanh(0.5 * z) + 1.0)).astype(dec_ref.dtype)


def _prep_params(params):
    """Pad the 3-wide bottleneck to ENC_PAD and cast weights to bf16 (biases stay f32)."""
    p = list(params)
    p[6] = jnp.pad(p[6], ((0, 0), (0, ENC_PAD - 3)))   # W4: (12, 3)  -> (12, 128)
    p[7] = jnp.pad(p[7], ((0, 0), (0, ENC_PAD - 3)))   # b4: (1, 3)   -> (1, 128)
    p[8] = jnp.pad(p[8], ((0, ENC_PAD - 3), (0, 0)))   # W5: (3, 12)  -> (128, 12)
    for i in range(0, len(p), 2):                      # weights -> bf16
        p[i] = p[i].astype(jnp.bfloat16)
    return p


@functools.partial(jax.jit, static_argnames=("tile_b",))
def autoencode_forward(x, params, tile_b=256):
    """x: (B, 784) float32. params: flat list [w1, b1, ..., w8, b8] (torch shapes).

    Returns (encoded (B, 3), decoded (B, 784)), both float32.
    """
    B, D = x.shape
    assert D == D_IN

    params = _prep_params(params)

    # Pad batch to a multiple of the batch tile; extra rows are sliced off at the end.
    B_pad = ((B + tile_b - 1) // tile_b) * tile_b
    if B_pad != B:
        x = jnp.pad(x, ((0, B_pad - B), (0, 0)))

    grid = (B_pad // tile_b,)

    # x: tiled over the batch axis, full feature width per tile.
    x_spec = pl.BlockSpec((tile_b, D_IN), lambda i: (i, 0))

    # Weights / biases: whole (padded) arrays resident for every grid step.
    param_specs = []
    for (din, dout) in PADDED_DIMS:
        param_specs.append(pl.BlockSpec((din, dout), lambda i: (0, 0)))  # weight
        param_specs.append(pl.BlockSpec((1, dout), lambda i: (0, 0)))    # bias

    out_shapes = (
        jax.ShapeDtypeStruct((B_pad, ENC_PAD), jnp.float32),   # encoded (lane-dense)
        jax.ShapeDtypeStruct((B_pad, D_IN), jnp.float32),      # decoded
    )
    out_specs = (
        pl.BlockSpec((tile_b, ENC_PAD), lambda i: (i, 0)),
        pl.BlockSpec((tile_b, D_IN), lambda i: (i, 0)),
    )

    enc_padded, dec_padded = pl.pallas_call(
        _autoencode_kernel,
        out_shape=out_shapes,
        grid_spec=pltpu.PrefetchScalarGridSpec(
            num_scalar_prefetch=0,
            grid=grid,
            in_specs=[x_spec] + param_specs,
            out_specs=out_specs,
        ),
        compiler_params=pltpu.CompilerParams(
            dimension_semantics=("parallel",),
            vmem_limit_bytes=48 * 1024 * 1024,  # headroom for big tiles; < v7x 64 MiB
        ),
    )(x, *params)

    return enc_padded[:B, :3], dec_padded[:B]


def init_params(key):
    """Deterministic init mimicking torch.nn.Linear default (U(-1/sqrt(fan_in), +))."""
    params = []
    for (din, dout) in ALL_DIMS:
        key, kw, kb = jax.random.split(key, 3)
        bound = 1.0 / (din ** 0.5)
        w = jax.random.uniform(kw, (din, dout), jnp.float32, -bound, bound)
        b = jax.random.uniform(kb, (1, dout), jnp.float32, -bound, bound)
        params += [w, b]
    return params


def reference_forward(x, params):
    """Pure-JAX f32 reference for correctness check (unpadded params)."""
    h = x
    for li in range(4):
        h = h @ params[2 * li] + params[2 * li + 1]
        if li < 3:
            h = jnp.tanh(h)
    enc = h
    h = enc
    for li in range(4, 8):
        h = h @ params[2 * li] + params[2 * li + 1]
        h = jnp.tanh(h) if li < 7 else jax.nn.sigmoid(h)
    return enc, h


if __name__ == "__main__":
    key = jax.random.PRNGKey(0)
    k_x, k_p = jax.random.split(key)

    # Not a multiple of tile_b on purpose: exercises the batch-padding path and
    # yields 2 grid steps (512 / 256) so the "parallel" axis can split across TCs.
    B = 384
    x = jax.random.normal(k_x, (B, D_IN), jnp.float32)
    params = init_params(k_p)

    encoded, decoded = autoencode_forward(x, params)
    jax.block_until_ready((encoded, decoded))

    enc_ref, dec_ref = reference_forward(x, params)
    assert encoded.shape == (B, 3) and decoded.shape == (B, D_IN)
    # bf16 matmul operands (f32 accumulation) -> compare against f32 ref with
    # loosened tolerance.
    assert jnp.allclose(encoded, enc_ref, atol=3e-2, rtol=3e-2)
    assert jnp.allclose(decoded, dec_ref, atol=3e-2, rtol=3e-2)

    print("KERNEL_OK")
</pallas_src>

<mosaic_0001>
module attributes {stable_mosaic.version = 11 : i64} {
  func.func @_autoencode_kernel(%arg0: i32, %arg1: memref<256x784xf32, #tpu.memory_space<vmem>>, %arg2: memref<784x128xbf16, #tpu.memory_space<vmem>>, %arg3: memref<1x128xf32, #tpu.memory_space<vmem>>, %arg4: memref<128x64xbf16, #tpu.memory_space<vmem>>, %arg5: memref<1x64xf32, #tpu.memory_space<vmem>>, %arg6: memref<64x12xbf16, #tpu.memory_space<vmem>>, %arg7: memref<1x12xf32, #tpu.memory_space<vmem>>, %arg8: memref<12x128xbf16, #tpu.memory_space<vmem>>, %arg9: memref<1x128xf32, #tpu.memory_space<vmem>>, %arg10: memref<128x12xbf16, #tpu.memory_space<vmem>>, %arg11: memref<1x12xf32, #tpu.memory_space<vmem>>, %arg12: memref<12x64xbf16, #tpu.memory_space<vmem>>, %arg13: memref<1x64xf32, #tpu.memory_space<vmem>>, %arg14: memref<64x128xbf16, #tpu.memory_space<vmem>>, %arg15: memref<1x128xf32, #tpu.memory_space<vmem>>, %arg16: memref<128x784xbf16, #tpu.memory_space<vmem>>, %arg17: memref<1x784xf32, #tpu.memory_space<vmem>>, %arg18: memref<256x128xf32, #tpu.memory_space<vmem>>, %arg19: memref<256x784xf32, #tpu.memory_space<vmem>>) attributes {dimension_semantics = [#tpu.dimension_semantics<parallel>], iteration_bounds = array<i64: 2>, scalar_prefetch = 0 : i64, scratch_operands = 0 : i64, tpu.core_type = #tpu.core_type<tc>, window_params = [{transform_indices = @transform_0, window_bounds = array<i64: 256, 784>}, {pipeline_mode = #tpu.pipeline_mode<synchronous>, transform_indices = @transform_1, window_bounds = array<i64: 784, 128>}, {pipeline_mode = #tpu.pipeline_mode<synchronous>, transform_indices = @transform_2, window_bounds = array<i64: 1, 128>}, {pipeline_mode = #tpu.pipeline_mode<synchronous>, transform_indices = @transform_3, window_bounds = array<i64: 128, 64>}, {pipeline_mode = #tpu.pipeline_mode<synchronous>, transform_indices = @transform_4, window_bounds = array<i64: 1, 64>}, {pipeline_mode = #tpu.pipeline_mode<synchronous>, transform_indices = @transform_5, window_bounds = array<i64: 64, 12>}, {pipeline_mode = #tpu.pipeline_mode<synchronous>, transform_indices = @transform_6, window_bounds = array<i64: 1, 12>}, {pipeline_mode = #tpu.pipeline_mode<synchronous>, transform_indices = @transform_7, window_bounds = array<i64: 12, 128>}, {pipeline_mode = #tpu.pipeline_mode<synchronous>, transform_indices = @transform_8, window_bounds = array<i64: 1, 128>}, {pipeline_mode = #tpu.pipeline_mode<synchronous>, transform_indices = @transform_9, window_bounds = array<i64: 128, 12>}, {pipeline_mode = #tpu.pipeline_mode<synchronous>, transform_indices = @transform_10, window_bounds = array<i64: 1, 12>}, {pipeline_mode = #tpu.pipeline_mode<synchronous>, transform_indices = @transform_11, window_bounds = array<i64: 12, 64>}, {pipeline_mode = #tpu.pipeline_mode<synchronous>, transform_indices = @transform_12, window_bounds = array<i64: 1, 64>}, {pipeline_mode = #tpu.pipeline_mode<synchronous>, transform_indices = @transform_13, window_bounds = array<i64: 64, 128>}, {pipeline_mode = #tpu.pipeline_mode<synchronous>, transform_indices = @transform_14, window_bounds = array<i64: 1, 128>}, {pipeline_mode = #tpu.pipeline_mode<synchronous>, transform_indices = @transform_15, window_bounds = array<i64: 128, 784>}, {pipeline_mode = #tpu.pipeline_mode<synchronous>, transform_indices = @transform_16, window_bounds = array<i64: 1, 784>}, {transform_indices = @transform_17, window_bounds = array<i64: 256, 128>}, {transform_indices = @transform_18, window_bounds = array<i64: 256, 784>}]} {
    %c0 = arith.constant 0 : index
    %c0_0 = arith.constant 0 : index
    %0 = vector.load %arg1[%c0, %c0_0] : memref<256x784xf32, #tpu.memory_space<vmem>>, vector<256x784xf32>
    %c0_1 = arith.constant 0 : index
    %c0_2 = arith.constant 0 : index
    %1 = vector.load %arg2[%c0_1, %c0_2] : memref<784x128xbf16, #tpu.memory_space<vmem>>, vector<784x128xbf16>
    %c0_3 = arith.constant 0 : index
    %c0_4 = arith.constant 0 : index
    %2 = vector.load %arg3[%c0_3, %c0_4] : memref<1x128xf32, #tpu.memory_space<vmem>>, vector<1x128xf32>
    %3 = arith.truncf %0 : vector<256x784xf32> to vector<256x784xbf16>
    %cst = arith.constant dense<0.000000e+00> : vector<256x128xf32>
    %4 = tpu.matmul %3, %1, %cst {dimension_numbers = #tpu.dot_dimension_numbers<[1], [0], [0], [1], [0, 0, 1, 1], [], []>} : vector<256x784xbf16>, vector<784x128xbf16>, vector<256x128xf32> -> vector<256x128xf32>
    %5 = vector.broadcast %2 : vector<1x128xf32> to vector<256x128xf32>
    %6 = arith.addf %4, %5 : vector<256x128xf32>
    %7 = math.tanh %6 : vector<256x128xf32>
    %c0_5 = arith.constant 0 : index
    %c0_6 = arith.constant 0 : index
    %8 = vector.load %arg4[%c0_5, %c0_6] : memref<128x64xbf16, #tpu.memory_space<vmem>>, vector<128x64xbf16>
    %c0_7 = arith.constant 0 : index
    %c0_8 = arith.constant 0 : index
    %9 = vector.load %arg5[%c0_7, %c0_8] : memref<1x64xf32, #tpu.memory_space<vmem>>, vector<1x64xf32>
    %10 = arith.truncf %7 : vector<256x128xf32> to vector<256x128xbf16>
    %cst_9 = arith.constant dense<0.000000e+00> : vector<256x64xf32>
    %11 = tpu.matmul %10, %8, %cst_9 {dimension_numbers = #tpu.dot_dimension_numbers<[1], [0], [0], [1], [0, 0, 1, 1], [], []>} : vector<256x128xbf16>, vector<128x64xbf16>, vector<256x64xf32> -> vector<256x64xf32>
    %12 = vector.broadcast %9 : vector<1x64xf32> to vector<256x64xf32>
    %13 = arith.addf %11, %12 : vector<256x64xf32>
    %14 = math.tanh %13 : vector<256x64xf32>
    %c0_10 = arith.constant 0 : index
    %c0_11 = arith.constant 0 : index
    %15 = vector.load %arg6[%c0_10, %c0_11] : memref<64x12xbf16, #tpu.memory_space<vmem>>, vector<64x12xbf16>
    %c0_12 = arith.constant 0 : index
    %c0_13 = arith.constant 0 : index
    %16 = vector.load %arg7[%c0_12, %c0_13] : memref<1x12xf32, #tpu.memory_space<vmem>>, vector<1x12xf32>
    %17 = arith.truncf %14 : vector<256x64xf32> to vector<256x64xbf16>
    %cst_14 = arith.constant dense<0.000000e+00> : vector<256x12xf32>
    %18 = tpu.matmul %17, %15, %cst_14 {dimension_numbers = #tpu.dot_dimension_numbers<[1], [0], [0], [1], [0, 0, 1, 1], [], []>} : vector<256x64xbf16>, vector<64x12xbf16>, vector<256x12xf32> -> vector<256x12xf32>
    %19 = vector.broadcast %16 : vector<1x12xf32> to vector<256x12xf32>
    %20 = arith.addf %18, %19 : vector<256x12xf32>
    %21 = math.tanh %20 : vector<256x12xf32>
    %c0_15 = arith.constant 0 : index
    %c0_16 = arith.constant 0 : index
    %22 = vector.load %arg8[%c0_15, %c0_16] : memref<12x128xbf16, #tpu.memory_space<vmem>>, vector<12x128xbf16>
    %c0_17 = arith.constant 0 : index
    %c0_18 = arith.constant 0 : index
    %23 = vector.load %arg9[%c0_17, %c0_18] : memref<1x128xf32, #tpu.memory_space<vmem>>, vector<1x128xf32>
    %24 = arith.truncf %21 : vector<256x12xf32> to vector<256x12xbf16>
    %cst_19 = arith.constant dense<0.000000e+00> : vector<256x128xf32>
    %25 = tpu.matmul %24, %22, %cst_19 {dimension_numbers = #tpu.dot_dimension_numbers<[1], [0], [0], [1], [0, 0, 1, 1], [], []>} : vector<256x12xbf16>, vector<12x128xbf16>, vector<256x128xf32> -> vector<256x128xf32>
    %26 = vector.broadcast %23 : vector<1x128xf32> to vector<256x128xf32>
    %27 = arith.addf %25, %26 : vector<256x128xf32>
    %c0_20 = arith.constant 0 : index
    %c0_21 = arith.constant 0 : index
    %28 = vector.load %arg18[%c0_20, %c0_21] : memref<256x128xf32, #tpu.memory_space<vmem>>, vector<256x128xf32>
    tpu.vector_store %arg18[%c0_20, %c0_21], %27 {strides = array<i32>} : memref<256x128xf32, #tpu.memory_space<vmem>>, vector<256x128xf32>,
    %c0_22 = arith.constant 0 : index
    %c0_23 = arith.constant 0 : index
    %29 = vector.load %arg10[%c0_22, %c0_23] : memref<128x12xbf16, #tpu.memory_space<vmem>>, vector<128x12xbf16>
    %c0_24 = arith.constant 0 : index
    %c0_25 = arith.constant 0 : index
    %30 = vector.load %arg11[%c0_24, %c0_25] : memref<1x12xf32, #tpu.memory_space<vmem>>, vector<1x12xf32>
    %31 = arith.truncf %27 : vector<256x128xf32> to vector<256x128xbf16>
    %cst_26 = arith.constant dense<0.000000e+00> : vector<256x12xf32>
    %32 = tpu.matmul %31, %29, %cst_26 {dimension_numbers = #tpu.dot_dimension_numbers<[1], [0], [0], [1], [0, 0, 1, 1], [], []>} : vector<256x128xbf16>, vector<128x12xbf16>, vector<256x12xf32> -> vector<256x12xf32>
    %33 = vector.broadcast %30 : vector<1x12xf32> to vector<256x12xf32>
    %34 = arith.addf %32, %33 : vector<256x12xf32>
    %35 = math.tanh %34 : vector<256x12xf32>
    %c0_27 = arith.constant 0 : index
    %c0_28 = arith.constant 0 : index
    %36 = vector.load %arg12[%c0_27, %c0_28] : memref<12x64xbf16, #tpu.memory_space<vmem>>, vector<12x64xbf16>
    %c0_29 = arith.constant 0 : index
    %c0_30 = arith.constant 0 : index
    %37 = vector.load %arg13[%c0_29, %c0_30] : memref<1x64xf32, #tpu.memory_space<vmem>>, vector<1x64xf32>
    %38 = arith.truncf %35 : vector<256x12xf32> to vector<256x12xbf16>
    %cst_31 = arith.constant dense<0.000000e+00> : vector<256x64xf32>
    %39 = tpu.matmul %38, %36, %cst_31 {dimension_numbers = #tpu.dot_dimension_numbers<[1], [0], [0], [1], [0, 0, 1, 1], [], []>} : vector<256x12xbf16>, vector<12x64xbf16>, vector<256x64xf32> -> vector<256x64xf32>
    %40 = vector.broadcast %37 : vector<1x64xf32> to vector<256x64xf32>
    %41 = arith.addf %39, %40 : vector<256x64xf32>
    %42 = math.tanh %41 : vector<256x64xf32>
    %c0_32 = arith.constant 0 : index
    %c0_33 = arith.constant 0 : index
    %43 = vector.load %arg14[%c0_32, %c0_33] : memref<64x128xbf16, #tpu.memory_space<vmem>>, vector<64x128xbf16>
    %c0_34 = arith.constant 0 : index
    %c0_35 = arith.constant 0 : index
    %44 = vector.load %arg15[%c0_34, %c0_35] : memref<1x128xf32, #tpu.memory_space<vmem>>, vector<1x128xf32>
    %45 = arith.truncf %42 : vector<256x64xf32> to vector<256x64xbf16>
    %cst_36 = arith.constant dense<0.000000e+00> : vector<256x128xf32>
    %46 = tpu.matmul %45, %43, %cst_36 {dimension_numbers = #tpu.dot_dimension_numbers<[1], [0], [0], [1], [0, 0, 1, 1], [], []>} : vector<256x64xbf16>, vector<64x128xbf16>, vector<256x128xf32> -> vector<256x128xf32>
    %47 = vector.broadcast %44 : vector<1x128xf32> to vector<256x128xf32>
    %48 = arith.addf %46, %47 : vector<256x128xf32>
    %49 = math.tanh %48 : vector<256x128xf32>
    %c0_37 = arith.constant 0 : index
    %c0_38 = arith.constant 0 : index
    %50 = vector.load %arg16[%c0_37, %c0_38] : memref<128x784xbf16, #tpu.memory_space<vmem>>, vector<128x784xbf16>
    %c0_39 = arith.constant 0 : index
    %c0_40 = arith.constant 0 : index
    %51 = vector.load %arg17[%c0_39, %c0_40] : memref<1x784xf32, #tpu.memory_space<vmem>>, vector<1x784xf32>
    %52 = arith.truncf %49 : vector<256x128xf32> to vector<256x128xbf16>
    %cst_41 = arith.constant dense<0.000000e+00> : vector<256x784xf32>
    %53 = tpu.matmul %52, %50, %cst_41 {dimension_numbers = #tpu.dot_dimension_numbers<[1], [0], [0], [1], [0, 0, 1, 1], [], []>} : vector<256x128xbf16>, vector<128x784xbf16>, vector<256x784xf32> -> vector<256x784xf32>
    %54 = vector.broadcast %51 : vector<1x784xf32> to vector<256x784xf32>
    %55 = arith.addf %53, %54 : vector<256x784xf32>
    %cst_42 = arith.constant 5.000000e-01 : f32
    %56 = vector.broadcast %cst_42 : f32 to vector<256x784xf32>
    %57 = arith.mulf %56, %55 : vector<256x784xf32>
    %58 = math.tanh %57 : vector<256x784xf32>
    %cst_43 = arith.constant 1.000000e+00 : f32
    %59 = vector.broadcast %cst_43 : f32 to vector<256x784xf32>
    %60 = arith.addf %58, %59 : vector<256x784xf32>
    %cst_44 = arith.constant 5.000000e-01 : f32
    %61 = vector.broadcast %cst_44 : f32 to vector<256x784xf32>
    %62 = arith.mulf %61, %60 : vector<256x784xf32>
    %c0_45 = arith.constant 0 : index
    %c0_46 = arith.constant 0 : index
    %63 = vector.load %arg19[%c0_45, %c0_46] : memref<256x784xf32, #tpu.memory_space<vmem>>, vector<256x784xf32>
    tpu.vector_store %arg19[%c0_45, %c0_46], %62 {strides = array<i32>} : memref<256x784xf32, #tpu.memory_space<vmem>>, vector<256x784xf32>,
    return
  }
  func.func @transform_0(%arg0: i32) -> (i32, i32) {
    %c0_i32 = arith.constant 0 : i32
    %c0_i32_0 = arith.constant 0 : i32
    return %arg0, %c0_i32 : i32, i32
  }
  func.func @transform_1(%arg0: i32) -> (i32, i32) {
    %c0_i32 = arith.constant 0 : i32
    %c0_i32_0 = arith.constant 0 : i32
    %c0_i32_1 = arith.constant 0 : i32
    return %c0_i32, %c0_i32_0 : i32, i32
  }
  func.func @transform_2(%arg0: i32) -> (i32, i32) {
    %c0_i32 = arith.constant 0 : i32
    %c0_i32_0 = arith.constant 0 : i32
    %c0_i32_1 = arith.constant 0 : i32
    return %c0_i32, %c0_i32_0 : i32, i32
  }
  func.func @transform_3(%arg0: i32) -> (i32, i32) {
    %c0_i32 = arith.constant 0 : i32
    %c0_i32_0 = arith.constant 0 : i32
    %c0_i32_1 = arith.constant 0 : i32
    return %c0_i32, %c0_i32_0 : i32, i32
  }
  func.func @transform_4(%arg0: i32) -> (i32, i32) {
    %c0_i32 = arith.constant 0 : i32
    %c0_i32_0 = arith.constant 0 : i32
    %c0_i32_1 = arith.constant 0 : i32
    return %c0_i32, %c0_i32_0 : i32, i32
  }
  func.func @transform_5(%arg0: i32) -> (i32, i32) {
    %c0_i32 = arith.constant 0 : i32
    %c0_i32_0 = arith.constant 0 : i32
    %c0_i32_1 = arith.constant 0 : i32
    return %c0_i32, %c0_i32_0 : i32, i32
  }
  func.func @transform_6(%arg0: i32) -> (i32, i32) {
    %c0_i32 = arith.constant 0 : i32
    %c0_i32_0 = arith.constant 0 : i32
    %c0_i32_1 = arith.constant 0 : i32
    return %c0_i32, %c0_i32_0 : i32, i32
  }
  func.func @transform_7(%arg0: i32) -> (i32, i32) {
    %c0_i32 = arith.constant 0 : i32
    %c0_i32_0 = arith.constant 0 : i32
    %c0_i32_1 = arith.constant 0 : i32
    return %c0_i32, %c0_i32_0 : i32, i32
  }
  func.func @transform_8(%arg0: i32) -> (i32, i32) {
    %c0_i32 = arith.constant 0 : i32
    %c0_i32_0 = arith.constant 0 : i32
    %c0_i32_1 = arith.constant 0 : i32
    return %c0_i32, %c0_i32_0 : i32, i32
  }
  func.func @transform_9(%arg0: i32) -> (i32, i32) {
    %c0_i32 = arith.constant 0 : i32
    %c0_i32_0 = arith.constant 0 : i32
    %c0_i32_1 = arith.constant 0 : i32
    return %c0_i32, %c0_i32_0 : i32, i32
  }
  func.func @transform_10(%arg0: i32) -> (i32, i32) {
    %c0_i32 = arith.constant 0 : i32
    %c0_i32_0 = arith.constant 0 : i32
    %c0_i32_1 = arith.constant 0 : i32
    return %c0_i32, %c0_i32_0 : i32, i32
  }
  func.func @transform_11(%arg0: i32) -> (i32, i32) {
    %c0_i32 = arith.constant 0 : i32
    %c0_i32_0 = arith.constant 0 : i32
    %c0_i32_1 = arith.constant 0 : i32
    return %c0_i32, %c0_i32_0 : i32, i32
  }
  func.func @transform_12(%arg0: i32) -> (i32, i32) {
    %c0_i32 = arith.constant 0 : i32
    %c0_i32_0 = arith.constant 0 : i32
    %c0_i32_1 = arith.constant 0 : i32
    return %c0_i32, %c0_i32_0 : i32, i32
  }
  func.func @transform_13(%arg0: i32) -> (i32, i32) {
    %c0_i32 = arith.constant 0 : i32
    %c0_i32_0 = arith.constant 0 : i32
    %c0_i32_1 = arith.constant 0 : i32
    return %c0_i32, %c0_i32_0 : i32, i32
  }
  func.func @transform_14(%arg0: i32) -> (i32, i32) {
    %c0_i32 = arith.constant 0 : i32
    %c0_i32_0 = arith.constant 0 : i32
    %c0_i32_1 = arith.constant 0 : i32
    return %c0_i32, %c0_i32_0 : i32, i32
  }
  func.func @transform_15(%arg0: i32) -> (i32, i32) {
    %c0_i32 = arith.constant 0 : i32
    %c0_i32_0 = arith.constant 0 : i32
    %c0_i32_1 = arith.constant 0 : i32
    return %c0_i32, %c0_i32_0 : i32, i32
  }
  func.func @transform_16(%arg0: i32) -> (i32, i32) {
    %c0_i32 = arith.constant 0 : i32
    %c0_i32_0 = arith.constant 0 : i32
    %c0_i32_1 = arith.constant 0 : i32
    return %c0_i32, %c0_i32_0 : i32, i32
  }
  func.func @transform_17(%arg0: i32) -> (i32, i32) {
    %c0_i32 = arith.constant 0 : i32
    %c0_i32_0 = arith.constant 0 : i32
    return %arg0, %c0_i32 : i32, i32
  }
  func.func @transform_18(%arg0: i32) -> (i32, i32) {
    %c0_i32 = arith.constant 0 : i32
    %c0_i32_0 = arith.constant 0 : i32
    return %arg0, %c0_i32 : i32, i32
  }
}

</mosaic_0001>

<llo_original>
// kernel: autoencode_forward.1
$region0: #{autoencode_forward.1}
  #allocation0 [shape = 'u32[]', space=smem, size = 0x4, offset = 0x4, fixed_abs, tag = 'smem constant byte address 0x4 - core index']
  #allocation1 [shape = 'u32[144,128]{1,0:T(1,128)}', space=vmem, size = 0x12000, scoped, tag = 'internal scratch']
  %s0 = inlined_call_operand.vmem [shape: f32[512,784], index: 0, kind: input, shape index: {}]
  %s1 = inlined_call_operand.vmem [shape: bf16[784,128], index: 1, kind: input, shape index: {}]
  %s2 = inlined_call_operand.vmem [shape: f32[1,128], index: 2, kind: input, shape index: {}]
  %s3 = inlined_call_operand.vmem [shape: bf16[128,64], index: 3, kind: input, shape index: {}]
  %s4 = inlined_call_operand.vmem [shape: f32[1,64], index: 4, kind: input, shape index: {}]
  %s5 = inlined_call_operand.vmem [shape: bf16[64,12], index: 5, kind: input, shape index: {}]
  %s6 = inlined_call_operand.vmem [shape: f32[1,12], index: 6, kind: input, shape index: {}]
  %s7 = inlined_call_operand.vmem [shape: bf16[12,128], index: 7, kind: input, shape index: {}]
  %s8 = inlined_call_operand.vmem [shape: f32[1,128], index: 8, kind: input, shape index: {}]
  %s9 = inlined_call_operand.vmem [shape: bf16[128,12], index: 9, kind: input, shape index: {}]
  %s10 = inlined_call_operand.vmem [shape: f32[1,12], index: 10, kind: input, shape index: {}]
  %s11 = inlined_call_operand.vmem [shape: bf16[12,64], index: 11, kind: input, shape index: {}]
  %s12 = inlined_call_operand.vmem [shape: f32[1,64], index: 12, kind: input, shape index: {}]
  %s13 = inlined_call_operand.vmem [shape: bf16[64,128], index: 13, kind: input, shape index: {}]
  %s14 = inlined_call_operand.vmem [shape: f32[1,128], index: 14, kind: input, shape index: {}]
  %s15 = inlined_call_operand.vmem [shape: bf16[128,784], index: 15, kind: input, shape index: {}]
  %s16 = inlined_call_operand.vmem [shape: f32[1,784], index: 16, kind: input, shape index: {}]
  %s17 = inlined_call_operand.vmem [shape: f32[512,128], index: 17, kind: output, shape index: {0}]
  %s18 = inlined_call_operand.vmem [shape: f32[512,784], index: 18, kind: output, shape index: {1}]
  %19 = xla_tuple %s17, %s18
  %s20 = sld [smem:[#allocation0]]
  $region109: #{autoencode_forward.1} parent=0
    _
  %s22 = ssub.s32 1, %s20
  %s23 = scalar_select 0, %s22, %s20
  loop: start=0, step=1, limit=4
  $region2: #{autoencode_forward.1} parent=0 // loop_pre_header
    _
  $region3: #{autoencode_forward.1} parent=0 // loop_header
    %s25 = sphi 0, %s29
    %p26 = scmp.ge.s32.totalorder %s25, 4
    %s35 = sphi 0, %s37
    %s38 = sphi 0, %s35
    %s39 = sphi 0, %s38
    %s55 = sphi 0, %s39
    %s59 = sphi 0, %s59
    %s61 = sphi 0, %s59
    %s62 = sphi 0, %s61
    %s76 = sphi 0, %s62
    %s80 = sphi 0, %s80
    %s82 = sphi 0, %s80
    %s83 = sphi 0, %s82
    %s97 = sphi 0, %s83
    %s101 = sphi 0, %s101
    %s103 = sphi 0, %s101
    %s104 = sphi 0, %s103
    %s118 = sphi 0, %s104
    %s122 = sphi 0, %s122
    %s124 = sphi 0, %s122
    %s125 = sphi 0, %s124
    %s139 = sphi 0, %s125
    %s143 = sphi 0, %s143
    %s145 = sphi 0, %s143
    %s146 = sphi 0, %s145
    %s160 = sphi 0, %s146
    %s164 = sphi 0, %s164
    %s166 = sphi 0, %s164
    %s167 = sphi 0, %s166
    %s181 = sphi 0, %s167
    %s185 = sphi 0, %s185
    %s187 = sphi 0, %s185
    %s188 = sphi 0, %s187
    %s202 = sphi 0, %s188
    %s206 = sphi 0, %s206
    %s208 = sphi 0, %s206
    %s209 = sphi 0, %s208
    %s223 = sphi 0, %s209
    %s227 = sphi 0, %s227
    %s229 = sphi 0, %s227
    %s230 = sphi 0, %s229
    %s244 = sphi 0, %s230
    %s248 = sphi 0, %s248
    %s250 = sphi 0, %s248
    %s251 = sphi 0, %s250
    %s265 = sphi 0, %s251
    %s269 = sphi 0, %s269
    %s271 = sphi 0, %s269
    %s272 = sphi 0, %s271
    %s286 = sphi 0, %s272
    %s290 = sphi 0, %s290
    %s292 = sphi 0, %s290
    %s293 = sphi 0, %s292
    %s307 = sphi 0, %s293
    %s311 = sphi 0, %s311
    %s313 = sphi 0, %s311
    %s314 = sphi 0, %s313
    %s328 = sphi 0, %s314
    %s332 = sphi 0, %s332
    %s334 = sphi 0, %s332
    %s335 = sphi 0, %s334
    %s349 = sphi 0, %s335
    %s353 = sphi 0, %s353
    %s355 = sphi 0, %s353
    %s356 = sphi 0, %s355
    %s370 = sphi 0, %s356
    %s374 = sphi 0, %s374
    %s376 = sphi 0, %s374
    %s377 = sphi 0, %s376
    %s391 = sphi 0, %s377
    %s397 = sphi 0, %s399
    %s400 = sphi 0, %s397
    %s401 = sphi 0, %s400
    %s417 = sphi 0, %s401
    %s423 = sphi 0, %s425
    %s426 = sphi 0, %s423
    %s427 = sphi 0, %s426
    %s443 = sphi 0, %s427
  $region4: #{autoencode_forward.1} parent=0 // loop_header_branch
    %28 = sbr.rel (%p26) target = $region8
  $region5: #{autoencode_forward.1} parent=0 // loop_body
    %s30 = ssub.s32 %s25, 1
    %s31 = ssub.s32 %s25, 2
    %s32 = sadd.s32 %s25, 1
    %s33 = ssub.s32 %s25, %s32
    %p34 = scmp.eq.s32.totalorder %s33, 0
    %s36 = sadd.s32 %s35, 1
    %s37 = scalar_select %p34, %s35, %s36
    %p40 = pneg %p34
    %p41 = scmp.eq.s32.totalorder %s25, 1
    %p42 = por %p40, %p41
    %p43 = scmp.ne.s32.totalorder %s35, %s38
    %p44 = scmp.eq.s32.totalorder %s25, 0
    %p45 = por %p43, %p44
    %p46 = scmp.ne.s32.totalorder %s35, %s38
    %p47 = scmp.eq.s32.totalorder %s30, 1
    %p48 = por %p46, %p47
    %p49 = scmp.ne.s32.totalorder %s38, %s39
    %p50 = scmp.eq.s32.totalorder %s30, 0
    %p51 = por %p49, %p50
    %p52 = scmp.ne.s32.totalorder %s38, %s39
    %p53 = scmp.eq.s32.totalorder %s31, 1
    %p54 = por %p52, %p53
    %p56 = scmp.ne.s32.totalorder %s39, %s55
    %p57 = scmp.eq.s32.totalorder %s31, 0
    %p58 = por %p56, %p57
    %s60 = sadd.s32 %s59, 1
    %p63 = scmp.eq.s32.totalorder %s25, 1
    %p64 = scmp.ne.s32.totalorder %s59, %s61
    %p65 = scmp.eq.s32.totalorder %s25, 0
    %p66 = por %p64, %p65
    %p67 = scmp.ne.s32.totalorder %s59, %s61
    %p68 = scmp.eq.s32.totalorder %s30, 1
    %p69 = por %p67, %p68
    %p70 = scmp.ne.s32.totalorder %s61, %s62
    %p71 = scmp.eq.s32.totalorder %s30, 0
    %p72 = por %p70, %p71
    %p73 = scmp.ne.s32.totalorder %s61, %s62
    %p74 = scmp.eq.s32.totalorder %s31, 1
    %p75 = por %p73, %p74
    %p77 = scmp.ne.s32.totalorder %s62, %s76
    %p78 = scmp.eq.s32.totalorder %s31, 0
    %p79 = por %p77, %p78
    %s81 = sadd.s32 %s80, 1
    %p84 = scmp.eq.s32.totalorder %s25, 1
    %p85 = scmp.ne.s32.totalorder %s80, %s82
    %p86 = scmp.eq.s32.totalorder %s25, 0
    %p87 = por %p85, %p86
    %p88 = scmp.ne.s32.totalorder %s80, %s82
    %p89 = scmp.eq.s32.totalorder %s30, 1
    %p90 = por %p88, %p89
    %p91 = scmp.ne.s32.totalorder %s82, %s83
    %p92 = scmp.eq.s32.totalorder %s30, 0
    %p93 = por %p91, %p92
    %p94 = scmp.ne.s32.totalorder %s82, %s83
    %p95 = scmp.eq.s32.totalorder %s31, 1
    %p96 = por %p94, %p95
    %p98 = scmp.ne.s32.totalorder %s83, %s97
    %p99 = scmp.eq.s32.totalorder %s31, 0
    %p100 = por %p98, %p99
    %s102 = sadd.s32 %s101, 1
    %p105 = scmp.eq.s32.totalorder %s25, 1
    %p106 = scmp.ne.s32.totalorder %s101, %s103
    %p107 = scmp.eq.s32.totalorder %s25, 0
    %p108 = por %p106, %p107
    %p109 = scmp.ne.s32.totalorder %s101, %s103
    %p110 = scmp.eq.s32.totalorder %s30, 1
    %p111 = por %p109, %p110
    %p112 = scmp.ne.s32.totalorder %s103, %s104
    %p113 = scmp.eq.s32.totalorder %s30, 0
    %p114 = por %p112, %p113
    %p115 = scmp.ne.s32.totalorder %s103, %s104
    %p116 = scmp.eq.s32.totalorder %s31, 1
    %p117 = por %p115, %p116
    %p119 = scmp.ne.s32.totalorder %s104, %s118
    %p120 = scmp.eq.s32.totalorder %s31, 0
    %p121 = por %p119, %p120
    %s123 = sadd.s32 %s122, 1
    %p126 = scmp.eq.s32.totalorder %s25, 1
    %p127 = scmp.ne.s32.totalorder %s122, %s124
    %p128 = scmp.eq.s32.totalorder %s25, 0
    %p129 = por %p127, %p128
    %p130 = scmp.ne.s32.totalorder %s122, %s124
    %p131 = scmp.eq.s32.totalorder %s30, 1
    %p132 = por %p130, %p131
    %p133 = scmp.ne.s32.totalorder %s124, %s125
    %p134 = scmp.eq.s32.totalorder %s30, 0
    %p135 = por %p133, %p134
    %p136 = scmp.ne.s32.totalorder %s124, %s125
    %p137 = scmp.eq.s32.totalorder %s31, 1
    %p138 = por %p136, %p137
    %p140 = scmp.ne.s32.totalorder %s125, %s139
    %p141 = scmp.eq.s32.totalorder %s31, 0
    %p142 = por %p140, %p141
    %s144 = sadd.s32 %s143, 1
    %p147 = scmp.eq.s32.totalorder %s25, 1
    %p148 = scmp.ne.s32.totalorder %s143, %s145
    %p149 = scmp.eq.s32.totalorder %s25, 0
    %p150 = por %p148, %p149
    %p151 = scmp.ne.s32.totalorder %s143, %s145
    %p152 = scmp.eq.s32.totalorder %s30, 1
    %p153 = por %p151, %p152
    %p154 = scmp.ne.s32.totalorder %s145, %s146
    %p155 = scmp.eq.s32.totalorder %s30, 0
    %p156 = por %p154, %p155
    %p157 = scmp.ne.s32.totalorder %s145, %s146
    %p158 = scmp.eq.s32.totalorder %s31, 1
    %p159 = por %p157, %p158
    %p161 = scmp.ne.s32.totalorder %s146, %s160
    %p162 = scmp.eq.s32.totalorder %s31, 0
    %p163 = por %p161, %p162
    %s165 = sadd.s32 %s164, 1
    %p168 = scmp.eq.s32.totalorder %s25, 1
    %p169 = scmp.ne.s32.totalorder %s164, %s166
    %p170 = scmp.eq.s32.totalorder %s25, 0
    %p171 = por %p169, %p170
    %p172 = scmp.ne.s32.totalorder %s164, %s166
    %p173 = scmp.eq.s32.totalorder %s30, 1
    %p174 = por %p172, %p173
    %p175 = scmp.ne.s32.totalorder %s166, %s167
    %p176 = scmp.eq.s32.totalorder %s30, 0
    %p177 = por %p175, %p176
    %p178 = scmp.ne.s32.totalorder %s166, %s167
    %p179 = scmp.eq.s32.totalorder %s31, 1
    %p180 = por %p178, %p179
    %p182 = scmp.ne.s32.totalorder %s167, %s181
    %p183 = scmp.eq.s32.totalorder %s31, 0
    %p184 = por %p182, %p183
    %s186 = sadd.s32 %s185, 1
    %p189 = scmp.eq.s32.totalorder %s25, 1
    %p190 = scmp.ne.s32.totalorder %s185, %s187
    %p191 = scmp.eq.s32.totalorder %s25, 0
    %p192 = por %p190, %p191
    %p193 = scmp.ne.s32.totalorder %s185, %s187
    %p194 = scmp.eq.s32.totalorder %s30, 1
    %p195 = por %p193, %p194
    %p196 = scmp.ne.s32.totalorder %s187, %s188
    %p197 = scmp.eq.s32.totalorder %s30, 0
    %p198 = por %p196, %p197
    %p199 = scmp.ne.s32.totalorder %s187, %s188
    %p200 = scmp.eq.s32.totalorder %s31, 1
    %p201 = por %p199, %p200
    %p203 = scmp.ne.s32.totalorder %s188, %s202
    %p204 = scmp.eq.s32.totalorder %s31, 0
    %p205 = por %p203, %p204
    %s207 = sadd.s32 %s206, 1
    %p210 = scmp.eq.s32.totalorder %s25, 1
    %p211 = scmp.ne.s32.totalorder %s206, %s208
    %p212 = scmp.eq.s32.totalorder %s25, 0
    %p213 = por %p211, %p212
    %p214 = scmp.ne.s32.totalorder %s206, %s208
    %p215 = scmp.eq.s32.totalorder %s30, 1
    %p216 = por %p214, %p215
    %p217 = scmp.ne.s32.totalorder %s208, %s209
    %p218 = scmp.eq.s32.totalorder %s30, 0
    %p219 = por %p217, %p218
    %p220 = scmp.ne.s32.totalorder %s208, %s209
    %p221 = scmp.eq.s32.totalorder %s31, 1
    %p222 = por %p220, %p221
    %p224 = scmp.ne.s32.totalorder %s209, %s223
    %p225 = scmp.eq.s32.totalorder %s31, 0
    %p226 = por %p224, %p225
    %s228 = sadd.s32 %s227, 1
    %p231 = scmp.eq.s32.totalorder %s25, 1
    %p232 = scmp.ne.s32.totalorder %s227, %s229
    %p233 = scmp.eq.s32.totalorder %s25, 0
    %p234 = por %p232, %p233
    %p235 = scmp.ne.s32.totalorder %s227, %s229
    %p236 = scmp.eq.s32.totalorder %s30, 1
    %p237 = por %p235, %p236
    %p238 = scmp.ne.s32.totalorder %s229, %s230
    %p239 = scmp.eq.s32.totalorder %s30, 0
    %p240 = por %p238, %p239
    %p241 = scmp.ne.s32.totalorder %s229, %s230
    %p242 = scmp.eq.s32.totalorder %s31, 1
    %p243 = por %p241, %p242
    %p245 = scmp.ne.s32.totalorder %s230, %s244
    %p246 = scmp.eq.s32.totalorder %s31, 0
    %p247 = por %p245, %p246
    %s249 = sadd.s32 %s248, 1
    %p252 = scmp.eq.s32.totalorder %s25, 1
    %p253 = scmp.ne.s32.totalorder %s248, %s250
    %p254 = scmp.eq.s32.totalorder %s25, 0
    %p255 = por %p253, %p254
    %p256 = scmp.ne.s32.totalorder %s248, %s250
    %p257 = scmp.eq.s32.totalorder %s30, 1
    %p258 = por %p256, %p257
    %p259 = scmp.ne.s32.totalorder %s250, %s251
    %p260 = scmp.eq.s32.totalorder %s30, 0
    %p261 = por %p259, %p260
    %p262 = scmp.ne.s32.totalorder %s250, %s251
    %p263 = scmp.eq.s32.totalorder %s31, 1
    %p264 = por %p262, %p263
    %p266 = scmp.ne.s32.totalorder %s251, %s265
    %p267 = scmp.eq.s32.totalorder %s31, 0
    %p268 = por %p266, %p267
    %s270 = sadd.s32 %s269, 1
    %p273 = scmp.eq.s32.totalorder %s25, 1
    %p274 = scmp.ne.s32.totalorder %s269, %s271
    %p275 = scmp.eq.s32.totalorder %s25, 0
    %p276 = por %p274, %p275
    %p277 = scmp.ne.s32.totalorder %s269, %s271
    %p278 = scmp.eq.s32.totalorder %s30, 1
    %p279 = por %p277, %p278
    %p280 = scmp.ne.s32.totalorder %s271, %s272
    %p281 = scmp.eq.s32.totalorder %s30, 0
    %p282 = por %p280, %p281
    %p283 = scmp.ne.s32.totalorder %s271, %s272
    %p284 = scmp.eq.s32.totalorder %s31, 1
    %p285 = por %p283, %p284
    %p287 = scmp.ne.s32.totalorder %s272, %s286
    %p288 = scmp.eq.s32.totalorder %s31, 0
    %p289 = por %p287, %p288
    %s291 = sadd.s32 %s290, 1
    %p294 = scmp.eq.s32.totalorder %s25, 1
    %p295 = scmp.ne.s32.totalorder %s290, %s292
    %p296 = scmp.eq.s32.totalorder %s25, 0
    %p297 = por %p295, %p296
    %p298 = scmp.ne.s32.totalorder %s290, %s292
    %p299 = scmp.eq.s32.totalorder %s30, 1
    %p300 = por %p298, %p299
    %p301 = scmp.ne.s32.totalorder %s292, %s293
    %p302 = scmp.eq.s32.totalorder %s30, 0
    %p303 = por %p301, %p302
    %p304 = scmp.ne.s32.totalorder %s292, %s293
    %p305 = scmp.eq.s32.totalorder %s31, 1
    %p306 = por %p304, %p305
    %p308 = scmp.ne.s32.totalorder %s293, %s307
    %p309 = scmp.eq.s32.totalorder %s31, 0
    %p310 = por %p308, %p309
    %s312 = sadd.s32 %s311, 1
    %p315 = scmp.eq.s32.totalorder %s25, 1
    %p316 = scmp.ne.s32.totalorder %s311, %s313
    %p317 = scmp.eq.s32.totalorder %s25, 0
    %p318 = por %p316, %p317
    %p319 = scmp.ne.s32.totalorder %s311, %s313
    %p320 = scmp.eq.s32.totalorder %s30, 1
    %p321 = por %p319, %p320
    %p322 = scmp.ne.s32.totalorder %s313, %s314
    %p323 = scmp.eq.s32.totalorder %s30, 0
    %p324 = por %p322, %p323
    %p325 = scmp.ne.s32.totalorder %s313, %s314
    %p326 = scmp.eq.s32.totalorder %s31, 1
    %p327 = por %p325, %p326
    %p329 = scmp.ne.s32.totalorder %s314, %s328
    %p330 = scmp.eq.s32.totalorder %s31, 0
    %p331 = por %p329, %p330
    %s333 = sadd.s32 %s332, 1
    %p336 = scmp.eq.s32.totalorder %s25, 1
    %p337 = scmp.ne.s32.totalorder %s332, %s334
    %p338 = scmp.eq.s32.totalorder %s25, 0
    %p339 = por %p337, %p338
    %p340 = scmp.ne.s32.totalorder %s332, %s334
    %p341 = scmp.eq.s32.totalorder %s30, 1
    %p342 = por %p340, %p341
    %p343 = scmp.ne.s32.totalorder %s334, %s335
    %p344 = scmp.eq.s32.totalorder %s30, 0
    %p345 = por %p343, %p344
    %p346 = scmp.ne.s32.totalorder %s334, %s335
    %p347 = scmp.eq.s32.totalorder %s31, 1
    %p348 = por %p346, %p347
    %p350 = scmp.ne.s32.totalorder %s335, %s349
    %p351 = scmp.eq.s32.totalorder %s31, 0
    %p352 = por %p350, %p351
    %s354 = sadd.s32 %s353, 1
    %p357 = scmp.eq.s32.totalorder %s25, 1
    %p358 = scmp.ne.s32.totalorder %s353, %s355
    %p359 = scmp.eq.s32.totalorder %s25, 0
    %p360 = por %p358, %p359
    %p361 = scmp.ne.s32.totalorder %s353, %s355
    %p362 = scmp.eq.s32.totalorder %s30, 1
    %p363 = por %p361, %p362
    %p364 = scmp.ne.s32.totalorder %s355, %s356
    %p365 = scmp.eq.s32.totalorder %s30, 0
    %p366 = por %p364, %p365
    %p367 = scmp.ne.s32.totalorder %s355, %s356
    %p368 = scmp.eq.s32.totalorder %s31, 1
    %p369 = por %p367, %p368
    %p371 = scmp.ne.s32.totalorder %s356, %s370
    %p372 = scmp.eq.s32.totalorder %s31, 0
    %p373 = por %p371, %p372
    %s375 = sadd.s32 %s374, 1
    %p378 = scmp.eq.s32.totalorder %s25, 1
    %p379 = scmp.ne.s32.totalorder %s374, %s376
    %p380 = scmp.eq.s32.totalorder %s25, 0
    %p381 = por %p379, %p380
    %p382 = scmp.ne.s32.totalorder %s374, %s376
    %p383 = scmp.eq.s32.totalorder %s30, 1
    %p384 = por %p382, %p383
    %p385 = scmp.ne.s32.totalorder %s376, %s377
    %p386 = scmp.eq.s32.totalorder %s30, 0
    %p387 = por %p385, %p386
    %p388 = scmp.ne.s32.totalorder %s376, %s377
    %p389 = scmp.eq.s32.totalorder %s31, 1
    %p390 = por %p388, %p389
    %p392 = scmp.ne.s32.totalorder %s377, %s391
    %p393 = scmp.eq.s32.totalorder %s31, 0
    %p394 = por %p392, %p393
    %s395 = ssub.s32 %s25, %s32
    %p396 = scmp.eq.s32.totalorder %s395, 0
    %s398 = sadd.s32 %s397, 1
    %s399 = scalar_select %p396, %s397, %s398
    %p402 = pneg %p396
    %p403 = scmp.eq.s32.totalorder %s25, 1
    %p404 = por %p402, %p403
    %p405 = scmp.ne.s32.totalorder %s397, %s400
    %p406 = scmp.eq.s32.totalorder %s25, 0
    %p407 = por %p405, %p406
    %p408 = scmp.ne.s32.totalorder %s397, %s400
    %p409 = scmp.eq.s32.totalorder %s30, 1
    %p410 = por %p408, %p409
    %p411 = scmp.ne.s32.totalorder %s400, %s401
    %p412 = scmp.eq.s32.totalorder %s30, 0
    %p413 = por %p411, %p412
    %p414 = scmp.ne.s32.totalorder %s400, %s401
    %p415 = scmp.eq.s32.totalorder %s31, 1
    %p416 = por %p414, %p415
    %p418 = scmp.ne.s32.totalorder %s401, %s417
    %p419 = scmp.eq.s32.totalorder %s31, 0
    %p420 = por %p418, %p419
    %s421 = ssub.s32 %s25, %s32
    %p422 = scmp.eq.s32.totalorder %s421, 0
    %s424 = sadd.s32 %s423, 1
    %s425 = scalar_select %p422, %s423, %s424
    %p428 = pneg %p422
    %p429 = scmp.eq.s32.totalorder %s25, 1
    %p430 = por %p428, %p429
    %p431 = scmp.ne.s32.totalorder %s423, %s426
    %p432 = scmp.eq.s32.totalorder %s25, 0
    %p433 = por %p431, %p432
    %p434 = scmp.ne.s32.totalorder %s423, %s426
    %p435 = scmp.eq.s32.totalorder %s30, 1
    %p436 = por %p434, %p435
    %p437 = scmp.ne.s32.totalorder %s426, %s427
    %p438 = scmp.eq.s32.totalorder %s30, 0
    %p439 = por %p437, %p438
    %p440 = scmp.ne.s32.totalorder %s426, %s427
    %p441 = scmp.eq.s32.totalorder %s31, 1
    %p442 = por %p440, %p441
    %p444 = scmp.ne.s32.totalorder %s427, %s443
    %p445 = scmp.eq.s32.totalorder %s31, 0
    %p446 = por %p444, %p445
    %p447 = scmp.le.s32.totalorder 1, %s25
    %p448 = scmp.lt.s32.totalorder %s25, 3
    %p449 = pnand %p447, %p448
    %p450 = pneg %p449
    // Predicated region
    $region9: #{autoencode_forward.1} parent=5 // pred_check
      _
    $region10: #{autoencode_forward.1} parent=5 // pred_check_branch
      %452 = sbr.rel (%p449) target = $region12
    $region11: #{autoencode_forward.1} parent=5 // pred_region
      %s453 = ssub.s32 %s25, 1
      // Predicated region
      $region13: #{autoencode_forward.1} parent=11 // pred_check
        %p454 = pneg %p72
      $region14: #{autoencode_forward.1} parent=11 // pred_check_branch
        %456 = sbr.rel (%p454) target = $region16
      $region15: #{autoencode_forward.1} parent=11 // pred_region
        _
      $region16: #{autoencode_forward.1} parent=11 // pred_fallthru
        _
      // Predicated region
      $region17: #{autoencode_forward.1} parent=11 // pred_check
        %p457 = pneg %p93
      $region18: #{autoencode_forward.1} parent=11 // pred_check_branch
        %459 = sbr.rel (%p457) target = $region20
      $region19: #{autoencode_forward.1} parent=11 // pred_region
        _
      $region20: #{autoencode_forward.1} parent=11 // pred_fallthru
        _
      // Predicated region
      $region21: #{autoencode_forward.1} parent=11 // pred_check
        %p460 = pneg %p114
      $region22: #{autoencode_forward.1} parent=11 // pred_check_branch
        %462 = sbr.rel (%p460) target = $region24
      $region23: #{autoencode_forward.1} parent=11 // pred_region
        _
      $region24: #{autoencode_forward.1} parent=11 // pred_fallthru
        _
      // Predicated region
      $region25: #{autoencode_forward.1} parent=11 // pred_check
        %p463 = pneg %p135
      $region26: #{autoencode_forward.1} parent=11 // pred_check_branch
        %465 = sbr.rel (%p463) target = $region28
      $region27: #{autoencode_forward.1} parent=11 // pred_region
        _
      $region28: #{autoencode_forward.1} parent=11 // pred_fallthru
        _
      // Predicated region
      $region29: #{autoencode_forward.1} parent=11 // pred_check
        %p466 = pneg %p156
      $region30: #{autoencode_forward.1} parent=11 // pred_check_branch
        %468 = sbr.rel (%p466) target = $region32
      $region31: #{autoencode_forward.1} parent=11 // pred_region
        _
      $region32: #{autoencode_forward.1} parent=11 // pred_fallthru
        _
      // Predicated region
      $region33: #{autoencode_forward.1} parent=11 // pred_check
        %p469 = pneg %p177
      $region34: #{autoencode_forward.1} parent=11 // pred_check_branch
        %471 = sbr.rel (%p469) target = $region36
      $region35: #{autoencode_forward.1} parent=11 // pred_region
        _
      $region36: #{autoencode_forward.1} parent=11 // pred_fallthru
        _
      // Predicated region
      $region37: #{autoencode_forward.1} parent=11 // pred_check
        %p472 = pneg %p198
      $region38: #{autoencode_forward.1} parent=11 // pred_check_branch
        %474 = sbr.rel (%p472) target = $region40
      $region39: #{autoencode_forward.1} parent=11 // pred_region
        _
      $region40: #{autoencode_forward.1} parent=11 // pred_fallthru
        _
      // Predicated region
      $region41: #{autoencode_forward.1} parent=11 // pred_check
        %p475 = pneg %p219
      $region42: #{autoencode_forward.1} parent=11 // pred_check_branch
        %477 = sbr.rel (%p475) target = $region44
      $region43: #{autoencode_forward.1} parent=11 // pred_region
        _
      $region44: #{autoencode_forward.1} parent=11 // pred_fallthru
        _
      // Predicated region
      $region45: #{autoencode_forward.1} parent=11 // pred_check
        %p478 = pneg %p240
      $region46: #{autoencode_forward.1} parent=11 // pred_check_branch
        %480 = sbr.rel (%p478) target = $region48
      $region47: #{autoencode_forward.1} parent=11 // pred_region
        _
      $region48: #{autoencode_forward.1} parent=11 // pred_fallthru
        _
      // Predicated region
      $region49: #{autoencode_forward.1} parent=11 // pred_check
        %p481 = pneg %p261
      $region50: #{autoencode_forward.1} parent=11 // pred_check_branch
        %483 = sbr.rel (%p481) target = $region52
      $region51: #{autoencode_forward.1} parent=11 // pred_region
        _
      $region52: #{autoencode_forward.1} parent=11 // pred_fallthru
        _
      // Predicated region
      $region53: #{autoencode_forward.1} parent=11 // pred_check
        %p484 = pneg %p282
      $region54: #{autoencode_forward.1} parent=11 // pred_check_branch
        %486 = sbr.rel (%p484) target = $region56
      $region55: #{autoencode_forward.1} parent=11 // pred_region
        _
      $region56: #{autoencode_forward.1} parent=11 // pred_fallthru
        _
      // Predicated region
      $region57: #{autoencode_forward.1} parent=11 // pred_check
        %p487 = pneg %p303
      $region58: #{autoencode_forward.1} parent=11 // pred_check_branch
        %489 = sbr.rel (%p487) target = $region60
      $region59: #{autoencode_forward.1} parent=11 // pred_region
        _
      $region60: #{autoencode_forward.1} parent=11 // pred_fallthru
        _
      // Predicated region
      $region61: #{autoencode_forward.1} parent=11 // pred_check
        %p490 = pneg %p324
      $region62: #{autoencode_forward.1} parent=11 // pred_check_branch
        %492 = sbr.rel (%p490) target = $region64
      $region63: #{autoencode_forward.1} parent=11 // pred_region
        _
      $region64: #{autoencode_forward.1} parent=11 // pred_fallthru
        _
      // Predicated region
      $region65: #{autoencode_forward.1} parent=11 // pred_check
        %p493 = pneg %p345
      $region66: #{autoencode_forward.1} parent=11 // pred_check_branch
        %495 = sbr.rel (%p493) target = $region68
      $region67: #{autoencode_forward.1} parent=11 // pred_region
        _
      $region68: #{autoencode_forward.1} parent=11 // pred_fallthru
        _
      // Predicated region
      $region69: #{autoencode_forward.1} parent=11 // pred_check
        %p496 = pneg %p366
      $region70: #{autoencode_forward.1} parent=11 // pred_check_branch
        %498 = sbr.rel (%p496) target = $region72
      $region71: #{autoencode_forward.1} parent=11 // pred_region
        _
      $region72: #{autoencode_forward.1} parent=11 // pred_fallthru
        _
      // Predicated region
      $region73: #{autoencode_forward.1} parent=11 // pred_check
        %p499 = pneg %p387
      $region74: #{autoencode_forward.1} parent=11 // pred_check_branch
        %501 = sbr.rel (%p499) target = $region76
      $region75: #{autoencode_forward.1} parent=11 // pred_region
        _
      $region76: #{autoencode_forward.1} parent=11 // pred_fallthru
        _
    $region12: #{autoencode_forward.1} parent=5 // pred_fallthru
      _
    %p502 = scmp.lt.s32.totalorder %s25, 2
    // Predicated region
    $region77: #{autoencode_forward.1} parent=5 // pred_check
      %p503 = pneg %p502
    $region78: #{autoencode_forward.1} parent=5 // pred_check_branch
      %505 = sbr.rel (%p503) target = $region80
    $region79: #{autoencode_forward.1} parent=5 // pred_region
      // Predicated region
      $region81: #{autoencode_forward.1} parent=79 // pred_check
        %p506 = pneg %p45
      $region82: #{autoencode_forward.1} parent=79 // pred_check_branch
        %508 = sbr.rel (%p506) target = $region84
      $region83: #{autoencode_forward.1} parent=79 // pred_region
        %s509 = smul.u32 32, %s25
        %p510 = scmp.lt.s32.totalorder %s509, 63
        %s511 = scalar_select %p510, %s509, 63
        %s512 = smul.addr %s511, 7
        %s513 = smul.addr %s512, 8
        %s514 = scalar_lea.vmem %s0, %s513
        %s515 = smul.u32 32, %s25
      $region84: #{autoencode_forward.1} parent=79 // pred_fallthru
        _
    $region80: #{autoencode_forward.1} parent=5 // pred_fallthru
      _
    %p516 = scmp.le.s32.totalorder 1, %s25
    %p517 = scmp.lt.s32.totalorder %s25, 3
    %p518 = pnand %p516, %p517
    %p519 = pneg %p518
    // Predicated region
    $region85: #{autoencode_forward.1} parent=5 // pred_check
      _
    $region86: #{autoencode_forward.1} parent=5 // pred_check_branch
      %521 = sbr.rel (%p518) target = $region88
    $region87: #{autoencode_forward.1} parent=5 // pred_region
      %s522 = ssub.s32 %s25, 1
      %s523 = smul.u32 32, %s30
      %p524 = scmp.lt.s32.totalorder %s523, 63
      %s525 = scalar_select %p524, %s523, 63
      %s526 = smul.addr %s525, 7
      %s527 = smul.addr %s526, 8
      %s528 = scalar_lea.vmem %s0, %s527
      %p529 = pneg %p51
      %p530 = pneg %p48
      %p531 = pneg %p72
      %p532 = pneg %p69
      %p533 = pneg %p93
      %p534 = pneg %p90
      %p535 = pneg %p114
      %p536 = pneg %p111
      %p537 = pneg %p135
      %p538 = pneg %p132
      %p539 = pneg %p156
      %p540 = pneg %p153
      %p541 = pneg %p177
      %p542 = pneg %p174
      %p543 = pneg %p198
      %p544 = pneg %p195
      %p545 = pneg %p219
      %p546 = pneg %p216
      %p547 = pneg %p240
      %p548 = pneg %p237
      %p549 = pneg %p261
      %p550 = pneg %p258
      %p551 = pneg %p282
      %p552 = pneg %p279
      %p553 = pneg %p303
      %p554 = pneg %p300
      %p555 = pneg %p324
      %p556 = pneg %p321
      %p557 = pneg %p345
      %p558 = pneg %p342
      %p559 = pneg %p366
      %p560 = pneg %p363
      %p561 = pneg %p387
      %p562 = pneg %p384
      %p563 = pneg %p413
      %p564 = pneg %p410
      %s565 = smul.u32 32, %s30
      %p566 = scmp.lt.s32.totalorder %s565, 63
      %s567 = scalar_select %p566, %s565, 63
      %s568 = smul.addr %s567, 8
      %s569 = scalar_lea.vmem %s17, %s568
      %p570 = pneg %p439
      %p571 = pneg %p436
      %s572 = smul.u32 32, %s30
      %p573 = scmp.lt.s32.totalorder %s572, 63
      %s574 = scalar_select %p573, %s572, 63
      %s575 = smul.addr %s574, 7
      %s576 = smul.addr %s575, 8
      %s577 = scalar_lea.vmem %s18, %s576
      %s578 = smul.u32 32, %s30
      %p579 = scmp.lt.s32.totalorder %s578, 63
      %s580 = scalar_select %p579, %s578, 63
      %s581 = smul.addr %s580, 7
      %s582 = smul.addr %s581, 8
      %s583 = scalar_lea.vmem %s0, %s582
      %s584 = smul.u32 32, %s30
      %s585 = smul.u32 32, %s30
      %p586 = scmp.lt.s32.totalorder %s585, 63
      %s587 = scalar_select %p586, %s585, 63
      %s588 = smul.addr %s587, 8
      %s589 = scalar_lea.vmem %s17, %s588
      %s590 = smul.u32 32, %s30
      %s591 = smul.u32 32, %s30
      %p592 = scmp.lt.s32.totalorder %s591, 63
      %s593 = scalar_select %p592, %s591, 63
      %s594 = smul.addr %s593, 7
      %s595 = smul.addr %s594, 8
      %s596 = scalar_lea.vmem %s18, %s595
      %s597 = smul.u32 32, %s30
      %v599 = vld [vmem:[%s583] sm:$0xff]
      %v600 = vld [vmem:[%s583 + $0x8] sm:$0xff]
      %v601 = vld [vmem:[%s583 + $0x10] sm:$0xff]
      %v602 = vld [vmem:[%s583 + $0x18] sm:$0xff]
      %v603 = vld [vmem:[%s583 + $0x20] sm:$0xff]
      %v604 = vld [vmem:[%s583 + $0x28] sm:$0xff]
      %v605 = vld [vmem:[%s583 + $0x30] sm:$0xff]
      %v606 = vld [vmem:[%s583 + $0x38] sm:$0xff]
      %v607 = vld [vmem:[%s583 + $0x40] sm:$0xff]
      %v608 = vld [vmem:[%s583 + $0x48] sm:$0xff]
      %v609 = vld [vmem:[%s583 + $0x50] sm:$0xff]
      %v610 = vld [vmem:[%s583 + $0x58] sm:$0xff]
      %v611 = vld [vmem:[%s583 + $0x60] sm:$0xff]
      %v612 = vld [vmem:[%s583 + $0x68] sm:$0xff]
      %v613 = vld [vmem:[%s583 + $0x70] sm:$0xff]
      %v614 = vld [vmem:[%s583 + $0x78] sm:$0xff]
      %v615 = vld [vmem:[%s583 + $0x80] sm:$0xff]
      %v616 = vld [vmem:[%s583 + $0x88] sm:$0xff]
      %v617 = vld [vmem:[%s583 + $0x90] sm:$0xff]
      %v618 = vld [vmem:[%s583 + $0x98] sm:$0xff]
      %v619 = vld [vmem:[%s583 + $0xa0] sm:$0xff]
      %v620 = vld [vmem:[%s583 + $0xa8] sm:$0xff]
      %v621 = vld [vmem:[%s583 + $0xb0] sm:$0xff]
      %v622 = vld [vmem:[%s583 + $0xb8] sm:$0xff]
      %v623 = vld [vmem:[%s583 + $0xc0] sm:$0xff]
      %v624 = vld [vmem:[%s583 + $0xc8] sm:$0xff]
      %v625 = vld [vmem:[%s583 + $0xd0] sm:$0xff]
      %v626 = vld [vmem:[%s583 + $0xd8] sm:$0xff]
      %v627 = vld [vmem:[%s583 + $0xe0] sm:$0xff]
      %v628 = vld [vmem:[%s583 + $0xe8] sm:$0xff]
      %v629 = vld [vmem:[%s583 + $0xf0] sm:$0xff]
      %v630 = vld [vmem:[%s583 + $0xf8] sm:$0xff]
      %v631 = vld [vmem:[%s583 + $0x100] sm:$0xff]
      %v632 = vld [vmem:[%s583 + $0x108] sm:$0xff]
      %v633 = vld [vmem:[%s583 + $0x110] sm:$0xff]
      %v634 = vld [vmem:[%s583 + $0x118] sm:$0xff]
      %v635 = vld [vmem:[%s583 + $0x120] sm:$0xff]
      %v636 = vld [vmem:[%s583 + $0x128] sm:$0xff]
      %v637 = vld [vmem:[%s583 + $0x130] sm:$0xff]
      %v638 = vld [vmem:[%s583 + $0x138] sm:$0xff]
      %v639 = vld [vmem:[%s583 + $0x140] sm:$0xff]
      %v640 = vld [vmem:[%s583 + $0x148] sm:$0xff]
      %v641 = vld [vmem:[%s583 + $0x150] sm:$0xff]
      %v642 = vld [vmem:[%s583 + $0x158] sm:$0xff]
      %v643 = vld [vmem:[%s583 + $0x160] sm:$0xff]
      %v644 = vld [vmem:[%s583 + $0x168] sm:$0xff]
      %v645 = vld [vmem:[%s583 + $0x170] sm:$0xff]
      %v646 = vld [vmem:[%s583 + $0x178] sm:$0xff]
      %v647 = vld [vmem:[%s583 + $0x180] sm:$0xff]
      %v648 = vld [vmem:[%s583 + $0x188] sm:$0xff]
      %v649 = vld [vmem:[%s583 + $0x190] sm:$0xff]
      %v650 = vld [vmem:[%s583 + $0x198] sm:$0xff]
      %v651 = vld [vmem:[%s583 + $0x1a0] sm:$0xff]
      %v652 = vld [vmem:[%s583 + $0x1a8] sm:$0xff]
      %v653 = vld [vmem:[%s583 + $0x1b0] sm:$0xff]
      %v654 = vld [vmem:[%s583 + $0x1b8] sm:$0xff]
      %v655 = vld [vmem:[%s583 + $0x1c0] sm:$0xff]
      %v656 = vld [vmem:[%s583 + $0x1c8] sm:$0xff]
      %v657 = vld [vmem:[%s583 + $0x1d0] sm:$0xff]
      %v658 = vld [vmem:[%s583 + $0x1d8] sm:$0xff]
      %v659 = vld [vmem:[%s583 + $0x1e0] sm:$0xff]
      %v660 = vld [vmem:[%s583 + $0x1e8] sm:$0xff]
      %v661 = vld [vmem:[%s583 + $0x1f0] sm:$0xff]
      %v662 = vld [vmem:[%s583 + $0x1f8] sm:$0xff]
      %v663 = vld [vmem:[%s583 + $0x200] sm:$0xff]
      %v664 = vld [vmem:[%s583 + $0x208] sm:$0xff]
      %v665 = vld [vmem:[%s583 + $0x210] sm:$0xff]
      %v666 = vld [vmem:[%s583 + $0x218] sm:$0xff]
      %v667 = vld [vmem:[%s583 + $0x220] sm:$0xff]
      %v668 = vld [vmem:[%s583 + $0x228] sm:$0xff]
      %v669 = vld [vmem:[%s583 + $0x230] sm:$0xff]
      %v670 = vld [vmem:[%s583 + $0x238] sm:$0xff]
      %v671 = vld [vmem:[%s583 + $0x240] sm:$0xff]
      %v672 = vld [vmem:[%s583 + $0x248] sm:$0xff]
      %v673 = vld [vmem:[%s583 + $0x250] sm:$0xff]
      %v674 = vld [vmem:[%s583 + $0x258] sm:$0xff]
      %v675 = vld [vmem:[%s583 + $0x260] sm:$0xff]
      %v676 = vld [vmem:[%s583 + $0x268] sm:$0xff]
      %v677 = vld [vmem:[%s583 + $0x270] sm:$0xff]
      %v678 = vld [vmem:[%s583 + $0x278] sm:$0xff]
      %v679 = vld [vmem:[%s583 + $0x280] sm:$0xff]
      %v680 = vld [vmem:[%s583 + $0x288] sm:$0xff]
      %v681 = vld [vmem:[%s583 + $0x290] sm:$0xff]
      %v682 = vld [vmem:[%s583 + $0x298] sm:$0xff]
      %v683 = vld [vmem:[%s583 + $0x2a0] sm:$0xff]
      %v684 = vld [vmem:[%s583 + $0x2a8] sm:$0xff]
      %v685 = vld [vmem:[%s583 + $0x2b0] sm:$0xff]
      %v686 = vld [vmem:[%s583 + $0x2b8] sm:$0xff]
      %v687 = vld [vmem:[%s583 + $0x2c0] sm:$0xff]
      %v688 = vld [vmem:[%s583 + $0x2c8] sm:$0xff]
      %v689 = vld [vmem:[%s583 + $0x2d0] sm:$0xff]
      %v690 = vld [vmem:[%s583 + $0x2d8] sm:$0xff]
      %v691 = vld [vmem:[%s583 + $0x2e0] sm:$0xff]
      %v692 = vld [vmem:[%s583 + $0x2e8] sm:$0xff]
      %v693 = vld [vmem:[%s583 + $0x2f0] sm:$0xff]
      %v694 = vld [vmem:[%s583 + $0x2f8] sm:$0xff]
      %v695 = vld [vmem:[%s583 + $0x300] sm:$0xff]
      %v696 = vld [vmem:[%s583 + $0x308] sm:$0xff]
      %v697 = vld [vmem:[%s583 + $0x310] sm:$0xff]
      %v698 = vld [vmem:[%s583 + $0x318] sm:$0xff]
      %v699 = vld [vmem:[%s583 + $0x320] sm:$0xff]
      %v700 = vld [vmem:[%s583 + $0x328] sm:$0xff]
      %v701 = vld [vmem:[%s583 + $0x330] sm:$0xff]
      %v702 = vld [vmem:[%s583 + $0x338] sm:$0xff]
      %v703 = vld [vmem:[%s583 + $0x340] sm:$0xff]
      %v704 = vld [vmem:[%s583 + $0x348] sm:$0xff]
      %v705 = vld [vmem:[%s583 + $0x350] sm:$0xff]
      %v706 = vld [vmem:[%s583 + $0x358] sm:$0xff]
      %v707 = vld [vmem:[%s583 + $0x360] sm:$0xff]
      %v708 = vld [vmem:[%s583 + $0x368] sm:$0xff]
      %v709 = vld [vmem:[%s583 + $0x370] sm:$0xff]
      %v710 = vld [vmem:[%s583 + $0x378] sm:$0xff]
      %v711 = vld [vmem:[%s583 + $0x380] sm:$0xff]
      %v712 = vld [vmem:[%s583 + $0x388] sm:$0xff]
      %v713 = vld [vmem:[%s583 + $0x390] sm:$0xff]
      %v714 = vld [vmem:[%s583 + $0x398] sm:$0xff]
      %v715 = vld [vmem:[%s583 + $0x3a0] sm:$0xff]
      %v716 = vld [vmem:[%s583 + $0x3a8] sm:$0xff]
      %v717 = vld [vmem:[%s583 + $0x3b0] sm:$0xff]
      %v718 = vld [vmem:[%s583 + $0x3b8] sm:$0xff]
      %v719 = vld [vmem:[%s583 + $0x3c0] sm:$0xff]
      %v720 = vld [vmem:[%s583 + $0x3c8] sm:$0xff]
      %v721 = vld [vmem:[%s583 + $0x3d0] sm:$0xff]
      %v722 = vld [vmem:[%s583 + $0x3d8] sm:$0xff]
      %v723 = vld [vmem:[%s583 + $0x3e0] sm:$0xff]
      %v724 = vld [vmem:[%s583 + $0x3e8] sm:$0xff]
      %v725 = vld [vmem:[%s583 + $0x3f0] sm:$0xff]
      %v726 = vld [vmem:[%s583 + $0x3f8] sm:$0xff]
      %v727 = vld [vmem:[%s583 + $0x400] sm:$0xff]
      %v728 = vld [vmem:[%s583 + $0x408] sm:$0xff]
      %v729 = vld [vmem:[%s583 + $0x410] sm:$0xff]
      %v730 = vld [vmem:[%s583 + $0x418] sm:$0xff]
      %v731 = vld [vmem:[%s583 + $0x420] sm:$0xff]
      %v732 = vld [vmem:[%s583 + $0x428] sm:$0xff]
      %v733 = vld [vmem:[%s583 + $0x430] sm:$0xff]
      %v734 = vld [vmem:[%s583 + $0x438] sm:$0xff]
      %v735 = vld [vmem:[%s583 + $0x440] sm:$0xff]
      %v736 = vld [vmem:[%s583 + $0x448] sm:$0xff]
      %v737 = vld [vmem:[%s583 + $0x450] sm:$0xff]
      %v738 = vld [vmem:[%s583 + $0x458] sm:$0xff]
      %v739 = vld [vmem:[%s583 + $0x460] sm:$0xff]
      %v740 = vld [vmem:[%s583 + $0x468] sm:$0xff]
      %v741 = vld [vmem:[%s583 + $0x470] sm:$0xff]
      %v742 = vld [vmem:[%s583 + $0x478] sm:$0xff]
      %v743 = vld [vmem:[%s583 + $0x480] sm:$0xff]
      %v744 = vld [vmem:[%s583 + $0x488] sm:$0xff]
      %v745 = vld [vmem:[%s583 + $0x490] sm:$0xff]
      %v746 = vld [vmem:[%s583 + $0x498] sm:$0xff]
      %v747 = vld [vmem:[%s583 + $0x4a0] sm:$0xff]
      %v748 = vld [vmem:[%s583 + $0x4a8] sm:$0xff]
      %v749 = vld [vmem:[%s583 + $0x4b0] sm:$0xff]
      %v750 = vld [vmem:[%s583 + $0x4b8] sm:$0xff]
      %v751 = vld [vmem:[%s583 + $0x4c0] sm:$0xff]
      %v752 = vld [vmem:[%s583 + $0x4c8] sm:$0xff]
      %v753 = vld [vmem:[%s583 + $0x4d0] sm:$0xff]
      %v754 = vld [vmem:[%s583 + $0x4d8] sm:$0xff]
      %v755 = vld [vmem:[%s583 + $0x4e0] sm:$0xff]
      %v756 = vld [vmem:[%s583 + $0x4e8] sm:$0xff]
      %v757 = vld [vmem:[%s583 + $0x4f0] sm:$0xff]
      %v758 = vld [vmem:[%s583 + $0x4f8] sm:$0xff]
      %v759 = vld [vmem:[%s583 + $0x500] sm:$0xff]
      %v760 = vld [vmem:[%s583 + $0x508] sm:$0xff]
      %v761 = vld [vmem:[%s583 + $0x510] sm:$0xff]
      %v762 = vld [vmem:[%s583 + $0x518] sm:$0xff]
      %v763 = vld [vmem:[%s583 + $0x520] sm:$0xff]
      %v764 = vld [vmem:[%s583 + $0x528] sm:$0xff]
      %v765 = vld [vmem:[%s583 + $0x530] sm:$0xff]
      %v766 = vld [vmem:[%s583 + $0x538] sm:$0xff]
      %v767 = vld [vmem:[%s583 + $0x540] sm:$0xff]
      %v768 = vld [vmem:[%s583 + $0x548] sm:$0xff]
      %v769 = vld [vmem:[%s583 + $0x550] sm:$0xff]
      %v770 = vld [vmem:[%s583 + $0x558] sm:$0xff]
      %v771 = vld [vmem:[%s583 + $0x560] sm:$0xff]
      %v772 = vld [vmem:[%s583 + $0x568] sm:$0xff]
      %v773 = vld [vmem:[%s583 + $0x570] sm:$0xff]
      %v774 = vld [vmem:[%s583 + $0x578] sm:$0xff]
      %v775 = vld [vmem:[%s583 + $0x580] sm:$0xff]
      %v776 = vld [vmem:[%s583 + $0x588] sm:$0xff]
      %v777 = vld [vmem:[%s583 + $0x590] sm:$0xff]
      %v778 = vld [vmem:[%s583 + $0x598] sm:$0xff]
      %v779 = vld [vmem:[%s583 + $0x5a0] sm:$0xff]
      %v780 = vld [vmem:[%s583 + $0x5a8] sm:$0xff]
      %v781 = vld [vmem:[%s583 + $0x5b0] sm:$0xff]
      %v782 = vld [vmem:[%s583 + $0x5b8] sm:$0xff]
      %v783 = vld [vmem:[%s583 + $0x5c0] sm:$0xff]
      %v784 = vld [vmem:[%s583 + $0x5c8] sm:$0xff]
      %v785 = vld [vmem:[%s583 + $0x5d0] sm:$0xff]
      %v786 = vld [vmem:[%s583 + $0x5d8] sm:$0xff]
      %v787 = vld [vmem:[%s583 + $0x5e0] sm:$0xff]
      %v788 = vld [vmem:[%s583 + $0x5e8] sm:$0xff]
      %v789 = vld [vmem:[%s583 + $0x5f0] sm:$0xff]
      %v790 = vld [vmem:[%s583 + $0x5f8] sm:$0xff]
      %v791 = vld [vmem:[%s583 + $0x600] sm:$0xff]
      %v792 = vld [vmem:[%s583 + $0x608] sm:$0xff]
      %v793 = vld [vmem:[%s583 + $0x610] sm:$0xff]
      %v794 = vld [vmem:[%s583 + $0x618] sm:$0xff]
      %v795 = vld [vmem:[%s583 + $0x620] sm:$0xff]
      %v796 = vld [vmem:[%s583 + $0x628] sm:$0xff]
      %v797 = vld [vmem:[%s583 + $0x630] sm:$0xff]
      %v798 = vld [vmem:[%s583 + $0x638] sm:$0xff]
      %v799 = vld [vmem:[%s583 + $0x640] sm:$0xff]
      %v800 = vld [vmem:[%s583 + $0x648] sm:$0xff]
      %v801 = vld [vmem:[%s583 + $0x650] sm:$0xff]
      %v802 = vld [vmem:[%s583 + $0x658] sm:$0xff]
      %v803 = vld [vmem:[%s583 + $0x660] sm:$0xff]
      %v804 = vld [vmem:[%s583 + $0x668] sm:$0xff]
      %v805 = vld [vmem:[%s583 + $0x670] sm:$0xff]
      %v806 = vld [vmem:[%s583 + $0x678] sm:$0xff]
      %v807 = vld [vmem:[%s583 + $0x680] sm:$0xff]
      %v808 = vld [vmem:[%s583 + $0x688] sm:$0xff]
      %v809 = vld [vmem:[%s583 + $0x690] sm:$0xff]
      %v810 = vld [vmem:[%s583 + $0x698] sm:$0xff]
      %v811 = vld [vmem:[%s583 + $0x6a0] sm:$0xff]
      %v812 = vld [vmem:[%s583 + $0x6a8] sm:$0xff]
      %v813 = vld [vmem:[%s583 + $0x6b0] sm:$0xff]
      %v814 = vld [vmem:[%s583 + $0x6b8] sm:$0xff]
      %v815 = vld [vmem:[%s583 + $0x6c0] sm:$0xff]
      %v816 = vld [vmem:[%s583 + $0x6c8] sm:$0xff]
      %v817 = vld [vmem:[%s583 + $0x6d0] sm:$0xff]
      %v818 = vld [vmem:[%s583 + $0x6d8] sm:$0xff]
      %v819 = vld [vmem:[%s583 + $0x6e0] sm:$0xff]
      %v820 = vld [vmem:[%s583 + $0x6e8] sm:$0xff]
      %v821 = vld [vmem:[%s583 + $0x6f0] sm:$0xff]
      %v822 = vld [vmem:[%s583 + $0x6f8] sm:$0xff]
      %v823 = vld [vmem:[%s1] sm:$0xf]
      %v824 = vld [vmem:[%s1 + $0x4] sm:$0xf]
      %v825 = vld [vmem:[%s1 + $0x8] sm:$0xf]
      %v826 = vld [vmem:[%s1 + $0xc] sm:$0xf]
      %v827 = vld [vmem:[%s1 + $0x10] sm:$0xf]
      %v828 = vld [vmem:[%s1 + $0x14] sm:$0xf]
      %v829 = vld [vmem:[%s1 + $0x18] sm:$0xf]
      %v830 = vld [vmem:[%s1 + $0x1c] sm:$0xf]
      %v831 = vld [vmem:[%s1 + $0x20] sm:$0xf]
      %v832 = vld [vmem:[%s1 + $0x24] sm:$0xf]
      %v833 = vld [vmem:[%s1 + $0x28] sm:$0xf]
      %v834 = vld [vmem:[%s1 + $0x2c] sm:$0xf]
      %v835 = vld [vmem:[%s1 + $0x30] sm:$0xf]
      %v836 = vld [vmem:[%s1 + $0x34] sm:$0xf]
      %v837 = vld [vmem:[%s1 + $0x38] sm:$0xf]
      %v838 = vld [vmem:[%s1 + $0x3c] sm:$0xf]
      %v839 = vld [vmem:[%s1 + $0x40] sm:$0xf]
      %v840 = vld [vmem:[%s1 + $0x44] sm:$0xf]
      %v841 = vld [vmem:[%s1 + $0x48] sm:$0xf]
      %v842 = vld [vmem:[%s1 + $0x4c] sm:$0xf]
      %v843 = vld [vmem:[%s1 + $0x50] sm:$0xf]
      %v844 = vld [vmem:[%s1 + $0x54] sm:$0xf]
      %v845 = vld [vmem:[%s1 + $0x58] sm:$0xf]
      %v846 = vld [vmem:[%s1 + $0x5c] sm:$0xf]
      %v847 = vld [vmem:[%s1 + $0x60] sm:$0xf]
      %v848 = vld [vmem:[%s1 + $0x64] sm:$0xf]
      %v849 = vld [vmem:[%s1 + $0x68] sm:$0xf]
      %v850 = vld [vmem:[%s1 + $0x6c] sm:$0xf]
      %v851 = vld [vmem:[%s1 + $0x70] sm:$0xf]
      %v852 = vld [vmem:[%s1 + $0x74] sm:$0xf]
      %v853 = vld [vmem:[%s1 + $0x78] sm:$0xf]
      %v854 = vld [vmem:[%s1 + $0x7c] sm:$0xf]
      %v855 = vld [vmem:[%s1 + $0x80] sm:$0xf]
      %v856 = vld [vmem:[%s1 + $0x84] sm:$0xf]
      %v857 = vld [vmem:[%s1 + $0x88] sm:$0xf]
      %v858 = vld [vmem:[%s1 + $0x8c] sm:$0xf]
      %v859 = vld [vmem:[%s1 + $0x90] sm:$0xf]
      %v860 = vld [vmem:[%s1 + $0x94] sm:$0xf]
      %v861 = vld [vmem:[%s1 + $0x98] sm:$0xf]
      %v862 = vld [vmem:[%s1 + $0x9c] sm:$0xf]
      %v863 = vld [vmem:[%s1 + $0xa0] sm:$0xf]
      %v864 = vld [vmem:[%s1 + $0xa4] sm:$0xf]
      %v865 = vld [vmem:[%s1 + $0xa8] sm:$0xf]
      %v866 = vld [vmem:[%s1 + $0xac] sm:$0xf]
      %v867 = vld [vmem:[%s1 + $0xb0] sm:$0xf]
      %v868 = vld [vmem:[%s1 + $0xb4] sm:$0xf]
      %v869 = vld [vmem:[%s1 + $0xb8] sm:$0xf]
      %v870 = vld [vmem:[%s1 + $0xbc] sm:$0xf]
      %v871 = vld [vmem:[%s1 + $0xc0] sm:$0xf]
      %v872 = vld [vmem:[%s1 + $0xc4] sm:$0xf]
      %v873 = vld [vmem:[%s1 + $0xc8] sm:$0xf]
      %v874 = vld [vmem:[%s1 + $0xcc] sm:$0xf]
      %v875 = vld [vmem:[%s1 + $0xd0] sm:$0xf]
      %v876 = vld [vmem:[%s1 + $0xd4] sm:$0xf]
      %v877 = vld [vmem:[%s1 + $0xd8] sm:$0xf]
      %v878 = vld [vmem:[%s1 + $0xdc] sm:$0xf]
      %v879 = vld [vmem:[%s1 + $0xe0] sm:$0xf]
      %v880 = vld [vmem:[%s1 + $0xe4] sm:$0xf]
      %v881 = vld [vmem:[%s1 + $0xe8] sm:$0xf]
      %v882 = vld [vmem:[%s1 + $0xec] sm:$0xf]
      %v883 = vld [vmem:[%s1 + $0xf0] sm:$0xf]
      %v884 = vld [vmem:[%s1 + $0xf4] sm:$0xf]
      %v885 = vld [vmem:[%s1 + $0xf8] sm:$0xf]
      %v886 = vld [vmem:[%s1 + $0xfc] sm:$0xf]
      %v887 = vld [vmem:[%s1 + $0x100] sm:$0xf]
      %v888 = vld [vmem:[%s1 + $0x104] sm:$0xf]
      %v889 = vld [vmem:[%s1 + $0x108] sm:$0xf]
      %v890 = vld [vmem:[%s1 + $0x10c] sm:$0xf]
      %v891 = vld [vmem:[%s1 + $0x110] sm:$0xf]
      %v892 = vld [vmem:[%s1 + $0x114] sm:$0xf]
      %v893 = vld [vmem:[%s1 + $0x118] sm:$0xf]
      %v894 = vld [vmem:[%s1 + $0x11c] sm:$0xf]
      %v895 = vld [vmem:[%s1 + $0x120] sm:$0xf]
      %v896 = vld [vmem:[%s1 + $0x124] sm:$0xf]
      %v897 = vld [vmem:[%s1 + $0x128] sm:$0xf]
      %v898 = vld [vmem:[%s1 + $0x12c] sm:$0xf]
      %v899 = vld [vmem:[%s1 + $0x130] sm:$0xf]
      %v900 = vld [vmem:[%s1 + $0x134] sm:$0xf]
      %v901 = vld [vmem:[%s1 + $0x138] sm:$0xf]
      %v902 = vld [vmem:[%s1 + $0x13c] sm:$0xf]
      %v903 = vld [vmem:[%s1 + $0x140] sm:$0xf]
      %v904 = vld [vmem:[%s1 + $0x144] sm:$0xf]
      %v905 = vld [vmem:[%s1 + $0x148] sm:$0xf]
      %v906 = vld [vmem:[%s1 + $0x14c] sm:$0xf]
      %v907 = vld [vmem:[%s1 + $0x150] sm:$0xf]
      %v908 = vld [vmem:[%s1 + $0x154] sm:$0xf]
      %v909 = vld [vmem:[%s1 + $0x158] sm:$0xf]
      %v910 = vld [vmem:[%s1 + $0x15c] sm:$0xf]
      %v911 = vld [vmem:[%s1 + $0x160] sm:$0xf]
      %v912 = vld [vmem:[%s1 + $0x164] sm:$0xf]
      %v913 = vld [vmem:[%s1 + $0x168] sm:$0xf]
      %v914 = vld [vmem:[%s1 + $0x16c] sm:$0xf]
      %v915 = vld [vmem:[%s1 + $0x170] sm:$0xf]
      %v916 = vld [vmem:[%s1 + $0x174] sm:$0xf]
      %v917 = vld [vmem:[%s1 + $0x178] sm:$0xf]
      %v918 = vld [vmem:[%s1 + $0x17c] sm:$0xf]
      %v919 = vld [vmem:[%s1 + $0x180] sm:$0xf]
      %v920 = vld [vmem:[%s1 + $0x184] sm:$0xf]
      %v921 = vld [vmem:[%s2] sm:$0x1]
      %v922 = vpack.c.bf16 %v606, %v599
      %v923 = vpack.c.bf16 %v607, %v600
      %v924 = vpack.c.bf16 %v608, %v601
      %v925 = vpack.c.bf16 %v609, %v602
      %v926 = vpack.c.bf16 %v610, %v603
      %v927 = vpack.c.bf16 %v611, %v604
      %v928 = vpack.c.bf16 %v612, %v605
      %v929 = vpack.c.bf16 %v620, %v613
      %v930 = vpack.c.bf16 %v621, %v614
      %v931 = vpack.c.bf16 %v622, %v615
      %v932 = vpack.c.bf16 %v623, %v616
      %v933 = vpack.c.bf16 %v624, %v617
      %v934 = vpack.c.bf16 %v625, %v618
      %v935 = vpack.c.bf16 %v626, %v619
      %v936 = vpack.c.bf16 %v634, %v627
      %v937 = vpack.c.bf16 %v635, %v628
      %v938 = vpack.c.bf16 %v636, %v629
      %v939 = vpack.c.bf16 %v637, %v630
      %v940 = vpack.c.bf16 %v638, %v631
      %v941 = vpack.c.bf16 %v639, %v632
      %v942 = vpack.c.bf16 %v640, %v633
      %v943 = vpack.c.bf16 %v648, %v641
      %v944 = vpack.c.bf16 %v649, %v642
      %v945 = vpack.c.bf16 %v650, %v643
      %v946 = vpack.c.bf16 %v651, %v644
      %v947 = vpack.c.bf16 %v652, %v645
      %v948 = vpack.c.bf16 %v653, %v646
      %v949 = vpack.c.bf16 %v654, %v647
      %v950 = vpack.c.bf16 %v662, %v655
      %v951 = vpack.c.bf16 %v663, %v656
      %v952 = vpack.c.bf16 %v664, %v657
      %v953 = vpack.c.bf16 %v665, %v658
      %v954 = vpack.c.bf16 %v666, %v659
      %v955 = vpack.c.bf16 %v667, %v660
      %v956 = vpack.c.bf16 %v668, %v661
      %v957 = vpack.c.bf16 %v676, %v669
      %v958 = vpack.c.bf16 %v677, %v670
      %v959 = vpack.c.bf16 %v678, %v671
      %v960 = vpack.c.bf16 %v679, %v672
      %v961 = vpack.c.bf16 %v680, %v673
      %v962 = vpack.c.bf16 %v681, %v674
      %v963 = vpack.c.bf16 %v682, %v675
      %v964 = vpack.c.bf16 %v690, %v683
      %v965 = vpack.c.bf16 %v691, %v684
      %v966 = vpack.c.bf16 %v692, %v685
      %v967 = vpack.c.bf16 %v693, %v686
      %v968 = vpack.c.bf16 %v694, %v687
      %v969 = vpack.c.bf16 %v695, %v688
      %v970 = vpack.c.bf16 %v696, %v689
      %v971 = vpack.c.bf16 %v704, %v697
      %v972 = vpack.c.bf16 %v705, %v698
      %v973 = vpack.c.bf16 %v706, %v699
      %v974 = vpack.c.bf16 %v707, %v700
      %v975 = vpack.c.bf16 %v708, %v701
      %v976 = vpack.c.bf16 %v709, %v702
      %v977 = vpack.c.bf16 %v710, %v703
      %v978 = vpack.c.bf16 %v718, %v711
      %v979 = vpack.c.bf16 %v719, %v712
      %v980 = vpack.c.bf16 %v720, %v713
      %v981 = vpack.c.bf16 %v721, %v714
      %v982 = vpack.c.bf16 %v722, %v715
      %v983 = vpack.c.bf16 %v723, %v716
      %v984 = vpack.c.bf16 %v724, %v717
      %v985 = vpack.c.bf16 %v732, %v725
      %v986 = vpack.c.bf16 %v733, %v726
      %v987 = vpack.c.bf16 %v734, %v727
      %v988 = vpack.c.bf16 %v735, %v728
      %v989 = vpack.c.bf16 %v736, %v729
      %v990 = vpack.c.bf16 %v737, %v730
      %v991 = vpack.c.bf16 %v738, %v731
      %v992 = vpack.c.bf16 %v746, %v739
      %v993 = vpack.c.bf16 %v747, %v740
      %v994 = vpack.c.bf16 %v748, %v741
      %v995 = vpack.c.bf16 %v749, %v742
      %v996 = vpack.c.bf16 %v750, %v743
      %v997 = vpack.c.bf16 %v751, %v744
      %v998 = vpack.c.bf16 %v752, %v745
      %v999 = vpack.c.bf16 %v760, %v753
      %v1000 = vpack.c.bf16 %v761, %v754
      %v1001 = vpack.c.bf16 %v762, %v755
      %v1002 = vpack.c.bf16 %v763, %v756
      %v1003 = vpack.c.bf16 %v764, %v757
      %v1004 = vpack.c.bf16 %v765, %v758
      %v1005 = vpack.c.bf16 %v766, %v759
      %v1006 = vpack.c.bf16 %v774, %v767
      %v1007 = vpack.c.bf16 %v775, %v768
      %v1008 = vpack.c.bf16 %v776, %v769
      %v1009 = vpack.c.bf16 %v777, %v770
      %v1010 = vpack.c.bf16 %v778, %v771
      %v1011 = vpack.c.bf16 %v779, %v772
      %v1012 = vpack.c.bf16 %v780, %v773
      %v1013 = vpack.c.bf16 %v788, %v781
      %v1014 = vpack.c.bf16 %v789, %v782
      %v1015 = vpack.c.bf16 %v790, %v783
      %v1016 = vpack.c.bf16 %v791, %v784
      %v1017 = vpack.c.bf16 %v792, %v785
      %v1018 = vpack.c.bf16 %v793, %v786
      %v1019 = vpack.c.bf16 %v794, %v787
      %v1020 = vpack.c.bf16 %v802, %v795
      %v1021 = vpack.c.bf16 %v803, %v796
      %v1022 = vpack.c.bf16 %v804, %v797
      %v1023 = vpack.c.bf16 %v805, %v798
      %v1024 = vpack.c.bf16 %v806, %v799
      %v1025 = vpack.c.bf16 %v807, %v800
      %v1026 = vpack.c.bf16 %v808, %v801
      %v1027 = vpack.c.bf16 %v816, %v809
      %v1028 = vpack.c.bf16 %v817, %v810
      %v1029 = vpack.c.bf16 %v818, %v811
      %v1030 = vpack.c.bf16 %v819, %v812
      %v1031 = vpack.c.bf16 %v820, %v813
      %v1032 = vpack.c.bf16 %v821, %v814
      %v1033 = vpack.c.bf16 %v822, %v815
      %v1035 = vlaneseq
      %v1036 = vshrl.u32 %v1035, 7
      %v1037 = vsub.s32 0, %v1036
      %v1038 = vrot.slane %v921, %v1037
      %v1138 = vunpack.c.l.b16 %v823
      %v1139 = vunpack.c.l.b16 %v824
      %v1140 = vunpack.c.l.b16 %v825
      %v1141 = vunpack.c.l.b16 %v826
      %v1142 = vunpack.c.l.b16 %v827
      %v1143 = vunpack.c.l.b16 %v828
      %v1144 = vunpack.c.l.b16 %v829
      %v1145 = vunpack.c.l.b16 %v830
      %v1146 = vunpack.c.l.b16 %v831
      %v1147 = vunpack.c.l.b16 %v832
      %v1148 = vunpack.c.l.b16 %v833
      %v1149 = vunpack.c.l.b16 %v834
      %v1150 = vunpack.c.l.b16 %v835
      %v1151 = vunpack.c.l.b16 %v836
      %v1152 = vunpack.c.l.b16 %v837
      %v1153 = vunpack.c.l.b16 %v838
      %v1154 = vunpack.c.l.b16 %v839
      %v1155 = vunpack.c.l.b16 %v840
      %v1156 = vunpack.c.l.b16 %v841
      %v1157 = vunpack.c.l.b16 %v842
      %v1158 = vunpack.c.l.b16 %v843
      %v1159 = vunpack.c.l.b16 %v844
      %v1160 = vunpack.c.l.b16 %v845
      %v1161 = vunpack.c.l.b16 %v846
      %v1162 = vunpack.c.l.b16 %v847
      %v1163 = vunpack.c.l.b16 %v848
      %v1164 = vunpack.c.l.b16 %v849
      %v1165 = vunpack.c.l.b16 %v850
      %v1166 = vunpack.c.l.b16 %v851
      %v1167 = vunpack.c.l.b16 %v852
      %v1168 = vunpack.c.l.b16 %v853
      %v1169 = vunpack.c.l.b16 %v854
      %v1170 = vunpack.c.l.b16 %v855
      %v1171 = vunpack.c.l.b16 %v856
      %v1172 = vunpack.c.l.b16 %v857
      %v1173 = vunpack.c.l.b16 %v858
      %v1174 = vunpack.c.l.b16 %v859
      %v1175 = vunpack.c.l.b16 %v860
      %v1176 = vunpack.c.l.b16 %v861
      %v1177 = vunpack.c.l.b16 %v862
      %v1178 = vunpack.c.l.b16 %v863
      %v1179 = vunpack.c.l.b16 %v864
      %v1180 = vunpack.c.l.b16 %v865
      %v1181 = vunpack.c.l.b16 %v866
      %v1182 = vunpack.c.l.b16 %v867
      %v1183 = vunpack.c.l.b16 %v868
      %v1184 = vunpack.c.l.b16 %v869
      %v1185 = vunpack.c.l.b16 %v870
      %v1186 = vunpack.c.l.b16 %v871
      %v1187 = vunpack.c.l.b16 %v872
      %v1188 = vunpack.c.l.b16 %v873
      %v1189 = vunpack.c.l.b16 %v874
      %v1190 = vunpack.c.l.b16 %v875
      %v1191 = vunpack.c.l.b16 %v876
      %v1192 = vunpack.c.l.b16 %v877
      %v1193 = vunpack.c.l.b16 %v878
      %v1194 = vunpack.c.l.b16 %v879
      %v1195 = vunpack.c.l.b16 %v880
      %v1196 = vunpack.c.l.b16 %v881
      %v1197 = vunpack.c.l.b16 %v882
      %v1198 = vunpack.c.l.b16 %v883
      %v1199 = vunpack.c.l.b16 %v884
      %v1200 = vunpack.c.l.b16 %v885
      %v1201 = vunpack.c.l.b16 %v886
      %v1202 = vunpack.c.l.b16 %v887
      %v1203 = vunpack.c.l.b16 %v888
      %v1204 = vunpack.c.l.b16 %v889
      %v1205 = vunpack.c.l.b16 %v890
      %v1206 = vunpack.c.l.b16 %v891
      %v1207 = vunpack.c.l.b16 %v892
      %v1208 = vunpack.c.l.b16 %v893
      %v1209 = vunpack.c.l.b16 %v894
      %v1210 = vunpack.c.l.b16 %v895
      %v1211 = vunpack.c.l.b16 %v896
      %v1212 = vunpack.c.l.b16 %v897
      %v1213 = vunpack.c.l.b16 %v898
      %v1214 = vunpack.c.l.b16 %v899
      %v1215 = vunpack.c.l.b16 %v900
      %v1216 = vunpack.c.l.b16 %v901
      %v1217 = vunpack.c.l.b16 %v902
      %v1218 = vunpack.c.l.b16 %v903
      %v1219 = vunpack.c.l.b16 %v904
      %v1220 = vunpack.c.l.b16 %v905
      %v1221 = vunpack.c.l.b16 %v906
      %v1222 = vunpack.c.l.b16 %v907
      %v1223 = vunpack.c.l.b16 %v908
      %v1224 = vunpack.c.l.b16 %v909
      %v1225 = vunpack.c.l.b16 %v910
      %v1226 = vunpack.c.l.b16 %v911
      %v1227 = vunpack.c.l.b16 %v912
      %v1228 = vunpack.c.l.b16 %v913
      %v1229 = vunpack.c.l.b16 %v914
      %v1230 = vunpack.c.l.b16 %v915
      %v1231 = vunpack.c.l.b16 %v916
      %v1232 = vunpack.c.l.b16 %v917
      %v1233 = vunpack.c.l.b16 %v918
      %v1234 = vunpack.c.l.b16 %v919
      %v1235 = vunpack.c.l.b16 %v920
      %v1236 = vpack.c.b16 %v1139, %v1138
      %v1237 = vpack.c.b16 %v1141, %v1140
      %v1238 = vpack.c.b16 %v1143, %v1142
      %v1239 = vpack.c.b16 %v1145, %v1144
      %v1240 = vpack.c.b16 %v1147, %v1146
      %v1241 = vpack.c.b16 %v1149, %v1148
      %v1242 = vpack.c.b16 %v1151, %v1150
      %v1243 = vpack.c.b16 %v1153, %v1152
      %v1244 = vpack.c.b16 %v1155, %v1154
      %v1245 = vpack.c.b16 %v1157, %v1156
      %v1246 = vpack.c.b16 %v1159, %v1158
      %v1247 = vpack.c.b16 %v1161, %v1160
      %v1248 = vpack.c.b16 %v1163, %v1162
      %v1249 = vpack.c.b16 %v1165, %v1164
      %v1250 = vpack.c.b16 %v1167, %v1166
      %v1251 = vpack.c.b16 %v1169, %v1168
      %v1252 = vpack.c.b16 %v1171, %v1170
      %v1253 = vpack.c.b16 %v1173, %v1172
      %v1254 = vpack.c.b16 %v1175, %v1174
      %v1255 = vpack.c.b16 %v1177, %v1176
      %v1256 = vpack.c.b16 %v1179, %v1178
      %v1257 = vpack.c.b16 %v1181, %v1180
      %v1258 = vpack.c.b16 %v1183, %v1182
      %v1259 = vpack.c.b16 %v1185, %v1184
      %v1260 = vpack.c.b16 %v1187, %v1186
      %v1261 = vpack.c.b16 %v1189, %v1188
      %v1262 = vpack.c.b16 %v1191, %v1190
      %v1263 = vpack.c.b16 %v1193, %v1192
      %v1264 = vpack.c.b16 %v1195, %v1194
      %v1265 = vpack.c.b16 %v1197, %v1196
      %v1266 = vpack.c.b16 %v1199, %v1198
      %v1267 = vpack.c.b16 %v1201, %v1200
      %v1268 = vpack.c.b16 %v1203, %v1202
      %v1269 = vpack.c.b16 %v1205, %v1204
      %v1270 = vpack.c.b16 %v1207, %v1206
      %v1271 = vpack.c.b16 %v1209, %v1208
      %v1272 = vpack.c.b16 %v1211, %v1210
      %v1273 = vpack.c.b16 %v1213, %v1212
      %v1274 = vpack.c.b16 %v1215, %v1214
      %v1275 = vpack.c.b16 %v1217, %v1216
      %v1276 = vpack.c.b16 %v1219, %v1218
      %v1277 = vpack.c.b16 %v1221, %v1220
      %v1278 = vpack.c.b16 %v1223, %v1222
      %v1279 = vpack.c.b16 %v1225, %v1224
      %v1280 = vpack.c.b16 %v1227, %v1226
      %v1281 = vpack.c.b16 %v1229, %v1228
      %v1282 = vpack.c.b16 %v1231, %v1230
      %v1283 = vpack.c.b16 %v1233, %v1232
      %v1284 = vpack.c.b16 %v1235, %v1234
      %vm1334 = vcmask 130048
      %v1336 = vsel %vm1334, %v928, 0
      %v1339 = vsel %vm1334, %v935, 0
      %v1342 = vsel %vm1334, %v942, 0
      %v1345 = vsel %vm1334, %v949, 0
      %v1348 = vsel %vm1334, %v956, 0
      %v1351 = vsel %vm1334, %v963, 0
      %v1354 = vsel %vm1334, %v970, 0
      %v1357 = vsel %vm1334, %v977, 0
      %v1360 = vsel %vm1334, %v984, 0
      %v1363 = vsel %vm1334, %v991, 0
      %v1366 = vsel %vm1334, %v998, 0
      %v1369 = vsel %vm1334, %v1005, 0
      %v1372 = vsel %vm1334, %v1012, 0
      %v1375 = vsel %vm1334, %v1019, 0
      %v1378 = vsel %vm1334, %v1026, 0
      %v1381 = vsel %vm1334, %v1033, 0
      %1383 = vmatprep.subr.bf16.mxu0 0
      %1384 = vmatpush1.bf16.msra.mxu0 %v1236
      %1385 = vmatprep.subr.bf16.mxu0 0
      %1386 = vmatpush1.bf16.msra.mxu0 %v1237
      %1387 = vmatprep.subr.bf16.mxu0 0
      %1388 = vmatpush1.bf16.msra.mxu0 %v1238
      %1389 = vmatprep.subr.bf16.mxu0 0
      %1390 = vmatpush1.bf16.msra.mxu0 %v1239
      %1391 = vmatprep.subr.bf16.mxu0 0
      %1392 = vmatpush1.bf16.msra.mxu0 %v1240
      %1393 = vmatprep.subr.bf16.mxu0 0
      %1394 = vmatpush1.bf16.msra.mxu0 %v1241
      %1395 = vmatprep.subr.bf16.mxu0 0
      %1396 = vmatpush1.bf16.msra.mxu0 %v1242
      %1397 = vmatprep.subr.bf16.mxu0 0
      %1398 = vmatpush1.bf16.msra.mxu0 %v1243
      %1399 = vmatprep.subr.bf16.mxu0 0
      %1400 = vmatpush1.bf16.msra.mxu0 %v1244
      %1401 = vmatprep.subr.bf16.mxu0 0
      %1402 = vmatpush1.bf16.msra.mxu0 %v1245
      %1403 = vmatprep.subr.bf16.mxu0 0
      %1404 = vmatpush1.bf16.msra.mxu0 %v1246
      %1405 = vmatprep.subr.bf16.mxu0 0
      %1406 = vmatpush1.bf16.msra.mxu0 %v1247
      %1407 = vmatprep.subr.bf16.mxu0 0
      %1408 = vmatpush1.bf16.msra.mxu0 %v1248
      %1409 = vmatprep.subr.bf16.mxu0 0
      %1410 = vmatpush1.bf16.msra.mxu0 %v1249
      %1411 = vmatprep.subr.bf16.mxu0 0
      %1412 = vmatpush1.bf16.msra.mxu0 %v1250
      %1413 = vmatprep.subr.bf16.mxu0 0
      %1414 = vmatpush1.bf16.msra.mxu0 %v1251
      %1415 = vmatprep.mubr.bf16.mxu0 %v923
      %1416 = vmatmul.mubr.bf16.gmra.mrb[0].mxu0 %v922
      %v1417 = vpop.f32.mrb[0].mxu0
      %v1418 = vadd.f32 %v1038, %v1417
      %v1419 = vpop.f32.mrb[0].mxu0
      %v1420 = vpop.f32.mrb[0].mxu0
      %v1421 = vadd.f32 %v1038, %v1420
      %v1422 = vpop.f32.mrb[0].mxu0
      %1423 = vmatprep.mubr.bf16.mxu0 %v930
      %1424 = vmatmul.mubr.bf16.gmra.mrb[0].mxu0 %v929
      %v1425 = vpop.f32.mrb[0].mxu0
      %v1426 = vadd.f32 %v1038, %v1425
      %v1427 = vpop.f32.mrb[0].mxu0
      %v1428 = vpop.f32.mrb[0].mxu0
      %v1429 = vadd.f32 %v1038, %v1428
      %v1430 = vpop.f32.mrb[0].mxu0
      %1431 = vmatprep.mubr.bf16.mxu0 %v937
      %1432 = vmatmul.mubr.bf16.gmra.mrb[0].mxu0 %v936
      %v1433 = vpop.f32.mrb[0].mxu0
      %v1434 = vadd.f32 %v1038, %v1433
      %v1435 = vpop.f32.mrb[0].mxu0
      %v1436 = vpop.f32.mrb[0].mxu0
      %v1437 = vadd.f32 %v1038, %v1436
      %v1438 = vpop.f32.mrb[0].mxu0
      %1439 = vmatprep.mubr.bf16.mxu0 %v944
      %1440 = vmatmul.mubr.bf16.gmra.mrb[0].mxu0 %v943
      %v1441 = vpop.f32.mrb[0].mxu0
      %v1442 = vadd.f32 %v1038, %v1441
      %v1443 = vpop.f32.mrb[0].mxu0
      %v1444 = vpop.f32.mrb[0].mxu0
      %v1445 = vadd.f32 %v1038, %v1444
      %v1446 = vpop.f32.mrb[0].mxu0
      %1447 = vmatprep.mubr.bf16.mxu0 %v951
      %1448 = vmatmul.mubr.bf16.gmra.mrb[0].mxu0 %v950
      %v1449 = vpop.f32.mrb[0].mxu0
      %v1450 = vadd.f32 %v1038, %v1449
      %v1451 = vpop.f32.mrb[0].mxu0
      %v1452 = vpop.f32.mrb[0].mxu0
      %v1453 = vadd.f32 %v1038, %v1452
      %v1454 = vpop.f32.mrb[0].mxu0
      %1455 = vmatprep.mubr.bf16.mxu0 %v958
      %1456 = vmatmul.mubr.bf16.gmra.mrb[0].mxu0 %v957
      %v1457 = vpop.f32.mrb[0].mxu0
      %v1458 = vadd.f32 %v1038, %v1457
      %v1459 = vpop.f32.mrb[0].mxu0
      %v1460 = vpop.f32.mrb[0].mxu0
      %v1461 = vadd.f32 %v1038, %v1460
      %v1462 = vpop.f32.mrb[0].mxu0
      %1463 = vmatprep.mubr.bf16.mxu0 %v965
      %1464 = vmatmul.mubr.bf16.gmra.mrb[0].mxu0 %v964
      %v1465 = vpop.f32.mrb[0].mxu0
      %v1466 = vadd.f32 %v1038, %v1465
      %v1467 = vpop.f32.mrb[0].mxu0
      %v1468 = vpop.f32.mrb[0].mxu0
      %v1469 = vadd.f32 %v1038, %v1468
      %v1470 = vpop.f32.mrb[0].mxu0
      %1471 = vmatprep.mubr.bf16.mxu0 %v972
      %1472 = vmatmul.mubr.bf16.gmra.mrb[0].mxu0 %v971
      %v1473 = vpop.f32.mrb[0].mxu0
      %v1474 = vadd.f32 %v1038, %v1473
      %v1475 = vpop.f32.mrb[0].mxu0
      %v1476 = vpop.f32.mrb[0].mxu0
      %v1477 = vadd.f32 %v1038, %v1476
      %v1478 = vpop.f32.mrb[0].mxu0
      %1479 = vmatprep.mubr.bf16.mxu0 %v979
      %1480 = vmatmul.mubr.bf16.gmra.mrb[0].mxu0 %v978
      %v1481 = vpop.f32.mrb[0].mxu0
      %v1482 = vadd.f32 %v1038, %v1481
      %v1483 = vpop.f32.mrb[0].mxu0
      %v1484 = vpop.f32.mrb[0].mxu0
      %v1485 = vadd.f32 %v1038, %v1484
      %v1486 = vpop.f32.mrb[0].mxu0
      %1487 = vmatprep.mubr.bf16.mxu0 %v986
      %1488 = vmatmul.mubr.bf16.gmra.mrb[0].mxu0 %v985
      %v1489 = vpop.f32.mrb[0].mxu0
      %v1490 = vadd.f32 %v1038, %v1489
      %v1491 = vpop.f32.mrb[0].mxu0
      %v1492 = vpop.f32.mrb[0].mxu0
      %v1493 = vadd.f32 %v1038, %v1492
      %v1494 = vpop.f32.mrb[0].mxu0
      %1495 = vmatprep.mubr.bf16.mxu0 %v993
      %1496 = vmatmul.mubr.bf16.gmra.mrb[0].mxu0 %v992
      %v1497 = vpop.f32.mrb[0].mxu0
      %v1498 = vadd.f32 %v1038, %v1497
      %v1499 = vpop.f32.mrb[0].mxu0
      %v1500 = vpop.f32.mrb[0].mxu0
      %v1501 = vadd.f32 %v1038, %v1500
      %v1502 = vpop.f32.mrb[0].mxu0
      %1503 = vmatprep.mubr.bf16.mxu0 %v1000
      %1504 = vmatmul.mubr.bf16.gmra.mrb[0].mxu0 %v999
      %v1505 = vpop.f32.mrb[0].mxu0
      %v1506 = vadd.f32 %v1038, %v1505
      %v1507 = vpop.f32.mrb[0].mxu0
      %v1508 = vpop.f32.mrb[0].mxu0
      %v1509 = vadd.f32 %v1038, %v1508
      %v1510 = vpop.f32.mrb[0].mxu0
      %1511 = vmatprep.mubr.bf16.mxu0 %v1007
      %1512 = vmatmul.mubr.bf16.gmra.mrb[0].mxu0 %v1006
      %v1513 = vpop.f32.mrb[0].mxu0
      %v1514 = vadd.f32 %v1038, %v1513
      %v1515 = vpop.f32.mrb[0].mxu0
      %v1516 = vpop.f32.mrb[0].mxu0
      %v1517 = vadd.f32 %v1038, %v1516
      %v1518 = vpop.f32.mrb[0].mxu0
      %1519 = vmatprep.mubr.bf16.mxu0 %v1014
      %1520 = vmatmul.mubr.bf16.gmra.mrb[0].mxu0 %v1013
      %v1521 = vpop.f32.mrb[0].mxu0
      %v1522 = vadd.f32 %v1038, %v1521
      %v1523 = vpop.f32.mrb[0].mxu0
      %v1524 = vpop.f32.mrb[0].mxu0
      %v1525 = vadd.f32 %v1038, %v1524
      %v1526 = vpop.f32.mrb[0].mxu0
      %1527 = vmatprep.mubr.bf16.mxu0 %v1021
      %1528 = vmatmul.mubr.bf16.gmra.mrb[0].mxu0 %v1020
      %v1529 = vpop.f32.mrb[0].mxu0
      %v1530 = vadd.f32 %v1038, %v1529
      %v1531 = vpop.f32.mrb[0].mxu0
      %v1532 = vpop.f32.mrb[0].mxu0
      %v1533 = vadd.f32 %v1038, %v1532
      %v1534 = vpop.f32.mrb[0].mxu0
      %1535 = vmatprep.mubr.bf16.mxu0 %v1028
      %1536 = vmatmul.mubr.bf16.gmra.mrb[0].mxu0 %v1027
      %v1537 = vpop.f32.mrb[0].mxu0
      %v1538 = vadd.f32 %v1038, %v1537
      %v1539 = vpop.f32.mrb[0].mxu0
      %v1540 = vpop.f32.mrb[0].mxu0
      %v1541 = vadd.f32 %v1038, %v1540
      %v1542 = vpop.f32.mrb[0].mxu0
      %1543 = vdwg.mxu0
      %1544 = vmatprep.subr.bf16.mxu0 0
      %1545 = vmatpush1.bf16.msra.mxu0 %v1252
      %1546 = vmatprep.subr.bf16.mxu0 0
      %1547 = vmatpush1.bf16.msra.mxu0 %v1253
      %1548 = vmatprep.subr.bf16.mxu0 0
      %1549 = vmatpush1.bf16.msra.mxu0 %v1254
      %1550 = vmatprep.subr.bf16.mxu0 0
      %1551 = vmatpush1.bf16.msra.mxu0 %v1255
      %1552 = vmatprep.subr.bf16.mxu0 0
      %1553 = vmatpush1.bf16.msra.mxu0 %v1256
      %1554 = vmatprep.subr.bf16.mxu0 0
      %1555 = vmatpush1.bf16.msra.mxu0 %v1257
      %1556 = vmatprep.subr.bf16.mxu0 0
      %1557 = vmatpush1.bf16.msra.mxu0 %v1258
      %1558 = vmatprep.subr.bf16.mxu0 0
      %1559 = vmatpush1.bf16.msra.mxu0 %v1259
      %1560 = vmatprep.subr.bf16.mxu0 0
      %1561 = vmatpush1.bf16.msra.mxu0 %v1260
      %1562 = vmatprep.subr.bf16.mxu0 0
      %1563 = vmatpush1.bf16.msra.mxu0 %v1261
      %1564 = vmatprep.subr.bf16.mxu0 0
      %1565 = vmatpush1.bf16.msra.mxu0 %v1262
      %1566 = vmatprep.subr.bf16.mxu0 0
      %1567 = vmatpush1.bf16.msra.mxu0 %v1263
      %1568 = vmatprep.subr.bf16.mxu0 0
      %1569 = vmatpush1.bf16.msra.mxu0 %v1264
      %1570 = vmatprep.subr.bf16.mxu0 0
      %1571 = vmatpush1.bf16.msra.mxu0 %v1265
      %1572 = vmatprep.subr.bf16.mxu0 0
      %1573 = vmatpush1.bf16.msra.mxu0 %v1266
      %1574 = vmatprep.subr.bf16.mxu0 0
      %1575 = vmatpush1.bf16.msra.mxu0 %v1267
      %1576 = vmatprep.mubr.bf16.mxu0 %v925
      %1577 = vmatmul.mubr.bf16.gmra.mrb[0].mxu0 %v924
      %v1578 = vpop.f32.mrb[0].mxu0
      %v1579 = vadd.f32 %v1418, %v1578
      %v1580 = vpop.f32.mrb[0].mxu0
      %v1581 = vpop.f32.mrb[0].mxu0
      %v1582 = vadd.f32 %v1421, %v1581
      %v1583 = vpop.f32.mrb[0].mxu0
      %1584 = vmatprep.mubr.bf16.mxu0 %v932
      %1585 = vmatmul.mubr.bf16.gmra.mrb[0].mxu0 %v931
      %v1586 = vpop.f32.mrb[0].mxu0
      %v1587 = vadd.f32 %v1426, %v1586
      %v1588 = vpop.f32.mrb[0].mxu0
      %v1589 = vpop.f32.mrb[0].mxu0
      %v1590 = vadd.f32 %v1429, %v1589
      %v1591 = vpop.f32.mrb[0].mxu0
      %1592 = vmatprep.mubr.bf16.mxu0 %v939
      %1593 = vmatmul.mubr.bf16.gmra.mrb[0].mxu0 %v938
      %v1594 = vpop.f32.mrb[0].mxu0
      %v1595 = vadd.f32 %v1434, %v1594
      %v1596 = vpop.f32.mrb[0].mxu0
      %v1597 = vpop.f32.mrb[0].mxu0
      %v1598 = vadd.f32 %v1437, %v1597
      %v1599 = vpop.f32.mrb[0].mxu0
      %1600 = vmatprep.mubr.bf16.mxu0 %v946
      %1601 = vmatmul.mubr.bf16.gmra.mrb[0].mxu0 %v945
      %v1602 = vpop.f32.mrb[0].mxu0
      %v1603 = vadd.f32 %v1442, %v1602
      %v1604 = vpop.f32.mrb[0].mxu0
      %v1605 = vpop.f32.mrb[0].mxu0
      %v1606 = vadd.f32 %v1445, %v1605
      %v1607 = vpop.f32.mrb[0].mxu0
      %1608 = vmatprep.mubr.bf16.mxu0 %v953
      %1609 = vmatmul.mubr.bf16.gmra.mrb[0].mxu0 %v952
      %v1610 = vpop.f32.mrb[0].mxu0
      %v1611 = vadd.f32 %v1450, %v1610
      %v1612 = vpop.f32.mrb[0].mxu0
      %v1613 = vpop.f32.mrb[0].mxu0
      %v1614 = vadd.f32 %v1453, %v1613
      %v1615 = vpop.f32.mrb[0].mxu0
      %1616 = vmatprep.mubr.bf16.mxu0 %v960
      %1617 = vmatmul.mubr.bf16.gmra.mrb[0].mxu0 %v959
      %v1618 = vpop.f32.mrb[0].mxu0
      %v1619 = vadd.f32 %v1458, %v1618
      %v1620 = vpop.f32.mrb[0].mxu0
      %v1621 = vpop.f32.mrb[0].mxu0
      %v1622 = vadd.f32 %v1461, %v1621
      %v1623 = vpop.f32.mrb[0].mxu0
      %1624 = vmatprep.mubr.bf16.mxu0 %v967
      %1625 = vmatmul.mubr.bf16.gmra.mrb[0].mxu0 %v966
      %v1626 = vpop.f32.mrb[0].mxu0
      %v1627 = vadd.f32 %v1466, %v1626
      %v1628 = vpop.f32.mrb[0].mxu0
      %v1629 = vpop.f32.mrb[0].mxu0
      %v1630 = vadd.f32 %v1469, %v1629
      %v1631 = vpop.f32.mrb[0].mxu0
      %1632 = vmatprep.mubr.bf16.mxu0 %v974
      %1633 = vmatmul.mubr.bf16.gmra.mrb[0].mxu0 %v973
      %v1634 = vpop.f32.mrb[0].mxu0
      %v1635 = vadd.f32 %v1474, %v1634
      %v1636 = vpop.f32.mrb[0].mxu0
      %v1637 = vpop.f32.mrb[0].mxu0
      %v1638 = vadd.f32 %v1477, %v1637
      %v1639 = vpop.f32.mrb[0].mxu0
      %1640 = vmatprep.mubr.bf16.mxu0 %v981
      %1641 = vmatmul.mubr.bf16.gmra.mrb[0].mxu0 %v980
      %v1642 = vpop.f32.mrb[0].mxu0
      %v1643 = vadd.f32 %v1482, %v1642
      %v1644 = vpop.f32.mrb[0].mxu0
      %v1645 = vpop.f32.mrb[0].mxu0
      %v1646 = vadd.f32 %v1485, %v1645
      %v1647 = vpop.f32.mrb[0].mxu0
      %1648 = vmatprep.mubr.bf16.mxu0 %v988
      %1649 = vmatmul.mubr.bf16.gmra.mrb[0].mxu0 %v987
      %v1650 = vpop.f32.mrb[0].mxu0
      %v1651 = vadd.f32 %v1490, %v1650
      %v1652 = vpop.f32.mrb[0].mxu0
      %v1653 = vpop.f32.mrb[0].mxu0
      %v1654 = vadd.f32 %v1493, %v1653
      %v1655 = vpop.f32.mrb[0].mxu0
      %1656 = vmatprep.mubr.bf16.mxu0 %v995
      %1657 = vmatmul.mubr.bf16.gmra.mrb[0].mxu0 %v994
      %v1658 = vpop.f32.mrb[0].mxu0
      %v1659 = vadd.f32 %v1498, %v1658
      %v1660 = vpop.f32.mrb[0].mxu0
      %v1661 = vpop.f32.mrb[0].mxu0
      %v1662 = vadd.f32 %v1501, %v1661
      %v1663 = vpop.f32.mrb[0].mxu0
      %1664 = vmatprep.mubr.bf16.mxu0 %v1002
      %1665 = vmatmul.mubr.bf16.gmra.mrb[0].mxu0 %v1001
      %v1666 = vpop.f32.mrb[0].mxu0
      %v1667 = vadd.f32 %v1506, %v1666
      %v1668 = vpop.f32.mrb[0].mxu0
      %v1669 = vpop.f32.mrb[0].mxu0
      %v1670 = vadd.f32 %v1509, %v1669
      %v1671 = vpop.f32.mrb[0].mxu0
      %1672 = vmatprep.mubr.bf16.mxu0 %v1009
      %1673 = vmatmul.mubr.bf16.gmra.mrb[0].mxu0 %v1008
      %v1674 = vpop.f32.mrb[0].mxu0
      %v1675 = vadd.f32 %v1514, %v1674
      %v1676 = vpop.f32.mrb[0].mxu0
      %v1677 = vpop.f32.mrb[0].mxu0
      %v1678 = vadd.f32 %v1517, %v1677
      %v1679 = vpop.f32.mrb[0].mxu0
      %1680 = vmatprep.mubr.bf16.mxu0 %v1016
      %1681 = vmatmul.mubr.bf16.gmra.mrb[0].mxu0 %v1015
      %v1682 = vpop.f32.mrb[0].mxu0
      %v1683 = vadd.f32 %v1522, %v1682
      %v1684 = vpop.f32.mrb[0].mxu0
      %v1685 = vpop.f32.mrb[0].mxu0
      %v1686 = vadd.f32 %v1525, %v1685
      %v1687 = vpop.f32.mrb[0].mxu0
      %1688 = vmatprep.mubr.bf16.mxu0 %v1023
      %1689 = vmatmul.mubr.bf16.gmra.mrb[0].mxu0 %v1022
      %v1690 = vpop.f32.mrb[0].mxu0
      %v1691 = vadd.f32 %v1530, %v1690
      %v1692 = vpop.f32.mrb[0].mxu0
      %v1693 = vpop.f32.mrb[0].mxu0
      %v1694 = vadd.f32 %v1533, %v1693
      %v1695 = vpop.f32.mrb[0].mxu0
      %1696 = vmatprep.mubr.bf16.mxu0 %v1030
      %1697 = vmatmul.mubr.bf16.gmra.mrb[0].mxu0 %v1029
      %v1698 = vpop.f32.mrb[0].mxu0
      %v1699 = vadd.f32 %v1538, %v1698
      %v1700 = vpop.f32.mrb[0].mxu0
      %v1701 = vpop.f32.mrb[0].mxu0
      %v1702 = vadd.f32 %v1541, %v1701
      %v1703 = vpop.f32.mrb[0].mxu0
      %1704 = vdwg.mxu0
      %1705 = vmatprep.subr.bf16.mxu0 0
      %1706 = vmatpush1.bf16.msra.mxu0 %v1268
      %1707 = vmatprep.subr.bf16.mxu0 0
      %1708 = vmatpush1.bf16.msra.mxu0 %v1269
      %1709 = vmatprep.subr.bf16.mxu0 0
      %1710 = vmatpush1.bf16.msra.mxu0 %v1270
      %1711 = vmatprep.subr.bf16.mxu0 0
      %1712 = vmatpush1.bf16.msra.mxu0 %v1271
      %1713 = vmatprep.subr.bf16.mxu0 0
      %1714 = vmatpush1.bf16.msra.mxu0 %v1272
      %1715 = vmatprep.subr.bf16.mxu0 0
      %1716 = vmatpush1.bf16.msra.mxu0 %v1273
      %1717 = vmatprep.subr.bf16.mxu0 0
      %1718 = vmatpush1.bf16.msra.mxu0 %v1274
      %1719 = vmatprep.subr.bf16.mxu0 0
      %1720 = vmatpush1.bf16.msra.mxu0 %v1275
      %1721 = vmatprep.subr.bf16.mxu0 0
      %1722 = vmatpush1.bf16.msra.mxu0 %v1276
      %1723 = vmatprep.subr.bf16.mxu0 0
      %1724 = vmatpush1.bf16.msra.mxu0 %v1277
      %1725 = vmatprep.subr.bf16.mxu0 0
      %1726 = vmatpush1.bf16.msra.mxu0 %v1278
      %1727 = vmatprep.subr.bf16.mxu0 0
      %1728 = vmatpush1.bf16.msra.mxu0 %v1279
      %1729 = vmatprep.subr.bf16.mxu0 0
      %1730 = vmatpush1.bf16.msra.mxu0 %v1280
      %1731 = vmatprep.subr.bf16.mxu0 0
      %1732 = vmatpush1.bf16.msra.mxu0 %v1281
      %1733 = vmatprep.subr.bf16.mxu0 0
      %1734 = vmatpush1.bf16.msra.mxu0 %v1282
      %1735 = vmatprep.subr.bf16.mxu0 0
      %1736 = vmatpush1.bf16.msra.mxu0 %v1283
      %1737 = vmatprep.mubr.bf16.mxu0 %v927
      %1738 = vmatmul.mubr.bf16.gmra.mrb[0].mxu0 %v926
      %v1739 = vpop.f32.mrb[0].mxu0
      %v1740 = vadd.f32 %v1579, %v1739
      %v1741 = vpop.f32.mrb[0].mxu0
      %v1742 = vpop.f32.mrb[0].mxu0
      %v1743 = vadd.f32 %v1582, %v1742
      %v1744 = vpop.f32.mrb[0].mxu0
      %1745 = vmatprep.mubr.bf16.mxu0 %v934
      %1746 = vmatmul.mubr.bf16.gmra.mrb[0].mxu0 %v933
      %v1747 = vpop.f32.mrb[0].mxu0
      %v1748 = vadd.f32 %v1587, %v1747
      %v1749 = vpop.f32.mrb[0].mxu0
      %v1750 = vpop.f32.mrb[0].mxu0
      %v1751 = vadd.f32 %v1590, %v1750
      %v1752 = vpop.f32.mrb[0].mxu0
      %1753 = vmatprep.mubr.bf16.mxu0 %v941
      %1754 = vmatmul.mubr.bf16.gmra.mrb[0].mxu0 %v940
      %v1755 = vpop.f32.mrb[0].mxu0
      %v1756 = vadd.f32 %v1595, %v1755
      %v1757 = vpop.f32.mrb[0].mxu0
      %v1758 = vpop.f32.mrb[0].mxu0
      %v1759 = vadd.f32 %v1598, %v1758
      %v1760 = vpop.f32.mrb[0].mxu0
      %1761 = vmatprep.mubr.bf16.mxu0 %v948
      %1762 = vmatmul.mubr.bf16.gmra.mrb[0].mxu0 %v947
      %v1763 = vpop.f32.mrb[0].mxu0
      %v1764 = vadd.f32 %v1603, %v1763
      %v1765 = vpop.f32.mrb[0].mxu0
      %v1766 = vpop.f32.mrb[0].mxu0
      %v1767 = vadd.f32 %v1606, %v1766
      %v1768 = vpop.f32.mrb[0].mxu0
      %1769 = vmatprep.mubr.bf16.mxu0 %v955
      %1770 = vmatmul.mubr.bf16.gmra.mrb[0].mxu0 %v954
      %v1771 = vpop.f32.mrb[0].mxu0
      %v1772 = vadd.f32 %v1611, %v1771
      %v1773 = vpop.f32.mrb[0].mxu0
      %v1774 = vpop.f32.mrb[0].mxu0
      %v1775 = vadd.f32 %v1614, %v1774
      %v1776 = vpop.f32.mrb[0].mxu0
      %1777 = vmatprep.mubr.bf16.mxu0 %v962
      %1778 = vmatmul.mubr.bf16.gmra.mrb[0].mxu0 %v961
      %v1779 = vpop.f32.mrb[0].mxu0
      %v1780 = vadd.f32 %v1619, %v1779
      %v1781 = vpop.f32.mrb[0].mxu0
      %v1782 = vpop.f32.mrb[0].mxu0
      %v1783 = vadd.f32 %v1622, %v1782
      %v1784 = vpop.f32.mrb[0].mxu0
      %1785 = vmatprep.mubr.bf16.mxu0 %v969
      %1786 = vmatmul.mubr.bf16.gmra.mrb[0].mxu0 %v968
      %v1787 = vpop.f32.mrb[0].mxu0
      %v1788 = vadd.f32 %v1627, %v1787
      %v1789 = vpop.f32.mrb[0].mxu0
      %v1790 = vpop.f32.mrb[0].mxu0
      %v1791 = vadd.f32 %v1630, %v1790
      %v1792 = vpop.f32.mrb[0].mxu0
      %1793 = vmatprep.mubr.bf16.mxu0 %v976
      %1794 = vmatmul.mubr.bf16.gmra.mrb[0].mxu0 %v975
      %v1795 = vpop.f32.mrb[0].mxu0
      %v1796 = vadd.f32 %v1635, %v1795
      %v1797 = vpop.f32.mrb[0].mxu0
      %v1798 = vpop.f32.mrb[0].mxu0
      %v1799 = vadd.f32 %v1638, %v1798
      %v1800 = vpop.f32.mrb[0].mxu0
      %1801 = vmatprep.mubr.bf16.mxu0 %v983
      %1802 = vmatmul.mubr.bf16.gmra.mrb[0].mxu0 %v982
      %v1803 = vpop.f32.mrb[0].mxu0
      %v1804 = vadd.f32 %v1643, %v1803
      %v1805 = vpop.f32.mrb[0].mxu0
      %v1806 = vpop.f32.mrb[0].mxu0
      %v1807 = vadd.f32 %v1646, %v1806
      %v1808 = vpop.f32.mrb[0].mxu0
      %1809 = vmatprep.mubr.bf16.mxu0 %v990
      %1810 = vmatmul.mubr.bf16.gmra.mrb[0].mxu0 %v989
      %v1811 = vpop.f32.mrb[0].mxu0
      %v1812 = vadd.f32 %v1651, %v1811
      %v1813 = vpop.f32.mrb[0].mxu0
      %v1814 = vpop.f32.mrb[0].mxu0
      %v1815 = vadd.f32 %v1654, %v1814
      %v1816 = vpop.f32.mrb[0].mxu0
      %1817 = vmatprep.mubr.bf16.mxu0 %v997
      %1818 = vmatmul.mubr.bf16.gmra.mrb[0].mxu0 %v996
      %v1819 = vpop.f32.mrb[0].mxu0
      %v1820 = vadd.f32 %v1659, %v1819
      %v1821 = vpop.f32.mrb[0].mxu0
      %v1822 = vpop.f32.mrb[0].mxu0
      %v1823 = vadd.f32 %v1662, %v1822
      %v1824 = vpop.f32.mrb[0].mxu0
      %1825 = vmatprep.mubr.bf16.mxu0 %v1004
      %1826 = vmatmul.mubr.bf16.gmra.mrb[0].mxu0 %v1003
      %v1827 = vpop.f32.mrb[0].mxu0
      %v1828 = vadd.f32 %v1667, %v1827
      %v1829 = vpop.f32.mrb[0].mxu0
      %v1830 = vpop.f32.mrb[0].mxu0
      %v1831 = vadd.f32 %v1670, %v1830
      %v1832 = vpop.f32.mrb[0].mxu0
      %1833 = vmatprep.mubr.bf16.mxu0 %v1011
      %1834 = vmatmul.mubr.bf16.gmra.mrb[0].mxu0 %v1010
      %v1835 = vpop.f32.mrb[0].mxu0
      %v1836 = vadd.f32 %v1675, %v1835
      %v1837 = vpop.f32.mrb[0].mxu0
      %v1838 = vpop.f32.mrb[0].mxu0
      %v1839 = vadd.f32 %v1678, %v1838
      %v1840 = vpop.f32.mrb[0].mxu0
      %1841 = vmatprep.mubr.bf16.mxu0 %v1018
      %1842 = vmatmul.mubr.bf16.gmra.mrb[0].mxu0 %v1017
      %v1843 = vpop.f32.mrb[0].mxu0
      %v1844 = vadd.f32 %v1683, %v1843
      %v1845 = vpop.f32.mrb[0].mxu0
      %v1846 = vpop.f32.mrb[0].mxu0
      %v1847 = vadd.f32 %v1686, %v1846
      %v1848 = vpop.f32.mrb[0].mxu0
      %1849 = vmatprep.mubr.bf16.mxu0 %v1025
      %1850 = vmatmul.mubr.bf16.gmra.mrb[0].mxu0 %v1024
      %v1851 = vpop.f32.mrb[0].mxu0
      %v1852 = vadd.f32 %v1691, %v1851
      %v1853 = vpop.f32.mrb[0].mxu0
      %v1854 = vpop.f32.mrb[0].mxu0
      %v1855 = vadd.f32 %v1694, %v1854
      %v1856 = vpop.f32.mrb[0].mxu0
      %1857 = vmatprep.mubr.bf16.mxu0 %v1032
      %1858 = vmatmul.mubr.bf16.gmra.mrb[0].mxu0 %v1031
      %v1859 = vpop.f32.mrb[0].mxu0
      %v1860 = vadd.f32 %v1699, %v1859
      %v1861 = vpop.f32.mrb[0].mxu0
      %v1862 = vpop.f32.mrb[0].mxu0
      %v1863 = vadd.f32 %v1702, %v1862
      %v1864 = vpop.f32.mrb[0].mxu0
      %1865 = vdwg.mxu0
      %1866 = vmatprep.subr.bf16.mxu0 0
      %1867 = vmatpush1.bf16.msra.mxu0 %v1284
      %1868 = vmatprep.subr.bf16.mxu0 0
      %1869 = vmatpush1.bf16.msra.mxu0 0
      %1870 = vmatprep.subr.bf16.mxu0 0
      %1871 = vmatpush1.bf16.msra.mxu0 0
      %1872 = vmatprep.subr.bf16.mxu0 0
      %1873 = vmatpush1.bf16.msra.mxu0 0
      %1874 = vmatprep.subr.bf16.mxu0 0
      %1875 = vmatpush1.bf16.msra.mxu0 0
      %1876 = vmatprep.subr.bf16.mxu0 0
      %1877 = vmatpush1.bf16.msra.mxu0 0
      %1878 = vmatprep.subr.bf16.mxu0 0
      %1879 = vmatpush1.bf16.msra.mxu0 0
      %1880 = vmatprep.subr.bf16.mxu0 0
      %1881 = vmatpush1.bf16.msra.mxu0 0
      %1882 = vmatprep.subr.bf16.mxu0 0
      %1883 = vmatpush1.bf16.msra.mxu0 0
      %1884 = vmatprep.subr.bf16.mxu0 0
      %1885 = vmatpush1.bf16.msra.mxu0 0
      %1886 = vmatprep.subr.bf16.mxu0 0
      %1887 = vmatpush1.bf16.msra.mxu0 0
      %1888 = vmatprep.subr.bf16.mxu0 0
      %1889 = vmatpush1.bf16.msra.mxu0 0
      %1890 = vmatprep.subr.bf16.mxu0 0
      %1891 = vmatpush1.bf16.msra.mxu0 0
      %1892 = vmatprep.subr.bf16.mxu0 0
      %1893 = vmatpush1.bf16.msra.mxu0 0
      %1894 = vmatprep.subr.bf16.mxu0 0
      %1895 = vmatpush1.bf16.msra.mxu0 0
      %1896 = vmatprep.subr.bf16.mxu0 0
      %1897 = vmatpush1.bf16.msra.mxu0 0
      %1898 = vmatprep.mubr.bf16.mxu0 0
      %1899 = vmatmul.mubr.bf16.gmra.mrb[0].mxu0 %v1336
      %v1900 = vpop.f32.mrb[0].mxu0
      %v1901 = vadd.f32 %v1740, %v1900
      %v1902 = vpop.f32.mrb[0].mxu0
      %v1903 = vpop.f32.mrb[0].mxu0
      %v1904 = vadd.f32 %v1743, %v1903
      %v1905 = vpop.f32.mrb[0].mxu0
      %1906 = vmatprep.mubr.bf16.mxu0 0
      %1907 = vmatmul.mubr.bf16.gmra.mrb[0].mxu0 %v1339
      %v1908 = vpop.f32.mrb[0].mxu0
      %v1909 = vadd.f32 %v1748, %v1908
      %v1910 = vpop.f32.mrb[0].mxu0
      %v1911 = vpop.f32.mrb[0].mxu0
      %v1912 = vadd.f32 %v1751, %v1911
      %v1913 = vpop.f32.mrb[0].mxu0
      %1914 = vmatprep.mubr.bf16.mxu0 0
      %1915 = vmatmul.mubr.bf16.gmra.mrb[0].mxu0 %v1342
      %v1916 = vpop.f32.mrb[0].mxu0
      %v1917 = vadd.f32 %v1756, %v1916
      %v1918 = vpop.f32.mrb[0].mxu0
      %v1919 = vpop.f32.mrb[0].mxu0
      %v1920 = vadd.f32 %v1759, %v1919
      %v1921 = vpop.f32.mrb[0].mxu0
      %1922 = vmatprep.mubr.bf16.mxu0 0
      %1923 = vmatmul.mubr.bf16.gmra.mrb[0].mxu0 %v1345
      %v1924 = vpop.f32.mrb[0].mxu0
      %v1925 = vadd.f32 %v1764, %v1924
      %v1926 = vpop.f32.mrb[0].mxu0
      %v1927 = vpop.f32.mrb[0].mxu0
      %v1928 = vadd.f32 %v1767, %v1927
      %v1929 = vpop.f32.mrb[0].mxu0
      %1930 = vmatprep.mubr.bf16.mxu0 0
      %1931 = vmatmul.mubr.bf16.gmra.mrb[0].mxu0 %v1348
      %v1932 = vpop.f32.mrb[0].mxu0
      %v1933 = vadd.f32 %v1772, %v1932
      %v1934 = vpop.f32.mrb[0].mxu0
      %v1935 = vpop.f32.mrb[0].mxu0
      %v1936 = vadd.f32 %v1775, %v1935
      %v1937 = vpop.f32.mrb[0].mxu0
      %1938 = vmatprep.mubr.bf16.mxu0 0
      %1939 = vmatmul.mubr.bf16.gmra.mrb[0].mxu0 %v1351
      %v1940 = vpop.f32.mrb[0].mxu0
      %v1941 = vadd.f32 %v1780, %v1940
      %v1942 = vpop.f32.mrb[0].mxu0
      %v1943 = vpop.f32.mrb[0].mxu0
      %v1944 = vadd.f32 %v1783, %v1943
      %v1945 = vpop.f32.mrb[0].mxu0
      %1946 = vmatprep.mubr.bf16.mxu0 0
      %1947 = vmatmul.mubr.bf16.gmra.mrb[0].mxu0 %v1354
      %v1948 = vpop.f32.mrb[0].mxu0
      %v1949 = vadd.f32 %v1788, %v1948
      %v1950 = vpop.f32.mrb[0].mxu0
      %v1951 = vpop.f32.mrb[0].mxu0
      %v1952 = vadd.f32 %v1791, %v1951
      %v1953 = vpop.f32.mrb[0].mxu0
      %1954 = vmatprep.mubr.bf16.mxu0 0
      %1955 = vmatmul.mubr.bf16.gmra.mrb[0].mxu0 %v1357
      %v1956 = vpop.f32.mrb[0].mxu0
      %v1957 = vadd.f32 %v1796, %v1956
      %v1958 = vpop.f32.mrb[0].mxu0
      %v1959 = vpop.f32.mrb[0].mxu0
      %v1960 = vadd.f32 %v1799, %v1959
      %v1961 = vpop.f32.mrb[0].mxu0
      %1962 = vmatprep.mubr.bf16.mxu0 0
      %1963 = vmatmul.mubr.bf16.gmra.mrb[0].mxu0 %v1360
      %v1964 = vpop.f32.mrb[0].mxu0
      %v1965 = vadd.f32 %v1804, %v1964
      %v1966 = vpop.f32.mrb[0].mxu0
      %v1967 = vpop.f32.mrb[0].mxu0
      %v1968 = vadd.f32 %v1807, %v1967
      %v1969 = vpop.f32.mrb[0].mxu0
      %1970 = vmatprep.mubr.bf16.mxu0 0
      %1971 = vmatmul.mubr.bf16.gmra.mrb[0].mxu0 %v1363
      %v1972 = vpop.f32.mrb[0].mxu0
      %v1973 = vadd.f32 %v1812, %v1972
      %v1974 = vpop.f32.mrb[0].mxu0
      %v1975 = vpop.f32.mrb[0].mxu0
      %v1976 = vadd.f32 %v1815, %v1975
      %v1977 = vpop.f32.mrb[0].mxu0
      %1978 = vmatprep.mubr.bf16.mxu0 0
      %1979 = vmatmul.mubr.bf16.gmra.mrb[0].mxu0 %v1366
      %v1980 = vpop.f32.mrb[0].mxu0
      %v1981 = vadd.f32 %v1820, %v1980
      %v1982 = vpop.f32.mrb[0].mxu0
      %v1983 = vpop.f32.mrb[0].mxu0
      %v1984 = vadd.f32 %v1823, %v1983
      %v1985 = vpop.f32.mrb[0].mxu0
      %1986 = vmatprep.mubr.bf16.mxu0 0
      %1987 = vmatmul.mubr.bf16.gmra.mrb[0].mxu0 %v1369
      %v1988 = vpop.f32.mrb[0].mxu0
      %v1989 = vadd.f32 %v1828, %v1988
      %v1990 = vpop.f32.mrb[0].mxu0
      %v1991 = vpop.f32.mrb[0].mxu0
      %v1992 = vadd.f32 %v1831, %v1991
      %v1993 = vpop.f32.mrb[0].mxu0
      %1994 = vmatprep.mubr.bf16.mxu0 0
      %1995 = vmatmul.mubr.bf16.gmra.mrb[0].mxu0 %v1372
      %v1996 = vpop.f32.mrb[0].mxu0
      %v1997 = vadd.f32 %v1836, %v1996
      %v1998 = vpop.f32.mrb[0].mxu0
      %v1999 = vpop.f32.mrb[0].mxu0
      %v2000 = vadd.f32 %v1839, %v1999
      %v2001 = vpop.f32.mrb[0].mxu0
      %2002 = vmatprep.mubr.bf16.mxu0 0
      %2003 = vmatmul.mubr.bf16.gmra.mrb[0].mxu0 %v1375
      %v2004 = vpop.f32.mrb[0].mxu0
      %v2005 = vadd.f32 %v1844, %v2004
      %v2006 = vpop.f32.mrb[0].mxu0
      %v2007 = vpop.f32.mrb[0].mxu0
      %v2008 = vadd.f32 %v1847, %v2007
      %v2009 = vpop.f32.mrb[0].mxu0
      %2010 = vmatprep.mubr.bf16.mxu0 0
      %2011 = vmatmul.mubr.bf16.gmra.mrb[0].mxu0 %v1378
      %v2012 = vpop.f32.mrb[0].mxu0
      %v2013 = vadd.f32 %v1852, %v2012
      %v2014 = vpop.f32.mrb[0].mxu0
      %v2015 = vpop.f32.mrb[0].mxu0
      %v2016 = vadd.f32 %v1855, %v2015
      %v2017 = vpop.f32.mrb[0].mxu0
      %2018 = vmatprep.mubr.bf16.mxu0 0
      %2019 = vmatmul.mubr.bf16.gmra.mrb[0].mxu0 %v1381
      %v2020 = vpop.f32.mrb[0].mxu0
      %v2021 = vadd.f32 %v1860, %v2020
      %v2022 = vpop.f32.mrb[0].mxu0
      %v2023 = vpop.f32.mrb[0].mxu0
      %v2024 = vadd.f32 %v1863, %v2023
      %v2025 = vpop.f32.mrb[0].mxu0
      %2026 = vdwg.mxu0
      %v2027 = vtanh.pop %v1901
      %v2028 = vtanh.pop %v1904
      %v2029 = vtanh.pop %v1909
      %v2030 = vtanh.pop %v1912
      %v2031 = vtanh.pop %v1917
      %v2032 = vtanh.pop %v1920
      %v2033 = vtanh.pop %v1925
      %v2034 = vtanh.pop %v1928
      %v2035 = vtanh.pop %v1933
      %v2036 = vtanh.pop %v1936
      %v2037 = vtanh.pop %v1941
      %v2038 = vtanh.pop %v1944
      %v2039 = vtanh.pop %v1949
      %v2040 = vtanh.pop %v1952
      %v2041 = vtanh.pop %v1957
      %v2042 = vtanh.pop %v1960
      %v2043 = vtanh.pop %v1965
      %v2044 = vtanh.pop %v1968
      %v2045 = vtanh.pop %v1973
      %v2046 = vtanh.pop %v1976
      %v2047 = vtanh.pop %v1981
      %v2048 = vtanh.pop %v1984
      %v2049 = vtanh.pop %v1989
      %v2050 = vtanh.pop %v1992
      %v2051 = vtanh.pop %v1997
      %v2052 = vtanh.pop %v2000
      %v2053 = vtanh.pop %v2005
      %v2054 = vtanh.pop %v2008
      %v2055 = vtanh.pop %v2013
      %v2056 = vtanh.pop %v2016
      %v2057 = vtanh.pop %v2021
      %v2058 = vtanh.pop %v2024
      %v2059 = vld [vmem:[%s3] sm:$0xf]
      %v2060 = vld [vmem:[%s3 + $0x4] sm:$0xf]
      %v2061 = vld [vmem:[%s3 + $0x8] sm:$0xf]
      %v2062 = vld [vmem:[%s3 + $0xc] sm:$0xf]
      %v2063 = vld [vmem:[%s3 + $0x10] sm:$0xf]
      %v2064 = vld [vmem:[%s3 + $0x14] sm:$0xf]
      %v2065 = vld [vmem:[%s3 + $0x18] sm:$0xf]
      %v2066 = vld [vmem:[%s3 + $0x1c] sm:$0xf]
      %v2067 = vld [vmem:[%s3 + $0x20] sm:$0xf]
      %v2068 = vld [vmem:[%s3 + $0x24] sm:$0xf]
      %v2069 = vld [vmem:[%s3 + $0x28] sm:$0xf]
      %v2070 = vld [vmem:[%s3 + $0x2c] sm:$0xf]
      %v2071 = vld [vmem:[%s3 + $0x30] sm:$0xf]
      %v2072 = vld [vmem:[%s3 + $0x34] sm:$0xf]
      %v2073 = vld [vmem:[%s3 + $0x38] sm:$0xf]
      %v2074 = vld [vmem:[%s3 + $0x3c] sm:$0xf]
      %v2075 = vld [vmem:[%s4] sm:$0x1]
      %v2076 = vpack.c.bf16 %v2028, %v2027
      %v2077 = vpack.c.bf16 %v2030, %v2029
      %v2078 = vpack.c.bf16 %v2032, %v2031
      %v2079 = vpack.c.bf16 %v2034, %v2033
      %v2080 = vpack.c.bf16 %v2036, %v2035
      %v2081 = vpack.c.bf16 %v2038, %v2037
      %v2082 = vpack.c.bf16 %v2040, %v2039
      %v2083 = vpack.c.bf16 %v2042, %v2041
      %v2084 = vpack.c.bf16 %v2044, %v2043
      %v2085 = vpack.c.bf16 %v2046, %v2045
      %v2086 = vpack.c.bf16 %v2048, %v2047
      %v2087 = vpack.c.bf16 %v2050, %v2049
      %v2088 = vpack.c.bf16 %v2052, %v2051
      %v2089 = vpack.c.bf16 %v2054, %v2053
      %v2090 = vpack.c.bf16 %v2056, %v2055
      %v2091 = vpack.c.bf16 %v2058, %v2057
      %v2093 = vlaneseq
      %v2094 = vshrl.u32 %v2093, 7
      %v2095 = vsub.s32 0, %v2094
      %v2096 = vrot.slane %v2075, %v2095
      %v2114 = vunpack.c.l.b16 %v2059
      %v2115 = vunpack.c.l.b16 %v2060
      %v2116 = vunpack.c.l.b16 %v2061
      %v2117 = vunpack.c.l.b16 %v2062
      %v2118 = vunpack.c.l.b16 %v2063
      %v2119 = vunpack.c.l.b16 %v2064
      %v2120 = vunpack.c.l.b16 %v2065
      %v2121 = vunpack.c.l.b16 %v2066
      %v2122 = vunpack.c.l.b16 %v2067
      %v2123 = vunpack.c.l.b16 %v2068
      %v2124 = vunpack.c.l.b16 %v2069
      %v2125 = vunpack.c.l.b16 %v2070
      %v2126 = vunpack.c.l.b16 %v2071
      %v2127 = vunpack.c.l.b16 %v2072
      %v2128 = vunpack.c.l.b16 %v2073
      %v2129 = vunpack.c.l.b16 %v2074
      %v2130 = vpack.c.b16 %v2115, %v2114
      %v2131 = vpack.c.b16 %v2117, %v2116
      %v2132 = vpack.c.b16 %v2119, %v2118
      %v2133 = vpack.c.b16 %v2121, %v2120
      %v2134 = vpack.c.b16 %v2123, %v2122
      %v2135 = vpack.c.b16 %v2125, %v2124
      %v2136 = vpack.c.b16 %v2127, %v2126
      %v2137 = vpack.c.b16 %v2129, %v2128
      %2146 = vmatprep.subr.bf16.mxu0 0
      %2147 = vmatpush1.bf16.msra.mxu0 %v2130
      %2148 = vmatprep.subr.bf16.mxu0 0
      %2149 = vmatpush1.bf16.msra.mxu0 %v2131
      %2150 = vmatprep.subr.bf16.mxu0 0
      %2151 = vmatpush1.bf16.msra.mxu0 %v2132
      %2152 = vmatprep.subr.bf16.mxu0 0
      %2153 = vmatpush1.bf16.msra.mxu0 %v2133
      %2154 = vmatprep.subr.bf16.mxu0 0
      %2155 = vmatpush1.bf16.msra.mxu0 %v2134
      %2156 = vmatprep.subr.bf16.mxu0 0
      %2157 = vmatpush1.bf16.msra.mxu0 %v2135
      %2158 = vmatprep.subr.bf16.mxu0 0
      %2159 = vmatpush1.bf16.msra.mxu0 %v2136
      %2160 = vmatprep.subr.bf16.mxu0 0
      %2161 = vmatpush1.bf16.msra.mxu0 %v2137
      %2162 = vmatprep.subr.bf16.mxu0 0
      %2163 = vmatpush1.bf16.msra.mxu0 0
      %2164 = vmatprep.subr.bf16.mxu0 0
      %2165 = vmatpush1.bf16.msra.mxu0 0
      %2166 = vmatprep.subr.bf16.mxu0 0
      %2167 = vmatpush1.bf16.msra.mxu0 0
      %2168 = vmatprep.subr.bf16.mxu0 0
      %2169 = vmatpush1.bf16.msra.mxu0 0
      %2170 = vmatprep.subr.bf16.mxu0 0
      %2171 = vmatpush1.bf16.msra.mxu0 0
      %2172 = vmatprep.subr.bf16.mxu0 0
      %2173 = vmatpush1.bf16.msra.mxu0 0
      %2174 = vmatprep.subr.bf16.mxu0 0
      %2175 = vmatpush1.bf16.msra.mxu0 0
      %2176 = vmatprep.subr.bf16.mxu0 0
      %2177 = vmatpush1.bf16.msra.mxu0 0
      %2178 = vmatprep.mubr.bf16.mxu0 0
      %2179 = vmatmul.mubr.bf16.gmra.mrb[0].mxu0 %v2076
      %v2180 = vpop.f32.mrb[0].mxu0
      %v2181 = vadd.f32 %v2096, %v2180
      %v2182 = vpop.f32.mrb[0].mxu0
      %v2183 = vpop.f32.mrb[0].mxu0
      %v2184 = vadd.f32 %v2096, %v2183
      %v2185 = vpop.f32.mrb[0].mxu0
      %2186 = vmatprep.mubr.bf16.mxu0 0
      %2187 = vmatmul.mubr.bf16.gmra.mrb[0].mxu0 %v2077
      %v2188 = vpop.f32.mrb[0].mxu0
      %v2189 = vadd.f32 %v2096, %v2188
      %v2190 = vpop.f32.mrb[0].mxu0
      %v2191 = vpop.f32.mrb[0].mxu0
      %v2192 = vadd.f32 %v2096, %v2191
      %v2193 = vpop.f32.mrb[0].mxu0
      %2194 = vmatprep.mubr.bf16.mxu0 0
      %2195 = vmatmul.mubr.bf16.gmra.mrb[0].mxu0 %v2078
      %v2196 = vpop.f32.mrb[0].mxu0
      %v2197 = vadd.f32 %v2096, %v2196
      %v2198 = vpop.f32.mrb[0].mxu0
      %v2199 = vpop.f32.mrb[0].mxu0
      %v2200 = vadd.f32 %v2096, %v2199
      %v2201 = vpop.f32.mrb[0].mxu0
      %2202 = vmatprep.mubr.bf16.mxu0 0
      %2203 = vmatmul.mubr.bf16.gmra.mrb[0].mxu0 %v2079
      %v2204 = vpop.f32.mrb[0].mxu0
      %v2205 = vadd.f32 %v2096, %v2204
      %v2206 = vpop.f32.mrb[0].mxu0
      %v2207 = vpop.f32.mrb[0].mxu0
      %v2208 = vadd.f32 %v2096, %v2207
      %v2209 = vpop.f32.mrb[0].mxu0
      %2210 = vmatprep.mubr.bf16.mxu0 0
      %2211 = vmatmul.mubr.bf16.gmra.mrb[0].mxu0 %v2080
      %v2212 = vpop.f32.mrb[0].mxu0
      %v2213 = vadd.f32 %v2096, %v2212
      %v2214 = vpop.f32.mrb[0].mxu0
      %v2215 = vpop.f32.mrb[0].mxu0
      %v2216 = vadd.f32 %v2096, %v2215
      %v2217 = vpop.f32.mrb[0].mxu0
      %2218 = vmatprep.mubr.bf16.mxu0 0
      %2219 = vmatmul.mubr.bf16.gmra.mrb[0].mxu0 %v2081
      %v2220 = vpop.f32.mrb[0].mxu0
      %v2221 = vadd.f32 %v2096, %v2220
      %v2222 = vpop.f32.mrb[0].mxu0
      %v2223 = vpop.f32.mrb[0].mxu0
      %v2224 = vadd.f32 %v2096, %v2223
      %v2225 = vpop.f32.mrb[0].mxu0
      %2226 = vmatprep.mubr.bf16.mxu0 0
      %2227 = vmatmul.mubr.bf16.gmra.mrb[0].mxu0 %v2082
      %v2228 = vpop.f32.mrb[0].mxu0
      %v2229 = vadd.f32 %v2096, %v2228
      %v2230 = vpop.f32.mrb[0].mxu0
      %v2231 = vpop.f32.mrb[0].mxu0
      %v2232 = vadd.f32 %v2096, %v2231
      %v2233 = vpop.f32.mrb[0].mxu0
      %2234 = vmatprep.mubr.bf16.mxu0 0
      %2235 = vmatmul.mubr.bf16.gmra.mrb[0].mxu0 %v2083
      %v2236 = vpop.f32.mrb[0].mxu0
      %v2237 = vadd.f32 %v2096, %v2236
      %v2238 = vpop.f32.mrb[0].mxu0
      %v2239 = vpop.f32.mrb[0].mxu0
      %v2240 = vadd.f32 %v2096, %v2239
      %v2241 = vpop.f32.mrb[0].mxu0
      %2242 = vmatprep.mubr.bf16.mxu0 0
      %2243 = vmatmul.mubr.bf16.gmra.mrb[0].mxu0 %v2084
      %v2244 = vpop.f32.mrb[0].mxu0
      %v2245 = vadd.f32 %v2096, %v2244
      %v2246 = vpop.f32.mrb[0].mxu0
      %v2247 = vpop.f32.mrb[0].mxu0
      %v2248 = vadd.f32 %v2096, %v2247
      %v2249 = vpop.f32.mrb[0].mxu0
      %2250 = vmatprep.mubr.bf16.mxu0 0
      %2251 = vmatmul.mubr.bf16.gmra.mrb[0].mxu0 %v2085
      %v2252 = vpop.f32.mrb[0].mxu0
      %v2253 = vadd.f32 %v2096, %v2252
      %v2254 = vpop.f32.mrb[0].mxu0
      %v2255 = vpop.f32.mrb[0].mxu0
      %v2256 = vadd.f32 %v2096, %v2255
      %v2257 = vpop.f32.mrb[0].mxu0
      %2258 = vmatprep.mubr.bf16.mxu0 0
      %2259 = vmatmul.mubr.bf16.gmra.mrb[0].mxu0 %v2086
      %v2260 = vpop.f32.mrb[0].mxu0
      %v2261 = vadd.f32 %v2096, %v2260
      %v2262 = vpop.f32.mrb[0].mxu0
      %v2263 = vpop.f32.mrb[0].mxu0
      %v2264 = vadd.f32 %v2096, %v2263
      %v2265 = vpop.f32.mrb[0].mxu0
      %2266 = vmatprep.mubr.bf16.mxu0 0
      %2267 = vmatmul.mubr.bf16.gmra.mrb[0].mxu0 %v2087
      %v2268 = vpop.f32.mrb[0].mxu0
      %v2269 = vadd.f32 %v2096, %v2268
      %v2270 = vpop.f32.mrb[0].mxu0
      %v2271 = vpop.f32.mrb[0].mxu0
      %v2272 = vadd.f32 %v2096, %v2271
      %v2273 = vpop.f32.mrb[0].mxu0
      %2274 = vmatprep.mubr.bf16.mxu0 0
      %2275 = vmatmul.mubr.bf16.gmra.mrb[0].mxu0 %v2088
      %v2276 = vpop.f32.mrb[0].mxu0
      %v2277 = vadd.f32 %v2096, %v2276
      %v2278 = vpop.f32.mrb[0].mxu0
      %v2279 = vpop.f32.mrb[0].mxu0
      %v2280 = vadd.f32 %v2096, %v2279
      %v2281 = vpop.f32.mrb[0].mxu0
      %2282 = vmatprep.mubr.bf16.mxu0 0
      %2283 = vmatmul.mubr.bf16.gmra.mrb[0].mxu0 %v2089
      %v2284 = vpop.f32.mrb[0].mxu0
      %v2285 = vadd.f32 %v2096, %v2284
      %v2286 = vpop.f32.mrb[0].mxu0
      %v2287 = vpop.f32.mrb[0].mxu0
      %v2288 = vadd.f32 %v2096, %v2287
      %v2289 = vpop.f32.mrb[0].mxu0
      %2290 = vmatprep.mubr.bf16.mxu0 0
      %2291 = vmatmul.mubr.bf16.gmra.mrb[0].mxu0 %v2090
      %v2292 = vpop.f32.mrb[0].mxu0
      %v2293 = vadd.f32 %v2096, %v2292
      %v2294 = vpop.f32.mrb[0].mxu0
      %v2295 = vpop.f32.mrb[0].mxu0
      %v2296 = vadd.f32 %v2096, %v2295
      %v2297 = vpop.f32.mrb[0].mxu0
      %2298 = vmatprep.mubr.bf16.mxu0 0
      %2299 = vmatmul.mubr.bf16.gmra.mrb[0].mxu0 %v2091
      %v2300 = vpop.f32.mrb[0].mxu0
      %v2301 = vadd.f32 %v2096, %v2300
      %v2302 = vpop.f32.mrb[0].mxu0
      %v2303 = vpop.f32.mrb[0].mxu0
      %v2304 = vadd.f32 %v2096, %v2303
      %v2305 = vpop.f32.mrb[0].mxu0
      %2306 = vdwg.mxu0
      %v2307 = vtanh.pop %v2181
      %v2308 = vtanh.pop %v2184
      %v2309 = vtanh.pop %v2189
      %v2310 = vtanh.pop %v2192
      %v2311 = vtanh.pop %v2197
      %v2312 = vtanh.pop %v2200
      %v2313 = vtanh.pop %v2205
      %v2314 = vtanh.pop %v2208
      %v2315 = vtanh.pop %v2213
      %v2316 = vtanh.pop %v2216
      %v2317 = vtanh.pop %v2221
      %v2318 = vtanh.pop %v2224
      %v2319 = vtanh.pop %v2229
      %v2320 = vtanh.pop %v2232
      %v2321 = vtanh.pop %v2237
      %v2322 = vtanh.pop %v2240
      %v2323 = vtanh.pop %v2245
      %v2324 = vtanh.pop %v2248
      %v2325 = vtanh.pop %v2253
      %v2326 = vtanh.pop %v2256
      %v2327 = vtanh.pop %v2261
      %v2328 = vtanh.pop %v2264
      %v2329 = vtanh.pop %v2269
      %v2330 = vtanh.pop %v2272
      %v2331 = vtanh.pop %v2277
      %v2332 = vtanh.pop %v2280
      %v2333 = vtanh.pop %v2285
      %v2334 = vtanh.pop %v2288
      %v2335 = vtanh.pop %v2293
      %v2336 = vtanh.pop %v2296
      %v2337 = vtanh.pop %v2301
      %v2338 = vtanh.pop %v2304
      %v2339 = vld [vmem:[%s5] sm:$0xf]
      %v2340 = vld [vmem:[%s5 + $0x4] sm:$0xf]
      %v2341 = vld [vmem:[%s5 + $0x8] sm:$0xf]
      %v2342 = vld [vmem:[%s5 + $0xc] sm:$0xf]
      %v2343 = vld [vmem:[%s5 + $0x10] sm:$0xf]
      %v2344 = vld [vmem:[%s5 + $0x14] sm:$0xf]
      %v2345 = vld [vmem:[%s5 + $0x18] sm:$0xf]
      %v2346 = vld [vmem:[%s5 + $0x1c] sm:$0xf]
      %v2347 = vld [vmem:[%s6] sm:$0x1]
      %v2348 = vpack.c.bf16 %v2308, %v2307
      %v2349 = vpack.c.bf16 %v2310, %v2309
      %v2350 = vpack.c.bf16 %v2312, %v2311
      %v2351 = vpack.c.bf16 %v2314, %v2313
      %v2352 = vpack.c.bf16 %v2316, %v2315
      %v2353 = vpack.c.bf16 %v2318, %v2317
      %v2354 = vpack.c.bf16 %v2320, %v2319
      %v2355 = vpack.c.bf16 %v2322, %v2321
      %v2356 = vpack.c.bf16 %v2324, %v2323
      %v2357 = vpack.c.bf16 %v2326, %v2325
      %v2358 = vpack.c.bf16 %v2328, %v2327
      %v2359 = vpack.c.bf16 %v2330, %v2329
      %v2360 = vpack.c.bf16 %v2332, %v2331
      %v2361 = vpack.c.bf16 %v2334, %v2333
      %v2362 = vpack.c.bf16 %v2336, %v2335
      %v2363 = vpack.c.bf16 %v2338, %v2337
      %v2365 = vlaneseq
      %v2366 = vshrl.u32 %v2365, 7
      %v2367 = vsub.s32 0, %v2366
      %v2368 = vrot.slane %v2347, %v2367
      %v2378 = vunpack.c.l.b16 %v2339
      %v2379 = vunpack.c.l.b16 %v2340
      %v2380 = vunpack.c.l.b16 %v2341
      %v2381 = vunpack.c.l.b16 %v2342
      %v2382 = vunpack.c.l.b16 %v2343
      %v2383 = vunpack.c.l.b16 %v2344
      %v2384 = vunpack.c.l.b16 %v2345
      %v2385 = vunpack.c.l.b16 %v2346
      %v2386 = vpack.c.b16 %v2379, %v2378
      %v2387 = vpack.c.b16 %v2381, %v2380
      %v2388 = vpack.c.b16 %v2383, %v2382
      %v2389 = vpack.c.b16 %v2385, %v2384
      %vm2394 = vcmask 523264
      %v2396 = vsel %vm2394, %v2348, 0
      %v2399 = vsel %vm2394, %v2349, 0
      %v2402 = vsel %vm2394, %v2350, 0
      %v2405 = vsel %vm2394, %v2351, 0
      %v2408 = vsel %vm2394, %v2352, 0
      %v2411 = vsel %vm2394, %v2353, 0
      %v2414 = vsel %vm2394, %v2354, 0
      %v2417 = vsel %vm2394, %v2355, 0
      %v2420 = vsel %vm2394, %v2356, 0
      %v2423 = vsel %vm2394, %v2357, 0
      %v2426 = vsel %vm2394, %v2358, 0
      %v2429 = vsel %vm2394, %v2359, 0
      %v2432 = vsel %vm2394, %v2360, 0
      %v2435 = vsel %vm2394, %v2361, 0
      %v2438 = vsel %vm2394, %v2362, 0
      %v2441 = vsel %vm2394, %v2363, 0
      %2443 = vmatprep.subr.bf16.mxu0 0
      %2444 = vmatpush1.bf16.msra.mxu0 %v2386
      %2445 = vmatprep.subr.bf16.mxu0 0
      %2446 = vmatpush1.bf16.msra.mxu0 %v2387
      %2447 = vmatprep.subr.bf16.mxu0 0
      %2448 = vmatpush1.bf16.msra.mxu0 %v2388
      %2449 = vmatprep.subr.bf16.mxu0 0
      %2450 = vmatpush1.bf16.msra.mxu0 %v2389
      %2451 = vmatprep.subr.bf16.mxu0 0
      %2452 = vmatpush1.bf16.msra.mxu0 0
      %2453 = vmatprep.subr.bf16.mxu0 0
      %2454 = vmatpush1.bf16.msra.mxu0 0
      %2455 = vmatprep.subr.bf16.mxu0 0
      %2456 = vmatpush1.bf16.msra.mxu0 0
      %2457 = vmatprep.subr.bf16.mxu0 0
      %2458 = vmatpush1.bf16.msra.mxu0 0
      %2459 = vmatprep.subr.bf16.mxu0 0
      %2460 = vmatpush1.bf16.msra.mxu0 0
      %2461 = vmatprep.subr.bf16.mxu0 0
      %2462 = vmatpush1.bf16.msra.mxu0 0
      %2463 = vmatprep.subr.bf16.mxu0 0
      %2464 = vmatpush1.bf16.msra.mxu0 0
      %2465 = vmatprep.subr.bf16.mxu0 0
      %2466 = vmatpush1.bf16.msra.mxu0 0
      %2467 = vmatprep.subr.bf16.mxu0 0
      %2468 = vmatpush1.bf16.msra.mxu0 0
      %2469 = vmatprep.subr.bf16.mxu0 0
      %2470 = vmatpush1.bf16.msra.mxu0 0
      %2471 = vmatprep.subr.bf16.mxu0 0
      %2472 = vmatpush1.bf16.msra.mxu0 0
      %2473 = vmatprep.subr.bf16.mxu0 0
      %2474 = vmatpush1.bf16.msra.mxu0 0
      %2475 = vmatprep.mubr.bf16.mxu0 0
      %2476 = vmatmul.mubr.bf16.gmra.mrb[0].mxu0 %v2396
      %v2477 = vpop.f32.mrb[0].mxu0
      %v2478 = vadd.f32 %v2368, %v2477
      %v2479 = vpop.f32.mrb[0].mxu0
      %v2480 = vpop.f32.mrb[0].mxu0
      %v2481 = vadd.f32 %v2368, %v2480
      %v2482 = vpop.f32.mrb[0].mxu0
      %2483 = vmatprep.mubr.bf16.mxu0 0
      %2484 = vmatmul.mubr.bf16.gmra.mrb[0].mxu0 %v2399
      %v2485 = vpop.f32.mrb[0].mxu0
      %v2486 = vadd.f32 %v2368, %v2485
      %v2487 = vpop.f32.mrb[0].mxu0
      %v2488 = vpop.f32.mrb[0].mxu0
      %v2489 = vadd.f32 %v2368, %v2488
      %v2490 = vpop.f32.mrb[0].mxu0
      %2491 = vmatprep.mubr.bf16.mxu0 0
      %2492 = vmatmul.mubr.bf16.gmra.mrb[0].mxu0 %v2402
      %v2493 = vpop.f32.mrb[0].mxu0
      %v2494 = vadd.f32 %v2368, %v2493
      %v2495 = vpop.f32.mrb[0].mxu0
      %v2496 = vpop.f32.mrb[0].mxu0
      %v2497 = vadd.f32 %v2368, %v2496
      %v2498 = vpop.f32.mrb[0].mxu0
      %2499 = vmatprep.mubr.bf16.mxu0 0
      %2500 = vmatmul.mubr.bf16.gmra.mrb[0].mxu0 %v2405
      %v2501 = vpop.f32.mrb[0].mxu0
      %v2502 = vadd.f32 %v2368, %v2501
      %v2503 = vpop.f32.mrb[0].mxu0
      %v2504 = vpop.f32.mrb[0].mxu0
      %v2505 = vadd.f32 %v2368, %v2504
      %v2506 = vpop.f32.mrb[0].mxu0
      %2507 = vmatprep.mubr.bf16.mxu0 0
      %2508 = vmatmul.mubr.bf16.gmra.mrb[0].mxu0 %v2408
      %v2509 = vpop.f32.mrb[0].mxu0
      %v2510 = vadd.f32 %v2368, %v2509
      %v2511 = vpop.f32.mrb[0].mxu0
      %v2512 = vpop.f32.mrb[0].mxu0
      %v2513 = vadd.f32 %v2368, %v2512
      %v2514 = vpop.f32.mrb[0].mxu0
      %2515 = vmatprep.mubr.bf16.mxu0 0
      %2516 = vmatmul.mubr.bf16.gmra.mrb[0].mxu0 %v2411
      %v2517 = vpop.f32.mrb[0].mxu0
      %v2518 = vadd.f32 %v2368, %v2517
      %v2519 = vpop.f32.mrb[0].mxu0
      %v2520 = vpop.f32.mrb[0].mxu0
      %v2521 = vadd.f32 %v2368, %v2520
      %v2522 = vpop.f32.mrb[0].mxu0
      %2523 = vmatprep.mubr.bf16.mxu0 0
      %2524 = vmatmul.mubr.bf16.gmra.mrb[0].mxu0 %v2414
      %v2525 = vpop.f32.mrb[0].mxu0
      %v2526 = vadd.f32 %v2368, %v2525
      %v2527 = vpop.f32.mrb[0].mxu0
      %v2528 = vpop.f32.mrb[0].mxu0
      %v2529 = vadd.f32 %v2368, %v2528
      %v2530 = vpop.f32.mrb[0].mxu0
      %2531 = vmatprep.mubr.bf16.mxu0 0
      %2532 = vmatmul.mubr.bf16.gmra.mrb[0].mxu0 %v2417
      %v2533 = vpop.f32.mrb[0].mxu0
      %v2534 = vadd.f32 %v2368, %v2533
      %v2535 = vpop.f32.mrb[0].mxu0
      %v2536 = vpop.f32.mrb[0].mxu0
      %v2537 = vadd.f32 %v2368, %v2536
      %v2538 = vpop.f32.mrb[0].mxu0
      %2539 = vmatprep.mubr.bf16.mxu0 0
      %2540 = vmatmul.mubr.bf16.gmra.mrb[0].mxu0 %v2420
      %v2541 = vpop.f32.mrb[0].mxu0
      %v2542 = vadd.f32 %v2368, %v2541
      %v2543 = vpop.f32.mrb[0].mxu0
      %v2544 = vpop.f32.mrb[0].mxu0
      %v2545 = vadd.f32 %v2368, %v2544
      %v2546 = vpop.f32.mrb[0].mxu0
      %2547 = vmatprep.mubr.bf16.mxu0 0
      %2548 = vmatmul.mubr.bf16.gmra.mrb[0].mxu0 %v2423
      %v2549 = vpop.f32.mrb[0].mxu0
      %v2550 = vadd.f32 %v2368, %v2549
      %v2551 = vpop.f32.mrb[0].mxu0
      %v2552 = vpop.f32.mrb[0].mxu0
      %v2553 = vadd.f32 %v2368, %v2552
      %v2554 = vpop.f32.mrb[0].mxu0
      %2555 = vmatprep.mubr.bf16.mxu0 0
      %2556 = vmatmul.mubr.bf16.gmra.mrb[0].mxu0 %v2426
      %v2557 = vpop.f32.mrb[0].mxu0
      %v2558 = vadd.f32 %v2368, %v2557
      %v2559 = vpop.f32.mrb[0].mxu0
      %v2560 = vpop.f32.mrb[0].mxu0
      %v2561 = vadd.f32 %v2368, %v2560
      %v2562 = vpop.f32.mrb[0].mxu0
      %2563 = vmatprep.mubr.bf16.mxu0 0
      %2564 = vmatmul.mubr.bf16.gmra.mrb[0].mxu0 %v2429
      %v2565 = vpop.f32.mrb[0].mxu0
      %v2566 = vadd.f32 %v2368, %v2565
      %v2567 = vpop.f32.mrb[0].mxu0
      %v2568 = vpop.f32.mrb[0].mxu0
      %v2569 = vadd.f32 %v2368, %v2568
      %v2570 = vpop.f32.mrb[0].mxu0
      %2571 = vmatprep.mubr.bf16.mxu0 0
      %2572 = vmatmul.mubr.bf16.gmra.mrb[0].mxu0 %v2432
      %v2573 = vpop.f32.mrb[0].mxu0
      %v2574 = vadd.f32 %v2368, %v2573
      %v2575 = vpop.f32.mrb[0].mxu0
      %v2576 = vpop.f32.mrb[0].mxu0
      %v2577 = vadd.f32 %v2368, %v2576
      %v2578 = vpop.f32.mrb[0].mxu0
      %2579 = vmatprep.mubr.bf16.mxu0 0
      %2580 = vmatmul.mubr.bf16.gmra.mrb[0].mxu0 %v2435
      %v2581 = vpop.f32.mrb[0].mxu0
      %v2582 = vadd.f32 %v2368, %v2581
      %v2583 = vpop.f32.mrb[0].mxu0
      %v2584 = vpop.f32.mrb[0].mxu0
      %v2585 = vadd.f32 %v2368, %v2584
      %v2586 = vpop.f32.mrb[0].mxu0
      %2587 = vmatprep.mubr.bf16.mxu0 0
      %2588 = vmatmul.mubr.bf16.gmra.mrb[0].mxu0 %v2438
      %v2589 = vpop.f32.mrb[0].mxu0
      %v2590 = vadd.f32 %v2368, %v2589
      %v2591 = vpop.f32.mrb[0].mxu0
      %v2592 = vpop.f32.mrb[0].mxu0
      %v2593 = vadd.f32 %v2368, %v2592
      %v2594 = vpop.f32.mrb[0].mxu0
      %2595 = vmatprep.mubr.bf16.mxu0 0
      %2596 = vmatmul.mubr.bf16.gmra.mrb[0].mxu0 %v2441
      %v2597 = vpop.f32.mrb[0].mxu0
      %v2598 = vadd.f32 %v2368, %v2597
      %v2599 = vpop.f32.mrb[0].mxu0
      %v2600 = vpop.f32.mrb[0].mxu0
      %v2601 = vadd.f32 %v2368, %v2600
      %v2602 = vpop.f32.mrb[0].mxu0
      %2603 = vdwg.mxu0
      %v2604 = vtanh.pop %v2478
      %v2605 = vtanh.pop %v2481
      %v2606 = vtanh.pop %v2486
      %v2607 = vtanh.pop %v2489
      %v2608 = vtanh.pop %v2494
      %v2609 = vtanh.pop %v2497
      %v2610 = vtanh.pop %v2502
      %v2611 = vtanh.pop %v2505
      %v2612 = vtanh.pop %v2510
      %v2613 = vtanh.pop %v2513
      %v2614 = vtanh.pop %v2518
      %v2615 = vtanh.pop %v2521
      %v2616 = vtanh.pop %v2526
      %v2617 = vtanh.pop %v2529
      %v2618 = vtanh.pop %v2534
      %v2619 = vtanh.pop %v2537
      %v2620 = vtanh.pop %v2542
      %v2621 = vtanh.pop %v2545
      %v2622 = vtanh.pop %v2550
      %v2623 = vtanh.pop %v2553
      %v2624 = vtanh.pop %v2558
      %v2625 = vtanh.pop %v2561
      %v2626 = vtanh.pop %v2566
      %v2627 = vtanh.pop %v2569
      %v2628 = vtanh.pop %v2574
      %v2629 = vtanh.pop %v2577
      %v2630 = vtanh.pop %v2582
      %v2631 = vtanh.pop %v2585
      %v2632 = vtanh.pop %v2590
      %v2633 = vtanh.pop %v2593
      %v2634 = vtanh.pop %v2598
      %v2635 = vtanh.pop %v2601
      %v2636 = vld [vmem:[%s7] sm:$0xf]
      %v2637 = vld [vmem:[%s7 + $0x4] sm:$0x3]
      %v2638 = vld [vmem:[%s8] sm:$0x1]
      %v2639 = vpack.c.bf16 %v2605, %v2604
      %v2640 = vpack.c.bf16 %v2607, %v2606
      %v2641 = vpack.c.bf16 %v2609, %v2608
      %v2642 = vpack.c.bf16 %v2611, %v2610
      %v2643 = vpack.c.bf16 %v2613, %v2612
      %v2644 = vpack.c.bf16 %v2615, %v2614
      %v2645 = vpack.c.bf16 %v2617, %v2616
      %v2646 = vpack.c.bf16 %v2619, %v2618
      %v2647 = vpack.c.bf16 %v2621, %v2620
      %v2648 = vpack.c.bf16 %v2623, %v2622
      %v2649 = vpack.c.bf16 %v2625, %v2624
      %v2650 = vpack.c.bf16 %v2627, %v2626
      %v2651 = vpack.c.bf16 %v2629, %v2628
      %v2652 = vpack.c.bf16 %v2631, %v2630
      %v2653 = vpack.c.bf16 %v2633, %v2632
      %v2654 = vpack.c.bf16 %v2635, %v2634
      %v2656 = vlaneseq
      %v2657 = vshrl.u32 %v2656, 7
      %v2658 = vsub.s32 0, %v2657
      %v2659 = vrot.slane %v2638, %v2658
      %v2663 = vunpack.c.l.b16 %v2636
      %v2664 = vunpack.c.l.b16 %v2637
      %v2665 = vpack.c.b16 %v2664, %v2663
      %vm2666 = vcmask 97280
      %v2668 = vsel %vm2666, %v2639, 0
      %v2671 = vsel %vm2666, %v2640, 0
      %v2674 = vsel %vm2666, %v2641, 0
      %v2677 = vsel %vm2666, %v2642, 0
      %v2680 = vsel %vm2666, %v2643, 0
      %v2683 = vsel %vm2666, %v2644, 0
      %v2686 = vsel %vm2666, %v2645, 0
      %v2689 = vsel %vm2666, %v2646, 0
      %v2692 = vsel %vm2666, %v2647, 0
      %v2695 = vsel %vm2666, %v2648, 0
      %v2698 = vsel %vm2666, %v2649, 0
      %v2701 = vsel %vm2666, %v2650, 0
      %v2704 = vsel %vm2666, %v2651, 0
      %v2707 = vsel %vm2666, %v2652, 0
      %v2710 = vsel %vm2666, %v2653, 0
      %v2713 = vsel %vm2666, %v2654, 0
      %vm2715 = vcmask 1045504
      %v2717 = vsel %vm2715, %v2665, 0
      %2719 = vmatprep.subr.bf16.mxu0 0
      %2720 = vmatpush1.bf16.msra.mxu0 %v2717
      %2721 = vmatprep.subr.bf16.mxu0 0
      %2722 = vmatpush1.bf16.msra.mxu0 0
      %2723 = vmatprep.subr.bf16.mxu0 0
      %2724 = vmatpush1.bf16.msra.mxu0 0
      %2725 = vmatprep.subr.bf16.mxu0 0
      %2726 = vmatpush1.bf16.msra.mxu0 0
      %2727 = vmatprep.subr.bf16.mxu0 0
      %2728 = vmatpush1.bf16.msra.mxu0 0
      %2729 = vmatprep.subr.bf16.mxu0 0
      %2730 = vmatpush1.bf16.msra.mxu0 0
      %2731 = vmatprep.subr.bf16.mxu0 0
      %2732 = vmatpush1.bf16.msra.mxu0 0
      %2733 = vmatprep.subr.bf16.mxu0 0
      %2734 = vmatpush1.bf16.msra.mxu0 0
      %2735 = vmatprep.subr.bf16.mxu0 0
      %2736 = vmatpush1.bf16.msra.mxu0 0
      %2737 = vmatprep.subr.bf16.mxu0 0
      %2738 = vmatpush1.bf16.msra.mxu0 0
      %2739 = vmatprep.subr.bf16.mxu0 0
      %2740 = vmatpush1.bf16.msra.mxu0 0
      %2741 = vmatprep.subr.bf16.mxu0 0
      %2742 = vmatpush1.bf16.msra.mxu0 0
      %2743 = vmatprep.subr.bf16.mxu0 0
      %2744 = vmatpush1.bf16.msra.mxu0 0
      %2745 = vmatprep.subr.bf16.mxu0 0
      %2746 = vmatpush1.bf16.msra.mxu0 0
      %2747 = vmatprep.subr.bf16.mxu0 0
      %2748 = vmatpush1.bf16.msra.mxu0 0
      %2749 = vmatprep.subr.bf16.mxu0 0
      %2750 = vmatpush1.bf16.msra.mxu0 0
      %2751 = vmatprep.mubr.bf16.mxu0 0
      %2752 = vmatmul.mubr.bf16.gmra.mrb[0].mxu0 %v2668
      %v2753 = vpop.f32.mrb[0].mxu0
      %v2754 = vadd.f32 %v2659, %v2753
      %v2755 = vpop.f32.mrb[0].mxu0
      %v2756 = vpop.f32.mrb[0].mxu0
      %v2757 = vadd.f32 %v2659, %v2756
      %v2758 = vpop.f32.mrb[0].mxu0
      %2759 = vmatprep.mubr.bf16.mxu0 0
      %2760 = vmatmul.mubr.bf16.gmra.mrb[0].mxu0 %v2671
      %v2761 = vpop.f32.mrb[0].mxu0
      %v2762 = vadd.f32 %v2659, %v2761
      %v2763 = vpop.f32.mrb[0].mxu0
      %v2764 = vpop.f32.mrb[0].mxu0
      %v2765 = vadd.f32 %v2659, %v2764
      %v2766 = vpop.f32.mrb[0].mxu0
      %2767 = vmatprep.mubr.bf16.mxu0 0
      %2768 = vmatmul.mubr.bf16.gmra.mrb[0].mxu0 %v2674
      %v2769 = vpop.f32.mrb[0].mxu0
      %v2770 = vadd.f32 %v2659, %v2769
      %v2771 = vpop.f32.mrb[0].mxu0
      %v2772 = vpop.f32.mrb[0].mxu0
      %v2773 = vadd.f32 %v2659, %v2772
      %v2774 = vpop.f32.mrb[0].mxu0
      %2775 = vmatprep.mubr.bf16.mxu0 0
      %2776 = vmatmul.mubr.bf16.gmra.mrb[0].mxu0 %v2677
      %v2777 = vpop.f32.mrb[0].mxu0
      %v2778 = vadd.f32 %v2659, %v2777
      %v2779 = vpop.f32.mrb[0].mxu0
      %v2780 = vpop.f32.mrb[0].mxu0
      %v2781 = vadd.f32 %v2659, %v2780
      %v2782 = vpop.f32.mrb[0].mxu0
      %2783 = vmatprep.mubr.bf16.mxu0 0
      %2784 = vmatmul.mubr.bf16.gmra.mrb[0].mxu0 %v2680
      %v2785 = vpop.f32.mrb[0].mxu0
      %v2786 = vadd.f32 %v2659, %v2785
      %v2787 = vpop.f32.mrb[0].mxu0
      %v2788 = vpop.f32.mrb[0].mxu0
      %v2789 = vadd.f32 %v2659, %v2788
      %v2790 = vpop.f32.mrb[0].mxu0
      %2791 = vmatprep.mubr.bf16.mxu0 0
      %2792 = vmatmul.mubr.bf16.gmra.mrb[0].mxu0 %v2683
      %v2793 = vpop.f32.mrb[0].mxu0
      %v2794 = vadd.f32 %v2659, %v2793
      %v2795 = vpop.f32.mrb[0].mxu0
      %v2796 = vpop.f32.mrb[0].mxu0
      %v2797 = vadd.f32 %v2659, %v2796
      %v2798 = vpop.f32.mrb[0].mxu0
      %2799 = vmatprep.mubr.bf16.mxu0 0
      %2800 = vmatmul.mubr.bf16.gmra.mrb[0].mxu0 %v2686
      %v2801 = vpop.f32.mrb[0].mxu0
      %v2802 = vadd.f32 %v2659, %v2801
      %v2803 = vpop.f32.mrb[0].mxu0
      %v2804 = vpop.f32.mrb[0].mxu0
      %v2805 = vadd.f32 %v2659, %v2804
      %v2806 = vpop.f32.mrb[0].mxu0
      %2807 = vmatprep.mubr.bf16.mxu0 0
      %2808 = vmatmul.mubr.bf16.gmra.mrb[0].mxu0 %v2689
      %v2809 = vpop.f32.mrb[0].mxu0
      %v2810 = vadd.f32 %v2659, %v2809
      %v2811 = vpop.f32.mrb[0].mxu0
      %v2812 = vpop.f32.mrb[0].mxu0
      %v2813 = vadd.f32 %v2659, %v2812
      %v2814 = vpop.f32.mrb[0].mxu0
      %2815 = vmatprep.mubr.bf16.mxu0 0
      %2816 = vmatmul.mubr.bf16.gmra.mrb[0].mxu0 %v2692
      %v2817 = vpop.f32.mrb[0].mxu0
      %v2818 = vadd.f32 %v2659, %v2817
      %v2819 = vpop.f32.mrb[0].mxu0
      %v2820 = vpop.f32.mrb[0].mxu0
      %v2821 = vadd.f32 %v2659, %v2820
      %v2822 = vpop.f32.mrb[0].mxu0
      %2823 = vmatprep.mubr.bf16.mxu0 0
      %2824 = vmatmul.mubr.bf16.gmra.mrb[0].mxu0 %v2695
      %v2825 = vpop.f32.mrb[0].mxu0
      %v2826 = vadd.f32 %v2659, %v2825
      %v2827 = vpop.f32.mrb[0].mxu0
      %v2828 = vpop.f32.mrb[0].mxu0
      %v2829 = vadd.f32 %v2659, %v2828
      %v2830 = vpop.f32.mrb[0].mxu0
      %2831 = vmatprep.mubr.bf16.mxu0 0
      %2832 = vmatmul.mubr.bf16.gmra.mrb[0].mxu0 %v2698
      %v2833 = vpop.f32.mrb[0].mxu0
      %v2834 = vadd.f32 %v2659, %v2833
      %v2835 = vpop.f32.mrb[0].mxu0
      %v2836 = vpop.f32.mrb[0].mxu0
      %v2837 = vadd.f32 %v2659, %v2836
      %v2838 = vpop.f32.mrb[0].mxu0
      %2839 = vmatprep.mubr.bf16.mxu0 0
      %2840 = vmatmul.mubr.bf16.gmra.mrb[0].mxu0 %v2701
      %v2841 = vpop.f32.mrb[0].mxu0
      %v2842 = vadd.f32 %v2659, %v2841
      %v2843 = vpop.f32.mrb[0].mxu0
      %v2844 = vpop.f32.mrb[0].mxu0
      %v2845 = vadd.f32 %v2659, %v2844
      %v2846 = vpop.f32.mrb[0].mxu0
      %2847 = vmatprep.mubr.bf16.mxu0 0
      %2848 = vmatmul.mubr.bf16.gmra.mrb[0].mxu0 %v2704
      %v2849 = vpop.f32.mrb[0].mxu0
      %v2850 = vadd.f32 %v2659, %v2849
      %v2851 = vpop.f32.mrb[0].mxu0
      %v2852 = vpop.f32.mrb[0].mxu0
      %v2853 = vadd.f32 %v2659, %v2852
      %v2854 = vpop.f32.mrb[0].mxu0
      %2855 = vmatprep.mubr.bf16.mxu0 0
      %2856 = vmatmul.mubr.bf16.gmra.mrb[0].mxu0 %v2707
      %v2857 = vpop.f32.mrb[0].mxu0
      %v2858 = vadd.f32 %v2659, %v2857
      %v2859 = vpop.f32.mrb[0].mxu0
      %v2860 = vpop.f32.mrb[0].mxu0
      %v2861 = vadd.f32 %v2659, %v2860
      %v2862 = vpop.f32.mrb[0].mxu0
      %2863 = vmatprep.mubr.bf16.mxu0 0
      %2864 = vmatmul.mubr.bf16.gmra.mrb[0].mxu0 %v2710
      %v2865 = vpop.f32.mrb[0].mxu0
      %v2866 = vadd.f32 %v2659, %v2865
      %v2867 = vpop.f32.mrb[0].mxu0
      %v2868 = vpop.f32.mrb[0].mxu0
      %v2869 = vadd.f32 %v2659, %v2868
      %v2870 = vpop.f32.mrb[0].mxu0
      %2871 = vmatprep.mubr.bf16.mxu0 0
      %2872 = vmatmul.mubr.bf16.gmra.mrb[0].mxu0 %v2713
      %v2873 = vpop.f32.mrb[0].mxu0
      %v2874 = vadd.f32 %v2659, %v2873
      %v2875 = vpop.f32.mrb[0].mxu0
      %v2876 = vpop.f32.mrb[0].mxu0
      %v2877 = vadd.f32 %v2659, %v2876
      %v2878 = vpop.f32.mrb[0].mxu0
      %2879 = vdwg.mxu0
      %2880 = vst [vmem:[%s589] sm:$0xff] %v2754
      %2881 = vst [vmem:[%s589 + $0x8] sm:$0xff] %v2757
      %2882 = vst [vmem:[%s589 + $0x10] sm:$0xff] %v2762
      %2883 = vst [vmem:[%s589 + $0x18] sm:$0xff] %v2765
      %2884 = vst [vmem:[%s589 + $0x20] sm:$0xff] %v2770
      %2885 = vst [vmem:[%s589 + $0x28] sm:$0xff] %v2773
      %2886 = vst [vmem:[%s589 + $0x30] sm:$0xff] %v2778
      %2887 = vst [vmem:[%s589 + $0x38] sm:$0xff] %v2781
      %2888 = vst [vmem:[%s589 + $0x40] sm:$0xff] %v2786
      %2889 = vst [vmem:[%s589 + $0x48] sm:$0xff] %v2789
      %2890 = vst [vmem:[%s589 + $0x50] sm:$0xff] %v2794
      %2891 = vst [vmem:[%s589 + $0x58] sm:$0xff] %v2797
      %2892 = vst [vmem:[%s589 + $0x60] sm:$0xff] %v2802
      %2893 = vst [vmem:[%s589 + $0x68] sm:$0xff] %v2805
      %2894 = vst [vmem:[%s589 + $0x70] sm:$0xff] %v2810
      %2895 = vst [vmem:[%s589 + $0x78] sm:$0xff] %v2813
      %2896 = vst [vmem:[%s589 + $0x80] sm:$0xff] %v2818
      %2897 = vst [vmem:[%s589 + $0x88] sm:$0xff] %v2821
      %2898 = vst [vmem:[%s589 + $0x90] sm:$0xff] %v2826
      %2899 = vst [vmem:[%s589 + $0x98] sm:$0xff] %v2829
      %2900 = vst [vmem:[%s589 + $0xa0] sm:$0xff] %v2834
      %2901 = vst [vmem:[%s589 + $0xa8] sm:$0xff] %v2837
      %2902 = vst [vmem:[%s589 + $0xb0] sm:$0xff] %v2842
      %2903 = vst [vmem:[%s589 + $0xb8] sm:$0xff] %v2845
      %2904 = vst [vmem:[%s589 + $0xc0] sm:$0xff] %v2850
      %2905 = vst [vmem:[%s589 + $0xc8] sm:$0xff] %v2853
      %2906 = vst [vmem:[%s589 + $0xd0] sm:$0xff] %v2858
      %2907 = vst [vmem:[%s589 + $0xd8] sm:$0xff] %v2861
      %2908 = vst [vmem:[%s589 + $0xe0] sm:$0xff] %v2866
      %2909 = vst [vmem:[%s589 + $0xe8] sm:$0xff] %v2869
      %2910 = vst [vmem:[%s589 + $0xf0] sm:$0xff] %v2874
      %2911 = vst [vmem:[%s589 + $0xf8] sm:$0xff] %v2877
      %v2912 = vld [vmem:[%s9] sm:$0xf]
      %v2913 = vld [vmem:[%s9 + $0x4] sm:$0xf]
      %v2914 = vld [vmem:[%s9 + $0x8] sm:$0xf]
      %v2915 = vld [vmem:[%s9 + $0xc] sm:$0xf]
      %v2916 = vld [vmem:[%s9 + $0x10] sm:$0xf]
      %v2917 = vld [vmem:[%s9 + $0x14] sm:$0xf]
      %v2918 = vld [vmem:[%s9 + $0x18] sm:$0xf]
      %v2919 = vld [vmem:[%s9 + $0x1c] sm:$0xf]
      %v2920 = vld [vmem:[%s9 + $0x20] sm:$0xf]
      %v2921 = vld [vmem:[%s9 + $0x24] sm:$0xf]
      %v2922 = vld [vmem:[%s9 + $0x28] sm:$0xf]
      %v2923 = vld [vmem:[%s9 + $0x2c] sm:$0xf]
      %v2924 = vld [vmem:[%s9 + $0x30] sm:$0xf]
      %v2925 = vld [vmem:[%s9 + $0x34] sm:$0xf]
      %v2926 = vld [vmem:[%s9 + $0x38] sm:$0xf]
      %v2927 = vld [vmem:[%s9 + $0x3c] sm:$0xf]
      %v2928 = vld [vmem:[%s10] sm:$0x1]
      %v2929 = vpack.c.bf16 %v2757, %v2754
      %v2930 = vpack.c.bf16 %v2765, %v2762
      %v2931 = vpack.c.bf16 %v2773, %v2770
      %v2932 = vpack.c.bf16 %v2781, %v2778
      %v2933 = vpack.c.bf16 %v2789, %v2786
      %v2934 = vpack.c.bf16 %v2797, %v2794
      %v2935 = vpack.c.bf16 %v2805, %v2802
      %v2936 = vpack.c.bf16 %v2813, %v2810
      %v2937 = vpack.c.bf16 %v2821, %v2818
      %v2938 = vpack.c.bf16 %v2829, %v2826
      %v2939 = vpack.c.bf16 %v2837, %v2834
      %v2940 = vpack.c.bf16 %v2845, %v2842
      %v2941 = vpack.c.bf16 %v2853, %v2850
      %v2942 = vpack.c.bf16 %v2861, %v2858
      %v2943 = vpack.c.bf16 %v2869, %v2866
      %v2944 = vpack.c.bf16 %v2877, %v2874
      %v2946 = vlaneseq
      %v2947 = vshrl.u32 %v2946, 7
      %v2948 = vsub.s32 0, %v2947
      %v2949 = vrot.slane %v2928, %v2948
      %v2967 = vunpack.c.l.b16 %v2912
      %v2968 = vunpack.c.l.b16 %v2913
      %v2969 = vunpack.c.l.b16 %v2914
      %v2970 = vunpack.c.l.b16 %v2915
      %v2971 = vunpack.c.l.b16 %v2916
      %v2972 = vunpack.c.l.b16 %v2917
      %v2973 = vunpack.c.l.b16 %v2918
      %v2974 = vunpack.c.l.b16 %v2919
      %v2975 = vunpack.c.l.b16 %v2920
      %v2976 = vunpack.c.l.b16 %v2921
      %v2977 = vunpack.c.l.b16 %v2922
      %v2978 = vunpack.c.l.b16 %v2923
      %v2979 = vunpack.c.l.b16 %v2924
      %v2980 = vunpack.c.l.b16 %v2925
      %v2981 = vunpack.c.l.b16 %v2926
      %v2982 = vunpack.c.l.b16 %v2927
      %v2983 = vpack.c.b16 %v2968, %v2967
      %v2984 = vpack.c.b16 %v2970, %v2969
      %v2985 = vpack.c.b16 %v2972, %v2971
      %v2986 = vpack.c.b16 %v2974, %v2973
      %v2987 = vpack.c.b16 %v2976, %v2975
      %v2988 = vpack.c.b16 %v2978, %v2977
      %v2989 = vpack.c.b16 %v2980, %v2979
      %v2990 = vpack.c.b16 %v2982, %v2981
      %2999 = vmatprep.subr.bf16.mxu0 0
      %3000 = vmatpush1.bf16.msra.mxu0 %v2983
      %3001 = vmatprep.subr.bf16.mxu0 0
      %3002 = vmatpush1.bf16.msra.mxu0 %v2984
      %3003 = vmatprep.subr.bf16.mxu0 0
      %3004 = vmatpush1.bf16.msra.mxu0 %v2985
      %3005 = vmatprep.subr.bf16.mxu0 0
      %3006 = vmatpush1.bf16.msra.mxu0 %v2986
      %3007 = vmatprep.subr.bf16.mxu0 0
      %3008 = vmatpush1.bf16.msra.mxu0 %v2987
      %3009 = vmatprep.subr.bf16.mxu0 0
      %3010 = vmatpush1.bf16.msra.mxu0 %v2988
      %3011 = vmatprep.subr.bf16.mxu0 0
      %3012 = vmatpush1.bf16.msra.mxu0 %v2989
      %3013 = vmatprep.subr.bf16.mxu0 0
      %3014 = vmatpush1.bf16.msra.mxu0 %v2990
      %3015 = vmatprep.subr.bf16.mxu0 0
      %3016 = vmatpush1.bf16.msra.mxu0 0
      %3017 = vmatprep.subr.bf16.mxu0 0
      %3018 = vmatpush1.bf16.msra.mxu0 0
      %3019 = vmatprep.subr.bf16.mxu0 0
      %3020 = vmatpush1.bf16.msra.mxu0 0
      %3021 = vmatprep.subr.bf16.mxu0 0
      %3022 = vmatpush1.bf16.msra.mxu0 0
      %3023 = vmatprep.subr.bf16.mxu0 0
      %3024 = vmatpush1.bf16.msra.mxu0 0
      %3025 = vmatprep.subr.bf16.mxu0 0
      %3026 = vmatpush1.bf16.msra.mxu0 0
      %3027 = vmatprep.subr.bf16.mxu0 0
      %3028 = vmatpush1.bf16.msra.mxu0 0
      %3029 = vmatprep.subr.bf16.mxu0 0
      %3030 = vmatpush1.bf16.msra.mxu0 0
      %3031 = vmatprep.mubr.bf16.mxu0 0
      %3032 = vmatmul.mubr.bf16.gmra.mrb[0].mxu0 %v2929
      %v3033 = vpop.f32.mrb[0].mxu0
      %v3034 = vadd.f32 %v2949, %v3033
      %v3035 = vpop.f32.mrb[0].mxu0
      %v3036 = vpop.f32.mrb[0].mxu0
      %v3037 = vadd.f32 %v2949, %v3036
      %v3038 = vpop.f32.mrb[0].mxu0
      %3039 = vmatprep.mubr.bf16.mxu0 0
      %3040 = vmatmul.mubr.bf16.gmra.mrb[0].mxu0 %v2930
      %v3041 = vpop.f32.mrb[0].mxu0
      %v3042 = vadd.f32 %v2949, %v3041
      %v3043 = vpop.f32.mrb[0].mxu0
      %v3044 = vpop.f32.mrb[0].mxu0
      %v3045 = vadd.f32 %v2949, %v3044
      %v3046 = vpop.f32.mrb[0].mxu0
      %3047 = vmatprep.mubr.bf16.mxu0 0
      %3048 = vmatmul.mubr.bf16.gmra.mrb[0].mxu0 %v2931
      %v3049 = vpop.f32.mrb[0].mxu0
      %v3050 = vadd.f32 %v2949, %v3049
      %v3051 = vpop.f32.mrb[0].mxu0
      %v3052 = vpop.f32.mrb[0].mxu0
      %v3053 = vadd.f32 %v2949, %v3052
      %v3054 = vpop.f32.mrb[0].mxu0
      %3055 = vmatprep.mubr.bf16.mxu0 0
      %3056 = vmatmul.mubr.bf16.gmra.mrb[0].mxu0 %v2932
      %v3057 = vpop.f32.mrb[0].mxu0
      %v3058 = vadd.f32 %v2949, %v3057
      %v3059 = vpop.f32.mrb[0].mxu0
      %v3060 = vpop.f32.mrb[0].mxu0
      %v3061 = vadd.f32 %v2949, %v3060
      %v3062 = vpop.f32.mrb[0].mxu0
      %3063 = vmatprep.mubr.bf16.mxu0 0
      %3064 = vmatmul.mubr.bf16.gmra.mrb[0].mxu0 %v2933
      %v3065 = vpop.f32.mrb[0].mxu0
      %v3066 = vadd.f32 %v2949, %v3065
      %v3067 = vpop.f32.mrb[0].mxu0
      %v3068 = vpop.f32.mrb[0].mxu0
      %v3069 = vadd.f32 %v2949, %v3068
      %v3070 = vpop.f32.mrb[0].mxu0
      %3071 = vmatprep.mubr.bf16.mxu0 0
      %3072 = vmatmul.mubr.bf16.gmra.mrb[0].mxu0 %v2934
      %v3073 = vpop.f32.mrb[0].mxu0
      %v3074 = vadd.f32 %v2949, %v3073
      %v3075 = vpop.f32.mrb[0].mxu0
      %v3076 = vpop.f32.mrb[0].mxu0
      %v3077 = vadd.f32 %v2949, %v3076
      %v3078 = vpop.f32.mrb[0].mxu0
      %3079 = vmatprep.mubr.bf16.mxu0 0
      %3080 = vmatmul.mubr.bf16.gmra.mrb[0].mxu0 %v2935
      %v3081 = vpop.f32.mrb[0].mxu0
      %v3082 = vadd.f32 %v2949, %v3081
      %v3083 = vpop.f32.mrb[0].mxu0
      %v3084 = vpop.f32.mrb[0].mxu0
      %v3085 = vadd.f32 %v2949, %v3084
      %v3086 = vpop.f32.mrb[0].mxu0
      %3087 = vmatprep.mubr.bf16.mxu0 0
      %3088 = vmatmul.mubr.bf16.gmra.mrb[0].mxu0 %v2936
      %v3089 = vpop.f32.mrb[0].mxu0
      %v3090 = vadd.f32 %v2949, %v3089
      %v3091 = vpop.f32.mrb[0].mxu0
      %v3092 = vpop.f32.mrb[0].mxu0
      %v3093 = vadd.f32 %v2949, %v3092
      %v3094 = vpop.f32.mrb[0].mxu0
      %3095 = vmatprep.mubr.bf16.mxu0 0
      %3096 = vmatmul.mubr.bf16.gmra.mrb[0].mxu0 %v2937
      %v3097 = vpop.f32.mrb[0].mxu0
      %v3098 = vadd.f32 %v2949, %v3097
      %v3099 = vpop.f32.mrb[0].mxu0
      %v3100 = vpop.f32.mrb[0].mxu0
      %v3101 = vadd.f32 %v2949, %v3100
      %v3102 = vpop.f32.mrb[0].mxu0
      %3103 = vmatprep.mubr.bf16.mxu0 0
      %3104 = vmatmul.mubr.bf16.gmra.mrb[0].mxu0 %v2938
      %v3105 = vpop.f32.mrb[0].mxu0
      %v3106 = vadd.f32 %v2949, %v3105
      %v3107 = vpop.f32.mrb[0].mxu0
      %v3108 = vpop.f32.mrb[0].mxu0
      %v3109 = vadd.f32 %v2949, %v3108
      %v3110 = vpop.f32.mrb[0].mxu0
      %3111 = vmatprep.mubr.bf16.mxu0 0
      %3112 = vmatmul.mubr.bf16.gmra.mrb[0].mxu0 %v2939
      %v3113 = vpop.f32.mrb[0].mxu0
      %v3114 = vadd.f32 %v2949, %v3113
      %v3115 = vpop.f32.mrb[0].mxu0
      %v3116 = vpop.f32.mrb[0].mxu0
      %v3117 = vadd.f32 %v2949, %v3116
      %v3118 = vpop.f32.mrb[0].mxu0
      %3119 = vmatprep.mubr.bf16.mxu0 0
      %3120 = vmatmul.mubr.bf16.gmra.mrb[0].mxu0 %v2940
      %v3121 = vpop.f32.mrb[0].mxu0
      %v3122 = vadd.f32 %v2949, %v3121
      %v3123 = vpop.f32.mrb[0].mxu0
      %v3124 = vpop.f32.mrb[0].mxu0
      %v3125 = vadd.f32 %v2949, %v3124
      %v3126 = vpop.f32.mrb[0].mxu0
      %3127 = vmatprep.mubr.bf16.mxu0 0
      %3128 = vmatmul.mubr.bf16.gmra.mrb[0].mxu0 %v2941
      %v3129 = vpop.f32.mrb[0].mxu0
      %v3130 = vadd.f32 %v2949, %v3129
      %v3131 = vpop.f32.mrb[0].mxu0
      %v3132 = vpop.f32.mrb[0].mxu0
      %v3133 = vadd.f32 %v2949, %v3132
      %v3134 = vpop.f32.mrb[0].mxu0
      %3135 = vmatprep.mubr.bf16.mxu0 0
      %3136 = vmatmul.mubr.bf16.gmra.mrb[0].mxu0 %v2942
      %v3137 = vpop.f32.mrb[0].mxu0
      %v3138 = vadd.f32 %v2949, %v3137
      %v3139 = vpop.f32.mrb[0].mxu0
      %v3140 = vpop.f32.mrb[0].mxu0
      %v3141 = vadd.f32 %v2949, %v3140
      %v3142 = vpop.f32.mrb[0].mxu0
      %3143 = vmatprep.mubr.bf16.mxu0 0
      %3144 = vmatmul.mubr.bf16.gmra.mrb[0].mxu0 %v2943
      %v3145 = vpop.f32.mrb[0].mxu0
      %v3146 = vadd.f32 %v2949, %v3145
      %v3147 = vpop.f32.mrb[0].mxu0
      %v3148 = vpop.f32.mrb[0].mxu0
      %v3149 = vadd.f32 %v2949, %v3148
      %v3150 = vpop.f32.mrb[0].mxu0
      %3151 = vmatprep.mubr.bf16.mxu0 0
      %3152 = vmatmul.mubr.bf16.gmra.mrb[0].mxu0 %v2944
      %v3153 = vpop.f32.mrb[0].mxu0
      %v3154 = vadd.f32 %v2949, %v3153
      %v3155 = vpop.f32.mrb[0].mxu0
      %v3156 = vpop.f32.mrb[0].mxu0
      %v3157 = vadd.f32 %v2949, %v3156
      %v3158 = vpop.f32.mrb[0].mxu0
      %3159 = vdwg.mxu0
      %v3160 = vtanh.pop %v3034
      %v3161 = vtanh.pop %v3037
      %v3162 = vtanh.pop %v3042
      %v3163 = vtanh.pop %v3045
      %v3164 = vtanh.pop %v3050
      %v3165 = vtanh.pop %v3053
      %v3166 = vtanh.pop %v3058
      %v3167 = vtanh.pop %v3061
      %v3168 = vtanh.pop %v3066
      %v3169 = vtanh.pop %v3069
      %v3170 = vtanh.pop %v3074
      %v3171 = vtanh.pop %v3077
      %v3172 = vtanh.pop %v3082
      %v3173 = vtanh.pop %v3085
      %v3174 = vtanh.pop %v3090
      %v3175 = vtanh.pop %v3093
      %v3176 = vtanh.pop %v3098
      %v3177 = vtanh.pop %v3101
      %v3178 = vtanh.pop %v3106
      %v3179 = vtanh.pop %v3109
      %v3180 = vtanh.pop %v3114
      %v3181 = vtanh.pop %v3117
      %v3182 = vtanh.pop %v3122
      %v3183 = vtanh.pop %v3125
      %v3184 = vtanh.pop %v3130
      %v3185 = vtanh.pop %v3133
      %v3186 = vtanh.pop %v3138
      %v3187 = vtanh.pop %v3141
      %v3188 = vtanh.pop %v3146
      %v3189 = vtanh.pop %v3149
      %v3190 = vtanh.pop %v3154
      %v3191 = vtanh.pop %v3157
      %v3192 = vld [vmem:[%s11] sm:$0xf]
      %v3193 = vld [vmem:[%s11 + $0x4] sm:$0x3]
      %v3194 = vld [vmem:[%s12] sm:$0x1]
      %v3195 = vpack.c.bf16 %v3161, %v3160
      %v3196 = vpack.c.bf16 %v3163, %v3162
      %v3197 = vpack.c.bf16 %v3165, %v3164
      %v3198 = vpack.c.bf16 %v3167, %v3166
      %v3199 = vpack.c.bf16 %v3169, %v3168
      %v3200 = vpack.c.bf16 %v3171, %v3170
      %v3201 = vpack.c.bf16 %v3173, %v3172
      %v3202 = vpack.c.bf16 %v3175, %v3174
      %v3203 = vpack.c.bf16 %v3177, %v3176
      %v3204 = vpack.c.bf16 %v3179, %v3178
      %v3205 = vpack.c.bf16 %v3181, %v3180
      %v3206 = vpack.c.bf16 %v3183, %v3182
      %v3207 = vpack.c.bf16 %v3185, %v3184
      %v3208 = vpack.c.bf16 %v3187, %v3186
      %v3209 = vpack.c.bf16 %v3189, %v3188
      %v3210 = vpack.c.bf16 %v3191, %v3190
      %v3212 = vlaneseq
      %v3213 = vshrl.u32 %v3212, 7
      %v3214 = vsub.s32 0, %v3213
      %v3215 = vrot.slane %v3194, %v3214
      %v3219 = vunpack.c.l.b16 %v3192
      %v3220 = vunpack.c.l.b16 %v3193
      %v3221 = vpack.c.b16 %v3220, %v3219
      %v3223 = vsel %vm2666, %v3195, 0
      %v3226 = vsel %vm2666, %v3196, 0
      %v3229 = vsel %vm2666, %v3197, 0
      %v3232 = vsel %vm2666, %v3198, 0
      %v3235 = vsel %vm2666, %v3199, 0
      %v3238 = vsel %vm2666, %v3200, 0
      %v3241 = vsel %vm2666, %v3201, 0
      %v3244 = vsel %vm2666, %v3202, 0
      %v3247 = vsel %vm2666, %v3203, 0
      %v3250 = vsel %vm2666, %v3204, 0
      %v3253 = vsel %vm2666, %v3205, 0
      %v3256 = vsel %vm2666, %v3206, 0
      %v3259 = vsel %vm2666, %v3207, 0
      %v3262 = vsel %vm2666, %v3208, 0
      %v3265 = vsel %vm2666, %v3209, 0
      %v3268 = vsel %vm2666, %v3210, 0
      %v3271 = vsel %vm2715, %v3221, 0
      %3273 = vmatprep.subr.bf16.mxu0 0
      %3274 = vmatpush1.bf16.msra.mxu0 %v3271
      %3275 = vmatprep.subr.bf16.mxu0 0
      %3276 = vmatpush1.bf16.msra.mxu0 0
      %3277 = vmatprep.subr.bf16.mxu0 0
      %3278 = vmatpush1.bf16.msra.mxu0 0
      %3279 = vmatprep.subr.bf16.mxu0 0
      %3280 = vmatpush1.bf16.msra.mxu0 0
      %3281 = vmatprep.subr.bf16.mxu0 0
      %3282 = vmatpush1.bf16.msra.mxu0 0
      %3283 = vmatprep.subr.bf16.mxu0 0
      %3284 = vmatpush1.bf16.msra.mxu0 0
      %3285 = vmatprep.subr.bf16.mxu0 0
      %3286 = vmatpush1.bf16.msra.mxu0 0
      %3287 = vmatprep.subr.bf16.mxu0 0
      %3288 = vmatpush1.bf16.msra.mxu0 0
      %3289 = vmatprep.subr.bf16.mxu0 0
      %3290 = vmatpush1.bf16.msra.mxu0 0
      %3291 = vmatprep.subr.bf16.mxu0 0
      %3292 = vmatpush1.bf16.msra.mxu0 0
      %3293 = vmatprep.subr.bf16.mxu0 0
      %3294 = vmatpush1.bf16.msra.mxu0 0
      %3295 = vmatprep.subr.bf16.mxu0 0
      %3296 = vmatpush1.bf16.msra.mxu0 0
      %3297 = vmatprep.subr.bf16.mxu0 0
      %3298 = vmatpush1.bf16.msra.mxu0 0
      %3299 = vmatprep.subr.bf16.mxu0 0
      %3300 = vmatpush1.bf16.msra.mxu0 0
      %3301 = vmatprep.subr.bf16.mxu0 0
      %3302 = vmatpush1.bf16.msra.mxu0 0
      %3303 = vmatprep.subr.bf16.mxu0 0
      %3304 = vmatpush1.bf16.msra.mxu0 0
      %3305 = vmatprep.mubr.bf16.mxu0 0
      %3306 = vmatmul.mubr.bf16.gmra.mrb[0].mxu0 %v3223
      %v3307 = vpop.f32.mrb[0].mxu0
      %v3308 = vadd.f32 %v3215, %v3307
      %v3309 = vpop.f32.mrb[0].mxu0
      %v3310 = vpop.f32.mrb[0].mxu0
      %v3311 = vadd.f32 %v3215, %v3310
      %v3312 = vpop.f32.mrb[0].mxu0
      %3313 = vmatprep.mubr.bf16.mxu0 0
      %3314 = vmatmul.mubr.bf16.gmra.mrb[0].mxu0 %v3226
      %v3315 = vpop.f32.mrb[0].mxu0
      %v3316 = vadd.f32 %v3215, %v3315
      %v3317 = vpop.f32.mrb[0].mxu0
      %v3318 = vpop.f32.mrb[0].mxu0
      %v3319 = vadd.f32 %v3215, %v3318
      %v3320 = vpop.f32.mrb[0].mxu0
      %3321 = vmatprep.mubr.bf16.mxu0 0
      %3322 = vmatmul.mubr.bf16.gmra.mrb[0].mxu0 %v3229
      %v3323 = vpop.f32.mrb[0].mxu0
      %v3324 = vadd.f32 %v3215, %v3323
      %v3325 = vpop.f32.mrb[0].mxu0
      %v3326 = vpop.f32.mrb[0].mxu0
      %v3327 = vadd.f32 %v3215, %v3326
      %v3328 = vpop.f32.mrb[0].mxu0
      %3329 = vmatprep.mubr.bf16.mxu0 0
      %3330 = vmatmul.mubr.bf16.gmra.mrb[0].mxu0 %v3232
      %v3331 = vpop.f32.mrb[0].mxu0
      %v3332 = vadd.f32 %v3215, %v3331
      %v3333 = vpop.f32.mrb[0].mxu0
      %v3334 = vpop.f32.mrb[0].mxu0
      %v3335 = vadd.f32 %v3215, %v3334
      %v3336 = vpop.f32.mrb[0].mxu0
      %3337 = vmatprep.mubr.bf16.mxu0 0
      %3338 = vmatmul.mubr.bf16.gmra.mrb[0].mxu0 %v3235
      %v3339 = vpop.f32.mrb[0].mxu0
      %v3340 = vadd.f32 %v3215, %v3339
      %v3341 = vpop.f32.mrb[0].mxu0
      %v3342 = vpop.f32.mrb[0].mxu0
      %v3343 = vadd.f32 %v3215, %v3342
      %v3344 = vpop.f32.mrb[0].mxu0
      %3345 = vmatprep.mubr.bf16.mxu0 0
      %3346 = vmatmul.mubr.bf16.gmra.mrb[0].mxu0 %v3238
      %v3347 = vpop.f32.mrb[0].mxu0
      %v3348 = vadd.f32 %v3215, %v3347
      %v3349 = vpop.f32.mrb[0].mxu0
      %v3350 = vpop.f32.mrb[0].mxu0
      %v3351 = vadd.f32 %v3215, %v3350
      %v3352 = vpop.f32.mrb[0].mxu0
      %3353 = vmatprep.mubr.bf16.mxu0 0
      %3354 = vmatmul.mubr.bf16.gmra.mrb[0].mxu0 %v3241
      %v3355 = vpop.f32.mrb[0].mxu0
      %v3356 = vadd.f32 %v3215, %v3355
      %v3357 = vpop.f32.mrb[0].mxu0
      %v3358 = vpop.f32.mrb[0].mxu0
      %v3359 = vadd.f32 %v3215, %v3358
      %v3360 = vpop.f32.mrb[0].mxu0
      %3361 = vmatprep.mubr.bf16.mxu0 0
      %3362 = vmatmul.mubr.bf16.gmra.mrb[0].mxu0 %v3244
      %v3363 = vpop.f32.mrb[0].mxu0
      %v3364 = vadd.f32 %v3215, %v3363
      %v3365 = vpop.f32.mrb[0].mxu0
      %v3366 = vpop.f32.mrb[0].mxu0
      %v3367 = vadd.f32 %v3215, %v3366
      %v3368 = vpop.f32.mrb[0].mxu0
      %3369 = vmatprep.mubr.bf16.mxu0 0
      %3370 = vmatmul.mubr.bf16.gmra.mrb[0].mxu0 %v3247
      %v3371 = vpop.f32.mrb[0].mxu0
      %v3372 = vadd.f32 %v3215, %v3371
      %v3373 = vpop.f32.mrb[0].mxu0
      %v3374 = vpop.f32.mrb[0].mxu0
      %v3375 = vadd.f32 %v3215, %v3374
      %v3376 = vpop.f32.mrb[0].mxu0
      %3377 = vmatprep.mubr.bf16.mxu0 0
      %3378 = vmatmul.mubr.bf16.gmra.mrb[0].mxu0 %v3250
      %v3379 = vpop.f32.mrb[0].mxu0
      %v3380 = vadd.f32 %v3215, %v3379
      %v3381 = vpop.f32.mrb[0].mxu0
      %v3382 = vpop.f32.mrb[0].mxu0
      %v3383 = vadd.f32 %v3215, %v3382
      %v3384 = vpop.f32.mrb[0].mxu0
      %3385 = vmatprep.mubr.bf16.mxu0 0
      %3386 = vmatmul.mubr.bf16.gmra.mrb[0].mxu0 %v3253
      %v3387 = vpop.f32.mrb[0].mxu0
      %v3388 = vadd.f32 %v3215, %v3387
      %v3389 = vpop.f32.mrb[0].mxu0
      %v3390 = vpop.f32.mrb[0].mxu0
      %v3391 = vadd.f32 %v3215, %v3390
      %v3392 = vpop.f32.mrb[0].mxu0
      %3393 = vmatprep.mubr.bf16.mxu0 0
      %3394 = vmatmul.mubr.bf16.gmra.mrb[0].mxu0 %v3256
      %v3395 = vpop.f32.mrb[0].mxu0
      %v3396 = vadd.f32 %v3215, %v3395
      %v3397 = vpop.f32.mrb[0].mxu0
      %v3398 = vpop.f32.mrb[0].mxu0
      %v3399 = vadd.f32 %v3215, %v3398
      %v3400 = vpop.f32.mrb[0].mxu0
      %3401 = vmatprep.mubr.bf16.mxu0 0
      %3402 = vmatmul.mubr.bf16.gmra.mrb[0].mxu0 %v3259
      %v3403 = vpop.f32.mrb[0].mxu0
      %v3404 = vadd.f32 %v3215, %v3403
      %v3405 = vpop.f32.mrb[0].mxu0
      %v3406 = vpop.f32.mrb[0].mxu0
      %v3407 = vadd.f32 %v3215, %v3406
      %v3408 = vpop.f32.mrb[0].mxu0
      %3409 = vmatprep.mubr.bf16.mxu0 0
      %3410 = vmatmul.mubr.bf16.gmra.mrb[0].mxu0 %v3262
      %v3411 = vpop.f32.mrb[0].mxu0
      %v3412 = vadd.f32 %v3215, %v3411
      %v3413 = vpop.f32.mrb[0].mxu0
      %v3414 = vpop.f32.mrb[0].mxu0
      %v3415 = vadd.f32 %v3215, %v3414
      %v3416 = vpop.f32.mrb[0].mxu0
      %3417 = vmatprep.mubr.bf16.mxu0 0
      %3418 = vmatmul.mubr.bf16.gmra.mrb[0].mxu0 %v3265
      %v3419 = vpop.f32.mrb[0].mxu0
      %v3420 = vadd.f32 %v3215, %v3419
      %v3421 = vpop.f32.mrb[0].mxu0
      %v3422 = vpop.f32.mrb[0].mxu0
      %v3423 = vadd.f32 %v3215, %v3422
      %v3424 = vpop.f32.mrb[0].mxu0
      %3425 = vmatprep.mubr.bf16.mxu0 0
      %3426 = vmatmul.mubr.bf16.gmra.mrb[0].mxu0 %v3268
      %v3427 = vpop.f32.mrb[0].mxu0
      %v3428 = vadd.f32 %v3215, %v3427
      %v3429 = vpop.f32.mrb[0].mxu0
      %v3430 = vpop.f32.mrb[0].mxu0
      %v3431 = vadd.f32 %v3215, %v3430
      %v3432 = vpop.f32.mrb[0].mxu0
      %3433 = vdwg.mxu0
      %v3434 = vtanh.pop %v3308
      %v3435 = vtanh.pop %v3311
      %v3436 = vtanh.pop %v3316
      %v3437 = vtanh.pop %v3319
      %v3438 = vtanh.pop %v3324
      %v3439 = vtanh.pop %v3327
      %v3440 = vtanh.pop %v3332
      %v3441 = vtanh.pop %v3335
      %v3442 = vtanh.pop %v3340
      %v3443 = vtanh.pop %v3343
      %v3444 = vtanh.pop %v3348
      %v3445 = vtanh.pop %v3351
      %v3446 = vtanh.pop %v3356
      %v3447 = vtanh.pop %v3359
      %v3448 = vtanh.pop %v3364
      %v3449 = vtanh.pop %v3367
      %v3450 = vtanh.pop %v3372
      %v3451 = vtanh.pop %v3375
      %v3452 = vtanh.pop %v3380
      %v3453 = vtanh.pop %v3383
      %v3454 = vtanh.pop %v3388
      %v3455 = vtanh.pop %v3391
      %v3456 = vtanh.pop %v3396
      %v3457 = vtanh.pop %v3399
      %v3458 = vtanh.pop %v3404
      %v3459 = vtanh.pop %v3407
      %v3460 = vtanh.pop %v3412
      %v3461 = vtanh.pop %v3415
      %v3462 = vtanh.pop %v3420
      %v3463 = vtanh.pop %v3423
      %v3464 = vtanh.pop %v3428
      %v3465 = vtanh.pop %v3431
      %v3466 = vld [vmem:[%s13] sm:$0xf]
      %v3467 = vld [vmem:[%s13 + $0x4] sm:$0xf]
      %v3468 = vld [vmem:[%s13 + $0x8] sm:$0xf]
      %v3469 = vld [vmem:[%s13 + $0xc] sm:$0xf]
      %v3470 = vld [vmem:[%s13 + $0x10] sm:$0xf]
      %v3471 = vld [vmem:[%s13 + $0x14] sm:$0xf]
      %v3472 = vld [vmem:[%s13 + $0x18] sm:$0xf]
      %v3473 = vld [vmem:[%s13 + $0x1c] sm:$0xf]
      %v3474 = vld [vmem:[%s14] sm:$0x1]
      %v3475 = vpack.c.bf16 %v3435, %v3434
      %v3476 = vpack.c.bf16 %v3437, %v3436
      %v3477 = vpack.c.bf16 %v3439, %v3438
      %v3478 = vpack.c.bf16 %v3441, %v3440
      %v3479 = vpack.c.bf16 %v3443, %v3442
      %v3480 = vpack.c.bf16 %v3445, %v3444
      %v3481 = vpack.c.bf16 %v3447, %v3446
      %v3482 = vpack.c.bf16 %v3449, %v3448
      %v3483 = vpack.c.bf16 %v3451, %v3450
      %v3484 = vpack.c.bf16 %v3453, %v3452
      %v3485 = vpack.c.bf16 %v3455, %v3454
      %v3486 = vpack.c.bf16 %v3457, %v3456
      %v3487 = vpack.c.bf16 %v3459, %v3458
      %v3488 = vpack.c.bf16 %v3461, %v3460
      %v3489 = vpack.c.bf16 %v3463, %v3462
      %v3490 = vpack.c.bf16 %v3465, %v3464
      %v3492 = vlaneseq
      %v3493 = vshrl.u32 %v3492, 7
      %v3494 = vsub.s32 0, %v3493
      %v3495 = vrot.slane %v3474, %v3494
      %v3505 = vunpack.c.l.b16 %v3466
      %v3506 = vunpack.c.l.b16 %v3467
      %v3507 = vunpack.c.l.b16 %v3468
      %v3508 = vunpack.c.l.b16 %v3469
      %v3509 = vunpack.c.l.b16 %v3470
      %v3510 = vunpack.c.l.b16 %v3471
      %v3511 = vunpack.c.l.b16 %v3472
      %v3512 = vunpack.c.l.b16 %v3473
      %v3513 = vpack.c.b16 %v3506, %v3505
      %v3514 = vpack.c.b16 %v3508, %v3507
      %v3515 = vpack.c.b16 %v3510, %v3509
      %v3516 = vpack.c.b16 %v3512, %v3511
      %v3522 = vsel %vm2394, %v3475, 0
      %v3525 = vsel %vm2394, %v3476, 0
      %v3528 = vsel %vm2394, %v3477, 0
      %v3531 = vsel %vm2394, %v3478, 0
      %v3534 = vsel %vm2394, %v3479, 0
      %v3537 = vsel %vm2394, %v3480, 0
      %v3540 = vsel %vm2394, %v3481, 0
      %v3543 = vsel %vm2394, %v3482, 0
      %v3546 = vsel %vm2394, %v3483, 0
      %v3549 = vsel %vm2394, %v3484, 0
      %v3552 = vsel %vm2394, %v3485, 0
      %v3555 = vsel %vm2394, %v3486, 0
      %v3558 = vsel %vm2394, %v3487, 0
      %v3561 = vsel %vm2394, %v3488, 0
      %v3564 = vsel %vm2394, %v3489, 0
      %v3567 = vsel %vm2394, %v3490, 0
      %3569 = vmatprep.subr.bf16.mxu0 0
      %3570 = vmatpush1.bf16.msra.mxu0 %v3513
      %3571 = vmatprep.subr.bf16.mxu0 0
      %3572 = vmatpush1.bf16.msra.mxu0 %v3514
      %3573 = vmatprep.subr.bf16.mxu0 0
      %3574 = vmatpush1.bf16.msra.mxu0 %v3515
      %3575 = vmatprep.subr.bf16.mxu0 0
      %3576 = vmatpush1.bf16.msra.mxu0 %v3516
      %3577 = vmatprep.subr.bf16.mxu0 0
      %3578 = vmatpush1.bf16.msra.mxu0 0
      %3579 = vmatprep.subr.bf16.mxu0 0
      %3580 = vmatpush1.bf16.msra.mxu0 0
      %3581 = vmatprep.subr.bf16.mxu0 0
      %3582 = vmatpush1.bf16.msra.mxu0 0
      %3583 = vmatprep.subr.bf16.mxu0 0
      %3584 = vmatpush1.bf16.msra.mxu0 0
      %3585 = vmatprep.subr.bf16.mxu0 0
      %3586 = vmatpush1.bf16.msra.mxu0 0
      %3587 = vmatprep.subr.bf16.mxu0 0
      %3588 = vmatpush1.bf16.msra.mxu0 0
      %3589 = vmatprep.subr.bf16.mxu0 0
      %3590 = vmatpush1.bf16.msra.mxu0 0
      %3591 = vmatprep.subr.bf16.mxu0 0
      %3592 = vmatpush1.bf16.msra.mxu0 0
      %3593 = vmatprep.subr.bf16.mxu0 0
      %3594 = vmatpush1.bf16.msra.mxu0 0
      %3595 = vmatprep.subr.bf16.mxu0 0
      %3596 = vmatpush1.bf16.msra.mxu0 0
      %3597 = vmatprep.subr.bf16.mxu0 0
      %3598 = vmatpush1.bf16.msra.mxu0 0
      %3599 = vmatprep.subr.bf16.mxu0 0
      %3600 = vmatpush1.bf16.msra.mxu0 0
      %3601 = vmatprep.mubr.bf16.mxu0 0
      %3602 = vmatmul.mubr.bf16.gmra.mrb[0].mxu0 %v3522
      %v3603 = vpop.f32.mrb[0].mxu0
      %v3604 = vadd.f32 %v3495, %v3603
      %v3605 = vpop.f32.mrb[0].mxu0
      %v3606 = vpop.f32.mrb[0].mxu0
      %v3607 = vadd.f32 %v3495, %v3606
      %v3608 = vpop.f32.mrb[0].mxu0
      %3609 = vmatprep.mubr.bf16.mxu0 0
      %3610 = vmatmul.mubr.bf16.gmra.mrb[0].mxu0 %v3525
      %v3611 = vpop.f32.mrb[0].mxu0
      %v3612 = vadd.f32 %v3495, %v3611
      %v3613 = vpop.f32.mrb[0].mxu0
      %v3614 = vpop.f32.mrb[0].mxu0
      %v3615 = vadd.f32 %v3495, %v3614
      %v3616 = vpop.f32.mrb[0].mxu0
      %3617 = vmatprep.mubr.bf16.mxu0 0
      %3618 = vmatmul.mubr.bf16.gmra.mrb[0].mxu0 %v3528
      %v3619 = vpop.f32.mrb[0].mxu0
      %v3620 = vadd.f32 %v3495, %v3619
      %v3621 = vpop.f32.mrb[0].mxu0
      %v3622 = vpop.f32.mrb[0].mxu0
      %v3623 = vadd.f32 %v3495, %v3622
      %v3624 = vpop.f32.mrb[0].mxu0
      %3625 = vmatprep.mubr.bf16.mxu0 0
      %3626 = vmatmul.mubr.bf16.gmra.mrb[0].mxu0 %v3531
      %v3627 = vpop.f32.mrb[0].mxu0
      %v3628 = vadd.f32 %v3495, %v3627
      %v3629 = vpop.f32.mrb[0].mxu0
      %v3630 = vpop.f32.mrb[0].mxu0
      %v3631 = vadd.f32 %v3495, %v3630
      %v3632 = vpop.f32.mrb[0].mxu0
      %3633 = vmatprep.mubr.bf16.mxu0 0
      %3634 = vmatmul.mubr.bf16.gmra.mrb[0].mxu0 %v3534
      %v3635 = vpop.f32.mrb[0].mxu0
      %v3636 = vadd.f32 %v3495, %v3635
      %v3637 = vpop.f32.mrb[0].mxu0
      %v3638 = vpop.f32.mrb[0].mxu0
      %v3639 = vadd.f32 %v3495, %v3638
      %v3640 = vpop.f32.mrb[0].mxu0
      %3641 = vmatprep.mubr.bf16.mxu0 0
      %3642 = vmatmul.mubr.bf16.gmra.mrb[0].mxu0 %v3537
      %v3643 = vpop.f32.mrb[0].mxu0
      %v3644 = vadd.f32 %v3495, %v3643
      %v3645 = vpop.f32.mrb[0].mxu0
      %v3646 = vpop.f32.mrb[0].mxu0
      %v3647 = vadd.f32 %v3495, %v3646
      %v3648 = vpop.f32.mrb[0].mxu0
      %3649 = vmatprep.mubr.bf16.mxu0 0
      %3650 = vmatmul.mubr.bf16.gmra.mrb[0].mxu0 %v3540
      %v3651 = vpop.f32.mrb[0].mxu0
      %v3652 = vadd.f32 %v3495, %v3651
      %v3653 = vpop.f32.mrb[0].mxu0
      %v3654 = vpop.f32.mrb[0].mxu0
      %v3655 = vadd.f32 %v3495, %v3654
      %v3656 = vpop.f32.mrb[0].mxu0
      %3657 = vmatprep.mubr.bf16.mxu0 0
      %3658 = vmatmul.mubr.bf16.gmra.mrb[0].mxu0 %v3543
      %v3659 = vpop.f32.mrb[0].mxu0
      %v3660 = vadd.f32 %v3495, %v3659
      %v3661 = vpop.f32.mrb[0].mxu0
      %v3662 = vpop.f32.mrb[0].mxu0
      %v3663 = vadd.f32 %v3495, %v3662
      %v3664 = vpop.f32.mrb[0].mxu0
      %3665 = vmatprep.mubr.bf16.mxu0 0
      %3666 = vmatmul.mubr.bf16.gmra.mrb[0].mxu0 %v3546
      %v3667 = vpop.f32.mrb[0].mxu0
      %v3668 = vadd.f32 %v3495, %v3667
      %v3669 = vpop.f32.mrb[0].mxu0
      %v3670 = vpop.f32.mrb[0].mxu0
      %v3671 = vadd.f32 %v3495, %v3670
      %v3672 = vpop.f32.mrb[0].mxu0
      %3673 = vmatprep.mubr.bf16.mxu0 0
      %3674 = vmatmul.mubr.bf16.gmra.mrb[0].mxu0 %v3549
      %v3675 = vpop.f32.mrb[0].mxu0
      %v3676 = vadd.f32 %v3495, %v3675
      %v3677 = vpop.f32.mrb[0].mxu0
      %v3678 = vpop.f32.mrb[0].mxu0
      %v3679 = vadd.f32 %v3495, %v3678
      %v3680 = vpop.f32.mrb[0].mxu0
      %3681 = vmatprep.mubr.bf16.mxu0 0
      %3682 = vmatmul.mubr.bf16.gmra.mrb[0].mxu0 %v3552
      %v3683 = vpop.f32.mrb[0].mxu0
      %v3684 = vadd.f32 %v3495, %v3683
      %v3685 = vpop.f32.mrb[0].mxu0
      %v3686 = vpop.f32.mrb[0].mxu0
      %v3687 = vadd.f32 %v3495, %v3686
      %v3688 = vpop.f32.mrb[0].mxu0
      %3689 = vmatprep.mubr.bf16.mxu0 0
      %3690 = vmatmul.mubr.bf16.gmra.mrb[0].mxu0 %v3555
      %v3691 = vpop.f32.mrb[0].mxu0
      %v3692 = vadd.f32 %v3495, %v3691
      %v3693 = vpop.f32.mrb[0].mxu0
      %v3694 = vpop.f32.mrb[0].mxu0
      %v3695 = vadd.f32 %v3495, %v3694
      %v3696 = vpop.f32.mrb[0].mxu0
      %3697 = vmatprep.mubr.bf16.mxu0 0
      %3698 = vmatmul.mubr.bf16.gmra.mrb[0].mxu0 %v3558
      %v3699 = vpop.f32.mrb[0].mxu0
      %v3700 = vadd.f32 %v3495, %v3699
      %v3701 = vpop.f32.mrb[0].mxu0
      %v3702 = vpop.f32.mrb[0].mxu0
      %v3703 = vadd.f32 %v3495, %v3702
      %v3704 = vpop.f32.mrb[0].mxu0
      %3705 = vmatprep.mubr.bf16.mxu0 0
      %3706 = vmatmul.mubr.bf16.gmra.mrb[0].mxu0 %v3561
      %v3707 = vpop.f32.mrb[0].mxu0
      %v3708 = vadd.f32 %v3495, %v3707
      %v3709 = vpop.f32.mrb[0].mxu0
      %v3710 = vpop.f32.mrb[0].mxu0
      %v3711 = vadd.f32 %v3495, %v3710
      %v3712 = vpop.f32.mrb[0].mxu0
      %3713 = vmatprep.mubr.bf16.mxu0 0
      %3714 = vmatmul.mubr.bf16.gmra.mrb[0].mxu0 %v3564
      %v3715 = vpop.f32.mrb[0].mxu0
      %v3716 = vadd.f32 %v3495, %v3715
      %v3717 = vpop.f32.mrb[0].mxu0
      %v3718 = vpop.f32.mrb[0].mxu0
      %v3719 = vadd.f32 %v3495, %v3718
      %v3720 = vpop.f32.mrb[0].mxu0
      %3721 = vmatprep.mubr.bf16.mxu0 0
      %3722 = vmatmul.mubr.bf16.gmra.mrb[0].mxu0 %v3567
      %v3723 = vpop.f32.mrb[0].mxu0
      %v3724 = vadd.f32 %v3495, %v3723
      %v3725 = vpop.f32.mrb[0].mxu0
      %v3726 = vpop.f32.mrb[0].mxu0
      %v3727 = vadd.f32 %v3495, %v3726
      %v3728 = vpop.f32.mrb[0].mxu0
      %3729 = vdwg.mxu0
      %v3730 = vtanh.pop %v3604
      %v3731 = vtanh.pop %v3607
      %v3732 = vtanh.pop %v3612
      %v3733 = vtanh.pop %v3615
      %v3734 = vtanh.pop %v3620
      %v3735 = vtanh.pop %v3623
      %v3736 = vtanh.pop %v3628
      %v3737 = vtanh.pop %v3631
      %v3738 = vtanh.pop %v3636
      %v3739 = vtanh.pop %v3639
      %v3740 = vtanh.pop %v3644
      %v3741 = vtanh.pop %v3647
      %v3742 = vtanh.pop %v3652
      %v3743 = vtanh.pop %v3655
      %v3744 = vtanh.pop %v3660
      %v3745 = vtanh.pop %v3663
      %v3746 = vtanh.pop %v3668
      %v3747 = vtanh.pop %v3671
      %v3748 = vtanh.pop %v3676
      %v3749 = vtanh.pop %v3679
      %v3750 = vtanh.pop %v3684
      %v3751 = vtanh.pop %v3687
      %v3752 = vtanh.pop %v3692
      %v3753 = vtanh.pop %v3695
      %v3754 = vtanh.pop %v3700
      %v3755 = vtanh.pop %v3703
      %v3756 = vtanh.pop %v3708
      %v3757 = vtanh.pop %v3711
      %v3758 = vtanh.pop %v3716
      %v3759 = vtanh.pop %v3719
      %v3760 = vtanh.pop %v3724
      %v3761 = vtanh.pop %v3727
      %v3762 = vld [vmem:[%s15] sm:$0xff]
      %v3763 = vld [vmem:[%s15 + $0x8] sm:$0xff]
      %v3764 = vld [vmem:[%s15 + $0x10] sm:$0xff]
      %v3765 = vld [vmem:[%s15 + $0x18] sm:$0xf]
      %v3766 = vld [vmem:[%s15 + $0x1c] sm:$0xff]
      %v3767 = vld [vmem:[%s15 + $0x24] sm:$0xff]
      %v3768 = vld [vmem:[%s15 + $0x2c] sm:$0xff]
      %v3769 = vld [vmem:[%s15 + $0x34] sm:$0xf]
      %v3770 = vld [vmem:[%s15 + $0x38] sm:$0xff]
      %v3771 = vld [vmem:[%s15 + $0x40] sm:$0xff]
      %v3772 = vld [vmem:[%s15 + $0x48] sm:$0xff]
      %v3773 = vld [vmem:[%s15 + $0x50] sm:$0xf]
      %v3774 = vld [vmem:[%s15 + $0x54] sm:$0xff]
      %v3775 = vld [vmem:[%s15 + $0x5c] sm:$0xff]
      %v3776 = vld [vmem:[%s15 + $0x64] sm:$0xff]
      %v3777 = vld [vmem:[%s15 + $0x6c] sm:$0xf]
      %v3778 = vld [vmem:[%s15 + $0x70] sm:$0xff]
      %v3779 = vld [vmem:[%s15 + $0x78] sm:$0xff]
      %v3780 = vld [vmem:[%s15 + $0x80] sm:$0xff]
      %v3781 = vld [vmem:[%s15 + $0x88] sm:$0xf]
      %v3782 = vld [vmem:[%s15 + $0x8c] sm:$0xff]
      %v3783 = vld [vmem:[%s15 + $0x94] sm:$0xff]
      %v3784 = vld [vmem:[%s15 + $0x9c] sm:$0xff]
      %v3785 = vld [vmem:[%s15 + $0xa4] sm:$0xf]
      %v3786 = vld [vmem:[%s15 + $0xa8] sm:$0xff]
      %v3787 = vld [vmem:[%s15 + $0xb0] sm:$0xff]
      %v3788 = vld [vmem:[%s15 + $0xb8] sm:$0xff]
      %v3789 = vld [vmem:[%s15 + $0xc0] sm:$0xf]
      %v3790 = vld [vmem:[%s15 + $0xc4] sm:$0xff]
      %v3791 = vld [vmem:[%s15 + $0xcc] sm:$0xff]
      %v3792 = vld [vmem:[%s15 + $0xd4] sm:$0xff]
      %v3793 = vld [vmem:[%s15 + $0xdc] sm:$0xf]
      %v3794 = vld [vmem:[%s15 + $0xe0] sm:$0xff]
      %v3795 = vld [vmem:[%s15 + $0xe8] sm:$0xff]
      %v3796 = vld [vmem:[%s15 + $0xf0] sm:$0xff]
      %v3797 = vld [vmem:[%s15 + $0xf8] sm:$0xf]
      %v3798 = vld [vmem:[%s15 + $0xfc] sm:$0xff]
      %v3799 = vld [vmem:[%s15 + $0x104] sm:$0xff]
      %v3800 = vld [vmem:[%s15 + $0x10c] sm:$0xff]
      %v3801 = vld [vmem:[%s15 + $0x114] sm:$0xf]
      %v3802 = vld [vmem:[%s15 + $0x118] sm:$0xff]
      %v3803 = vld [vmem:[%s15 + $0x120] sm:$0xff]
      %v3804 = vld [vmem:[%s15 + $0x128] sm:$0xff]
      %v3805 = vld [vmem:[%s15 + $0x130] sm:$0xf]
      %v3806 = vld [vmem:[%s15 + $0x134] sm:$0xff]
      %v3807 = vld [vmem:[%s15 + $0x13c] sm:$0xff]
      %v3808 = vld [vmem:[%s15 + $0x144] sm:$0xff]
      %v3809 = vld [vmem:[%s15 + $0x14c] sm:$0xf]
      %v3810 = vld [vmem:[%s15 + $0x150] sm:$0xff]
      %v3811 = vld [vmem:[%s15 + $0x158] sm:$0xff]
      %v3812 = vld [vmem:[%s15 + $0x160] sm:$0xff]
      %v3813 = vld [vmem:[%s15 + $0x168] sm:$0xf]
      %v3814 = vld [vmem:[%s15 + $0x16c] sm:$0xff]
      %v3815 = vld [vmem:[%s15 + $0x174] sm:$0xff]
      %v3816 = vld [vmem:[%s15 + $0x17c] sm:$0xff]
      %v3817 = vld [vmem:[%s15 + $0x184] sm:$0xf]
      %v3818 = vld [vmem:[%s15 + $0x188] sm:$0xff]
      %v3819 = vld [vmem:[%s15 + $0x190] sm:$0xff]
      %v3820 = vld [vmem:[%s15 + $0x198] sm:$0xff]
      %v3821 = vld [vmem:[%s15 + $0x1a0] sm:$0xf]
      %v3822 = vld [vmem:[%s15 + $0x1a4] sm:$0xff]
      %v3823 = vld [vmem:[%s15 + $0x1ac] sm:$0xff]
      %v3824 = vld [vmem:[%s15 + $0x1b4] sm:$0xff]
      %v3825 = vld [vmem:[%s15 + $0x1bc] sm:$0xf]
      %v3826 = vld [vmem:[%s16] sm:$0x7f]
      %v3827 = vpack.c.bf16 %v3731, %v3730
      %v3828 = vpack.c.bf16 %v3733, %v3732
      %v3829 = vpack.c.bf16 %v3735, %v3734
      %v3830 = vpack.c.bf16 %v3737, %v3736
      %v3831 = vpack.c.bf16 %v3739, %v3738
      %v3832 = vpack.c.bf16 %v3741, %v3740
      %v3833 = vpack.c.bf16 %v3743, %v3742
      %v3834 = vpack.c.bf16 %v3745, %v3744
      %v3835 = vpack.c.bf16 %v3747, %v3746
      %v3836 = vpack.c.bf16 %v3749, %v3748
      %v3837 = vpack.c.bf16 %v3751, %v3750
      %v3838 = vpack.c.bf16 %v3753, %v3752
      %v3839 = vpack.c.bf16 %v3755, %v3754
      %v3840 = vpack.c.bf16 %v3757, %v3756
      %v3841 = vpack.c.bf16 %v3759, %v3758
      %v3842 = vpack.c.bf16 %v3761, %v3760
      %v3844 = vlaneseq
      %v3845 = vshrl.u32 %v3844, 7
      %v3846 = vsub.s32 0, %v3845
      %v3847 = vrot.slane %v3826, %v3846
      %v3848 = vlaneseq
      %v3849 = vshrl.u32 %v3848, 7
      %v3850 = vsub.s32 1, %v3849
      %v3851 = vrot.slane %v3826, %v3850
      %v3852 = vlaneseq
      %v3853 = vshrl.u32 %v3852, 7
      %v3854 = vsub.s32 2, %v3853
      %v3855 = vrot.slane %v3826, %v3854
      %v3856 = vlaneseq
      %v3857 = vshrl.u32 %v3856, 7
      %v3858 = vsub.s32 3, %v3857
      %v3859 = vrot.slane %v3826, %v3858
      %v3860 = vlaneseq
      %v3861 = vshrl.u32 %v3860, 7
      %v3862 = vsub.s32 4, %v3861
      %v3863 = vrot.slane %v3826, %v3862
      %v3864 = vlaneseq
      %v3865 = vshrl.u32 %v3864, 7
      %v3866 = vsub.s32 5, %v3865
      %v3867 = vrot.slane %v3826, %v3866
      %v3868 = vlaneseq
      %v3869 = vshrl.u32 %v3868, 7
      %v3870 = vsub.s32 6, %v3869
      %v3871 = vrot.slane %v3826, %v3870
      %v3943 = vunpack.c.l.b16 %v3762
      %v3944 = vunpack.c.h.b16 %v3762
      %v3945 = vunpack.c.l.b16 %v3763
      %v3946 = vunpack.c.h.b16 %v3763
      %v3947 = vunpack.c.l.b16 %v3764
      %v3948 = vunpack.c.h.b16 %v3764
      %v3949 = vunpack.c.l.b16 %v3765
      %v3950 = vunpack.c.l.b16 %v3766
      %v3951 = vunpack.c.h.b16 %v3766
      %v3952 = vunpack.c.l.b16 %v3767
      %v3953 = vunpack.c.h.b16 %v3767
      %v3954 = vunpack.c.l.b16 %v3768
      %v3955 = vunpack.c.h.b16 %v3768
      %v3956 = vunpack.c.l.b16 %v3769
      %v3957 = vunpack.c.l.b16 %v3770
      %v3958 = vunpack.c.h.b16 %v3770
      %v3959 = vunpack.c.l.b16 %v3771
      %v3960 = vunpack.c.h.b16 %v3771
      %v3961 = vunpack.c.l.b16 %v3772
      %v3962 = vunpack.c.h.b16 %v3772
      %v3963 = vunpack.c.l.b16 %v3773
      %v3964 = vunpack.c.l.b16 %v3774
      %v3965 = vunpack.c.h.b16 %v3774
      %v3966 = vunpack.c.l.b16 %v3775
      %v3967 = vunpack.c.h.b16 %v3775
      %v3968 = vunpack.c.l.b16 %v3776
      %v3969 = vunpack.c.h.b16 %v3776
      %v3970 = vunpack.c.l.b16 %v3777
      %v3971 = vunpack.c.l.b16 %v3778
      %v3972 = vunpack.c.h.b16 %v3778
      %v3973 = vunpack.c.l.b16 %v3779
      %v3974 = vunpack.c.h.b16 %v3779
      %v3975 = vunpack.c.l.b16 %v3780
      %v3976 = vunpack.c.h.b16 %v3780
      %v3977 = vunpack.c.l.b16 %v3781
      %v3978 = vunpack.c.l.b16 %v3782
      %v3979 = vunpack.c.h.b16 %v3782
      %v3980 = vunpack.c.l.b16 %v3783
      %v3981 = vunpack.c.h.b16 %v3783
      %v3982 = vunpack.c.l.b16 %v3784
      %v3983 = vunpack.c.h.b16 %v3784
      %v3984 = vunpack.c.l.b16 %v3785
      %v3985 = vunpack.c.l.b16 %v3786
      %v3986 = vunpack.c.h.b16 %v3786
      %v3987 = vunpack.c.l.b16 %v3787
      %v3988 = vunpack.c.h.b16 %v3787
      %v3989 = vunpack.c.l.b16 %v3788
      %v3990 = vunpack.c.h.b16 %v3788
      %v3991 = vunpack.c.l.b16 %v3789
      %v3992 = vunpack.c.l.b16 %v3790
      %v3993 = vunpack.c.h.b16 %v3790
      %v3994 = vunpack.c.l.b16 %v3791
      %v3995 = vunpack.c.h.b16 %v3791
      %v3996 = vunpack.c.l.b16 %v3792
      %v3997 = vunpack.c.h.b16 %v3792
      %v3998 = vunpack.c.l.b16 %v3793
      %v3999 = vunpack.c.l.b16 %v3794
      %v4000 = vunpack.c.h.b16 %v3794
      %v4001 = vunpack.c.l.b16 %v3795
      %v4002 = vunpack.c.h.b16 %v3795
      %v4003 = vunpack.c.l.b16 %v3796
      %v4004 = vunpack.c.h.b16 %v3796
      %v4005 = vunpack.c.l.b16 %v3797
      %v4006 = vunpack.c.l.b16 %v3798
      %v4007 = vunpack.c.h.b16 %v3798
      %v4008 = vunpack.c.l.b16 %v3799
      %v4009 = vunpack.c.h.b16 %v3799
      %v4010 = vunpack.c.l.b16 %v3800
      %v4011 = vunpack.c.h.b16 %v3800
      %v4012 = vunpack.c.l.b16 %v3801
      %v4013 = vunpack.c.l.b16 %v3802
      %v4014 = vunpack.c.h.b16 %v3802
      %v4015 = vunpack.c.l.b16 %v3803
      %v4016 = vunpack.c.h.b16 %v3803
      %v4017 = vunpack.c.l.b16 %v3804
      %v4018 = vunpack.c.h.b16 %v3804
      %v4019 = vunpack.c.l.b16 %v3805
      %v4020 = vunpack.c.l.b16 %v3806
      %v4021 = vunpack.c.h.b16 %v3806
      %v4022 = vunpack.c.l.b16 %v3807
      %v4023 = vunpack.c.h.b16 %v3807
      %v4024 = vunpack.c.l.b16 %v3808
      %v4025 = vunpack.c.h.b16 %v3808
      %v4026 = vunpack.c.l.b16 %v3809
      %v4027 = vunpack.c.l.b16 %v3810
      %v4028 = vunpack.c.h.b16 %v3810
      %v4029 = vunpack.c.l.b16 %v3811
      %v4030 = vunpack.c.h.b16 %v3811
      %v4031 = vunpack.c.l.b16 %v3812
      %v4032 = vunpack.c.h.b16 %v3812
      %v4033 = vunpack.c.l.b16 %v3813
      %v4034 = vunpack.c.l.b16 %v3814
      %v4035 = vunpack.c.h.b16 %v3814
      %v4036 = vunpack.c.l.b16 %v3815
      %v4037 = vunpack.c.h.b16 %v3815
      %v4038 = vunpack.c.l.b16 %v3816
      %v4039 = vunpack.c.h.b16 %v3816
      %v4040 = vunpack.c.l.b16 %v3817
      %v4041 = vunpack.c.l.b16 %v3818
      %v4042 = vunpack.c.h.b16 %v3818
      %v4043 = vunpack.c.l.b16 %v3819
      %v4044 = vunpack.c.h.b16 %v3819
      %v4045 = vunpack.c.l.b16 %v3820
      %v4046 = vunpack.c.h.b16 %v3820
      %v4047 = vunpack.c.l.b16 %v3821
      %v4048 = vunpack.c.l.b16 %v3822
      %v4049 = vunpack.c.h.b16 %v3822
      %v4050 = vunpack.c.l.b16 %v3823
      %v4051 = vunpack.c.h.b16 %v3823
      %v4052 = vunpack.c.l.b16 %v3824
      %v4053 = vunpack.c.h.b16 %v3824
      %v4054 = vunpack.c.l.b16 %v3825
      %v4055 = vpack.c.b16 %v3950, %v3943
      %v4056 = vpack.c.b16 %v3951, %v3944
      %v4057 = vpack.c.b16 %v3952, %v3945
      %v4058 = vpack.c.b16 %v3953, %v3946
      %v4059 = vpack.c.b16 %v3954, %v3947
      %v4060 = vpack.c.b16 %v3955, %v3948
      %v4061 = vpack.c.b16 %v3956, %v3949
      %v4062 = vpack.c.b16 %v3964, %v3957
      %v4063 = vpack.c.b16 %v3965, %v3958
      %v4064 = vpack.c.b16 %v3966, %v3959
      %v4065 = vpack.c.b16 %v3967, %v3960
      %v4066 = vpack.c.b16 %v3968, %v3961
      %v4067 = vpack.c.b16 %v3969, %v3962
      %v4068 = vpack.c.b16 %v3970, %v3963
      %v4069 = vpack.c.b16 %v3978, %v3971
      %v4070 = vpack.c.b16 %v3979, %v3972
      %v4071 = vpack.c.b16 %v3980, %v3973
      %v4072 = vpack.c.b16 %v3981, %v3974
      %v4073 = vpack.c.b16 %v3982, %v3975
      %v4074 = vpack.c.b16 %v3983, %v3976
      %v4075 = vpack.c.b16 %v3984, %v3977
      %v4076 = vpack.c.b16 %v3992, %v3985
      %v4077 = vpack.c.b16 %v3993, %v3986
      %v4078 = vpack.c.b16 %v3994, %v3987
      %v4079 = vpack.c.b16 %v3995, %v3988
      %v4080 = vpack.c.b16 %v3996, %v3989
      %v4081 = vpack.c.b16 %v3997, %v3990
      %v4082 = vpack.c.b16 %v3998, %v3991
      %v4083 = vpack.c.b16 %v4006, %v3999
      %v4084 = vpack.c.b16 %v4007, %v4000
      %v4085 = vpack.c.b16 %v4008, %v4001
      %v4086 = vpack.c.b16 %v4009, %v4002
      %v4087 = vpack.c.b16 %v4010, %v4003
      %v4088 = vpack.c.b16 %v4011, %v4004
      %v4089 = vpack.c.b16 %v4012, %v4005
      %v4090 = vpack.c.b16 %v4020, %v4013
      %v4091 = vpack.c.b16 %v4021, %v4014
      %v4092 = vpack.c.b16 %v4022, %v4015
      %v4093 = vpack.c.b16 %v4023, %v4016
      %v4094 = vpack.c.b16 %v4024, %v4017
      %v4095 = vpack.c.b16 %v4025, %v4018
      %v4096 = vpack.c.b16 %v4026, %v4019
      %v4097 = vpack.c.b16 %v4034, %v4027
      %v4098 = vpack.c.b16 %v4035, %v4028
      %v4099 = vpack.c.b16 %v4036, %v4029
      %v4100 = vpack.c.b16 %v4037, %v4030
      %v4101 = vpack.c.b16 %v4038, %v4031
      %v4102 = vpack.c.b16 %v4039, %v4032
      %v4103 = vpack.c.b16 %v4040, %v4033
      %v4104 = vpack.c.b16 %v4048, %v4041
      %v4105 = vpack.c.b16 %v4049, %v4042
      %v4106 = vpack.c.b16 %v4050, %v4043
      %v4107 = vpack.c.b16 %v4051, %v4044
      %v4108 = vpack.c.b16 %v4052, %v4045
      %v4109 = vpack.c.b16 %v4053, %v4046
      %v4110 = vpack.c.b16 %v4054, %v4047
      %4167 = vmatprep.subr.bf16.mxu0 %v4056
      %4168 = vmatpush1.bf16.msra.mxu0 %v4055
      %4169 = vmatprep.subr.bf16.mxu0 %v4063
      %4170 = vmatpush1.bf16.msra.mxu0 %v4062
      %4171 = vmatprep.subr.bf16.mxu0 %v4070
      %4172 = vmatpush1.bf16.msra.mxu0 %v4069
      %4173 = vmatprep.subr.bf16.mxu0 %v4077
      %4174 = vmatpush1.bf16.msra.mxu0 %v4076
      %4175 = vmatprep.subr.bf16.mxu0 %v4084
      %4176 = vmatpush1.bf16.msra.mxu0 %v4083
      %4177 = vmatprep.subr.bf16.mxu0 %v4091
      %4178 = vmatpush1.bf16.msra.mxu0 %v4090
      %4179 = vmatprep.subr.bf16.mxu0 %v4098
      %4180 = vmatpush1.bf16.msra.mxu0 %v4097
      %4181 = vmatprep.subr.bf16.mxu0 %v4105
      %4182 = vmatpush1.bf16.msra.mxu0 %v4104
      %4183 = vmatprep.subr.bf16.mxu0 0
      %4184 = vmatpush1.bf16.msra.mxu0 0
      %4185 = vmatprep.subr.bf16.mxu0 0
      %4186 = vmatpush1.bf16.msra.mxu0 0
      %4187 = vmatprep.subr.bf16.mxu0 0
      %4188 = vmatpush1.bf16.msra.mxu0 0
      %4189 = vmatprep.subr.bf16.mxu0 0
      %4190 = vmatpush1.bf16.msra.mxu0 0
      %4191 = vmatprep.subr.bf16.mxu0 0
      %4192 = vmatpush1.bf16.msra.mxu0 0
      %4193 = vmatprep.subr.bf16.mxu0 0
      %4194 = vmatpush1.bf16.msra.mxu0 0
      %4195 = vmatprep.subr.bf16.mxu0 0
      %4196 = vmatpush1.bf16.msra.mxu0 0
      %4197 = vmatprep.subr.bf16.mxu0 0
      %4198 = vmatpush1.bf16.msra.mxu0 0
      %4199 = vmatprep.mubr.bf16.mxu0 0
      %4200 = vmatmul.mubr.bf16.gmra.mrb[0].mxu0 %v3827
      %v4201 = vpop.f32.mrb[0].mxu0
      %v4202 = vadd.f32 %v3847, %v4201
      %v4203 = vpop.f32.mrb[0].mxu0
      %v4204 = vadd.f32 %v3851, %v4203
      %v4205 = vpop.f32.mrb[0].mxu0
      %v4206 = vadd.f32 %v3847, %v4205
      %v4207 = vpop.f32.mrb[0].mxu0
      %v4208 = vadd.f32 %v3851, %v4207
      %4209 = vmatprep.mubr.bf16.mxu0 0
      %4210 = vmatmul.mubr.bf16.gmra.mrb[0].mxu0 %v3828
      %v4211 = vpop.f32.mrb[0].mxu0
      %v4212 = vadd.f32 %v3847, %v4211
      %v4213 = vpop.f32.mrb[0].mxu0
      %v4214 = vadd.f32 %v3851, %v4213
      %v4215 = vpop.f32.mrb[0].mxu0
      %v4216 = vadd.f32 %v3847, %v4215
      %v4217 = vpop.f32.mrb[0].mxu0
      %v4218 = vadd.f32 %v3851, %v4217
      %4219 = vmatprep.mubr.bf16.mxu0 0
      %4220 = vmatmul.mubr.bf16.gmra.mrb[0].mxu0 %v3829
      %v4221 = vpop.f32.mrb[0].mxu0
      %v4222 = vadd.f32 %v3847, %v4221
      %v4223 = vpop.f32.mrb[0].mxu0
      %v4224 = vadd.f32 %v3851, %v4223
      %v4225 = vpop.f32.mrb[0].mxu0
      %v4226 = vadd.f32 %v3847, %v4225
      %v4227 = vpop.f32.mrb[0].mxu0
      %v4228 = vadd.f32 %v3851, %v4227
      %4229 = vmatprep.mubr.bf16.mxu0 0
      %4230 = vmatmul.mubr.bf16.gmra.mrb[0].mxu0 %v3830
      %v4231 = vpop.f32.mrb[0].mxu0
      %v4232 = vadd.f32 %v3847, %v4231
      %v4233 = vpop.f32.mrb[0].mxu0
      %v4234 = vadd.f32 %v3851, %v4233
      %v4235 = vpop.f32.mrb[0].mxu0
      %v4236 = vadd.f32 %v3847, %v4235
      %v4237 = vpop.f32.mrb[0].mxu0
      %v4238 = vadd.f32 %v3851, %v4237
      %4239 = vmatprep.mubr.bf16.mxu0 0
      %4240 = vmatmul.mubr.bf16.gmra.mrb[0].mxu0 %v3831
      %v4241 = vpop.f32.mrb[0].mxu0
      %v4242 = vadd.f32 %v3847, %v4241
      %v4243 = vpop.f32.mrb[0].mxu0
      %v4244 = vadd.f32 %v3851, %v4243
      %v4245 = vpop.f32.mrb[0].mxu0
      %v4246 = vadd.f32 %v3847, %v4245
      %v4247 = vpop.f32.mrb[0].mxu0
      %v4248 = vadd.f32 %v3851, %v4247
      %4249 = vmatprep.mubr.bf16.mxu0 0
      %4250 = vmatmul.mubr.bf16.gmra.mrb[0].mxu0 %v3832
      %v4251 = vpop.f32.mrb[0].mxu0
      %v4252 = vadd.f32 %v3847, %v4251
      %v4253 = vpop.f32.mrb[0].mxu0
      %v4254 = vadd.f32 %v3851, %v4253
      %v4255 = vpop.f32.mrb[0].mxu0
      %v4256 = vadd.f32 %v3847, %v4255
      %v4257 = vpop.f32.mrb[0].mxu0
      %v4258 = vadd.f32 %v3851, %v4257
      %4259 = vmatprep.mubr.bf16.mxu0 0
      %4260 = vmatmul.mubr.bf16.gmra.mrb[0].mxu0 %v3833
      %v4261 = vpop.f32.mrb[0].mxu0
      %v4262 = vadd.f32 %v3847, %v4261
      %v4263 = vpop.f32.mrb[0].mxu0
      %v4264 = vadd.f32 %v3851, %v4263
      %v4265 = vpop.f32.mrb[0].mxu0
      %v4266 = vadd.f32 %v3847, %v4265
      %v4267 = vpop.f32.mrb[0].mxu0
      %v4268 = vadd.f32 %v3851, %v4267
      %4269 = vmatprep.mubr.bf16.mxu0 0
      %4270 = vmatmul.mubr.bf16.gmra.mrb[0].mxu0 %v3834
      %v4271 = vpop.f32.mrb[0].mxu0
      %v4272 = vadd.f32 %v3847, %v4271
      %v4273 = vpop.f32.mrb[0].mxu0
      %v4274 = vadd.f32 %v3851, %v4273
      %v4275 = vpop.f32.mrb[0].mxu0
      %v4276 = vadd.f32 %v3847, %v4275
      %v4277 = vpop.f32.mrb[0].mxu0
      %v4278 = vadd.f32 %v3851, %v4277
      %4279 = vmatprep.mubr.bf16.mxu0 0
      %4280 = vmatmul.mubr.bf16.gmra.mrb[0].mxu0 %v3835
      %v4281 = vpop.f32.mrb[0].mxu0
      %v4282 = vadd.f32 %v3847, %v4281
      %v4283 = vpop.f32.mrb[0].mxu0
      %v4284 = vadd.f32 %v3851, %v4283
      %v4285 = vpop.f32.mrb[0].mxu0
      %v4286 = vadd.f32 %v3847, %v4285
      %v4287 = vpop.f32.mrb[0].mxu0
      %v4288 = vadd.f32 %v3851, %v4287
      %4289 = vmatprep.mubr.bf16.mxu0 0
      %4290 = vmatmul.mubr.bf16.gmra.mrb[0].mxu0 %v3836
      %v4291 = vpop.f32.mrb[0].mxu0
      %v4292 = vadd.f32 %v3847, %v4291
      %v4293 = vpop.f32.mrb[0].mxu0
      %v4294 = vadd.f32 %v3851, %v4293
      %v4295 = vpop.f32.mrb[0].mxu0
      %v4296 = vadd.f32 %v3847, %v4295
      %v4297 = vpop.f32.mrb[0].mxu0
      %v4298 = vadd.f32 %v3851, %v4297
      %4299 = vmatprep.mubr.bf16.mxu0 0
      %4300 = vmatmul.mubr.bf16.gmra.mrb[0].mxu0 %v3837
      %v4301 = vpop.f32.mrb[0].mxu0
      %v4302 = vadd.f32 %v3847, %v4301
      %v4303 = vpop.f32.mrb[0].mxu0
      %v4304 = vadd.f32 %v3851, %v4303
      %v4305 = vpop.f32.mrb[0].mxu0
      %v4306 = vadd.f32 %v3847, %v4305
      %v4307 = vpop.f32.mrb[0].mxu0
      %v4308 = vadd.f32 %v3851, %v4307
      %4309 = vmatprep.mubr.bf16.mxu0 0
      %4310 = vmatmul.mubr.bf16.gmra.mrb[0].mxu0 %v3838
      %v4311 = vpop.f32.mrb[0].mxu0
      %v4312 = vadd.f32 %v3847, %v4311
      %v4313 = vpop.f32.mrb[0].mxu0
      %v4314 = vadd.f32 %v3851, %v4313
      %v4315 = vpop.f32.mrb[0].mxu0
      %v4316 = vadd.f32 %v3847, %v4315
      %v4317 = vpop.f32.mrb[0].mxu0
      %v4318 = vadd.f32 %v3851, %v4317
      %4319 = vmatprep.mubr.bf16.mxu0 0
      %4320 = vmatmul.mubr.bf16.gmra.mrb[0].mxu0 %v3839
      %v4321 = vpop.f32.mrb[0].mxu0
      %v4322 = vadd.f32 %v3847, %v4321
      %v4323 = vpop.f32.mrb[0].mxu0
      %v4324 = vadd.f32 %v3851, %v4323
      %v4325 = vpop.f32.mrb[0].mxu0
      %v4326 = vadd.f32 %v3847, %v4325
      %v4327 = vpop.f32.mrb[0].mxu0
      %v4328 = vadd.f32 %v3851, %v4327
      %4329 = vmatprep.mubr.bf16.mxu0 0
      %4330 = vmatmul.mubr.bf16.gmra.mrb[0].mxu0 %v3840
      %v4331 = vpop.f32.mrb[0].mxu0
      %v4332 = vadd.f32 %v3847, %v4331
      %v4333 = vpop.f32.mrb[0].mxu0
      %v4334 = vadd.f32 %v3851, %v4333
      %v4335 = vpop.f32.mrb[0].mxu0
      %v4336 = vadd.f32 %v3847, %v4335
      %v4337 = vpop.f32.mrb[0].mxu0
      %v4338 = vadd.f32 %v3851, %v4337
      %4339 = vmatprep.mubr.bf16.mxu0 0
      %4340 = vmatmul.mubr.bf16.gmra.mrb[0].mxu0 %v3841
      %v4341 = vpop.f32.mrb[0].mxu0
      %v4342 = vadd.f32 %v3847, %v4341
      %v4343 = vpop.f32.mrb[0].mxu0
      %v4344 = vadd.f32 %v3851, %v4343
      %v4345 = vpop.f32.mrb[0].mxu0
      %v4346 = vadd.f32 %v3847, %v4345
      %v4347 = vpop.f32.mrb[0].mxu0
      %v4348 = vadd.f32 %v3851, %v4347
      %4349 = vmatprep.mubr.bf16.mxu0 0
      %4350 = vmatmul.mubr.bf16.gmra.mrb[0].mxu0 %v3842
      %v4351 = vpop.f32.mrb[0].mxu0
      %v4352 = vadd.f32 %v3847, %v4351
      %v4353 = vpop.f32.mrb[0].mxu0
      %v4354 = vadd.f32 %v3851, %v4353
      %v4355 = vpop.f32.mrb[0].mxu0
      %v4356 = vadd.f32 %v3847, %v4355
      %v4357 = vpop.f32.mrb[0].mxu0
      %v4358 = vadd.f32 %v3851, %v4357
      %4359 = vdwg.mxu0
      %4360 = vmatprep.subr.bf16.mxu0 %v4058
      %4361 = vmatpush1.bf16.msra.mxu0 %v4057
      %4362 = vmatprep.subr.bf16.mxu0 %v4065
      %4363 = vmatpush1.bf16.msra.mxu0 %v4064
      %4364 = vmatprep.subr.bf16.mxu0 %v4072
      %4365 = vmatpush1.bf16.msra.mxu0 %v4071
      %4366 = vmatprep.subr.bf16.mxu0 %v4079
      %4367 = vmatpush1.bf16.msra.mxu0 %v4078
      %4368 = vmatprep.subr.bf16.mxu0 %v4086
      %4369 = vmatpush1.bf16.msra.mxu0 %v4085
      %4370 = vmatprep.subr.bf16.mxu0 %v4093
      %4371 = vmatpush1.bf16.msra.mxu0 %v4092
      %4372 = vmatprep.subr.bf16.mxu0 %v4100
      %4373 = vmatpush1.bf16.msra.mxu0 %v4099
      %4374 = vmatprep.subr.bf16.mxu0 %v4107
      %4375 = vmatpush1.bf16.msra.mxu0 %v4106
      %4376 = vmatprep.subr.bf16.mxu0 0
      %4377 = vmatpush1.bf16.msra.mxu0 0
      %4378 = vmatprep.subr.bf16.mxu0 0
      %4379 = vmatpush1.bf16.msra.mxu0 0
      %4380 = vmatprep.subr.bf16.mxu0 0
      %4381 = vmatpush1.bf16.msra.mxu0 0
      %4382 = vmatprep.subr.bf16.mxu0 0
      %4383 = vmatpush1.bf16.msra.mxu0 0
      %4384 = vmatprep.subr.bf16.mxu0 0
      %4385 = vmatpush1.bf16.msra.mxu0 0
      %4386 = vmatprep.subr.bf16.mxu0 0
      %4387 = vmatpush1.bf16.msra.mxu0 0
      %4388 = vmatprep.subr.bf16.mxu0 0
      %4389 = vmatpush1.bf16.msra.mxu0 0
      %4390 = vmatprep.subr.bf16.mxu0 0
      %4391 = vmatpush1.bf16.msra.mxu0 0
      %4392 = vmatprep.mubr.bf16.mxu0 0
      %4393 = vmatmul.mubr.bf16.gmra.mrb[0].mxu0 %v3827
      %v4394 = vpop.f32.mrb[0].mxu0
      %v4395 = vadd.f32 %v3855, %v4394
      %v4396 = vpop.f32.mrb[0].mxu0
      %v4397 = vadd.f32 %v3859, %v4396
      %v4398 = vpop.f32.mrb[0].mxu0
      %v4399 = vadd.f32 %v3855, %v4398
      %v4400 = vpop.f32.mrb[0].mxu0
      %v4401 = vadd.f32 %v3859, %v4400
      %4402 = vmatprep.mubr.bf16.mxu0 0
      %4403 = vmatmul.mubr.bf16.gmra.mrb[0].mxu0 %v3828
      %v4404 = vpop.f32.mrb[0].mxu0
      %v4405 = vadd.f32 %v3855, %v4404
      %v4406 = vpop.f32.mrb[0].mxu0
      %v4407 = vadd.f32 %v3859, %v4406
      %v4408 = vpop.f32.mrb[0].mxu0
      %v4409 = vadd.f32 %v3855, %v4408
      %v4410 = vpop.f32.mrb[0].mxu0
      %v4411 = vadd.f32 %v3859, %v4410
      %4412 = vmatprep.mubr.bf16.mxu0 0
      %4413 = vmatmul.mubr.bf16.gmra.mrb[0].mxu0 %v3829
      %v4414 = vpop.f32.mrb[0].mxu0
      %v4415 = vadd.f32 %v3855, %v4414
      %v4416 = vpop.f32.mrb[0].mxu0
      %v4417 = vadd.f32 %v3859, %v4416
      %v4418 = vpop.f32.mrb[0].mxu0
      %v4419 = vadd.f32 %v3855, %v4418
      %v4420 = vpop.f32.mrb[0].mxu0
      %v4421 = vadd.f32 %v3859, %v4420
      %4422 = vmatprep.mubr.bf16.mxu0 0
      %4423 = vmatmul.mubr.bf16.gmra.mrb[0].mxu0 %v3830
      %v4424 = vpop.f32.mrb[0].mxu0
      %v4425 = vadd.f32 %v3855, %v4424
      %v4426 = vpop.f32.mrb[0].mxu0
      %v4427 = vadd.f32 %v3859, %v4426
      %v4428 = vpop.f32.mrb[0].mxu0
      %v4429 = vadd.f32 %v3855, %v4428
      %v4430 = vpop.f32.mrb[0].mxu0
      %v4431 = vadd.f32 %v3859, %v4430
      %4432 = vmatprep.mubr.bf16.mxu0 0
      %4433 = vmatmul.mubr.bf16.gmra.mrb[0].mxu0 %v3831
      %v4434 = vpop.f32.mrb[0].mxu0
      %v4435 = vadd.f32 %v3855, %v4434
      %v4436 = vpop.f32.mrb[0].mxu0
      %v4437 = vadd.f32 %v3859, %v4436
      %v4438 = vpop.f32.mrb[0].mxu0
      %v4439 = vadd.f32 %v3855, %v4438
      %v4440 = vpop.f32.mrb[0].mxu0
      %v4441 = vadd.f32 %v3859, %v4440
      %4442 = vmatprep.mubr.bf16.mxu0 0
      %4443 = vmatmul.mubr.bf16.gmra.mrb[0].mxu0 %v3832
      %v4444 = vpop.f32.mrb[0].mxu0
      %v4445 = vadd.f32 %v3855, %v4444
      %v4446 = vpop.f32.mrb[0].mxu0
      %v4447 = vadd.f32 %v3859, %v4446
      %v4448 = vpop.f32.mrb[0].mxu0
      %v4449 = vadd.f32 %v3855, %v4448
      %v4450 = vpop.f32.mrb[0].mxu0
      %v4451 = vadd.f32 %v3859, %v4450
      %4452 = vmatprep.mubr.bf16.mxu0 0
      %4453 = vmatmul.mubr.bf16.gmra.mrb[0].mxu0 %v3833
      %v4454 = vpop.f32.mrb[0].mxu0
      %v4455 = vadd.f32 %v3855, %v4454
      %v4456 = vpop.f32.mrb[0].mxu0
      %v4457 = vadd.f32 %v3859, %v4456
      %v4458 = vpop.f32.mrb[0].mxu0
      %v4459 = vadd.f32 %v3855, %v4458
      %v4460 = vpop.f32.mrb[0].mxu0
      %v4461 = vadd.f32 %v3859, %v4460
      %4462 = vmatprep.mubr.bf16.mxu0 0
      %4463 = vmatmul.mubr.bf16.gmra.mrb[0].mxu0 %v3834
      %v4464 = vpop.f32.mrb[0].mxu0
      %v4465 = vadd.f32 %v3855, %v4464
      %v4466 = vpop.f32.mrb[0].mxu0
      %v4467 = vadd.f32 %v3859, %v4466
      %v4468 = vpop.f32.mrb[0].mxu0
      %v4469 = vadd.f32 %v3855, %v4468
      %v4470 = vpop.f32.mrb[0].mxu0
      %v4471 = vadd.f32 %v3859, %v4470
      %4472 = vmatprep.mubr.bf16.mxu0 0
      %4473 = vmatmul.mubr.bf16.gmra.mrb[0].mxu0 %v3835
      %v4474 = vpop.f32.mrb[0].mxu0
      %v4475 = vadd.f32 %v3855, %v4474
      %v4476 = vpop.f32.mrb[0].mxu0
      %v4477 = vadd.f32 %v3859, %v4476
      %v4478 = vpop.f32.mrb[0].mxu0
      %v4479 = vadd.f32 %v3855, %v4478
      %v4480 = vpop.f32.mrb[0].mxu0
      %v4481 = vadd.f32 %v3859, %v4480
      %4482 = vmatprep.mubr.bf16.mxu0 0
      %4483 = vmatmul.mubr.bf16.gmra.mrb[0].mxu0 %v3836
      %v4484 = vpop.f32.mrb[0].mxu0
      %v4485 = vadd.f32 %v3855, %v4484
      %v4486 = vpop.f32.mrb[0].mxu0
      %v4487 = vadd.f32 %v3859, %v4486
      %v4488 = vpop.f32.mrb[0].mxu0
      %v4489 = vadd.f32 %v3855, %v4488
      %v4490 = vpop.f32.mrb[0].mxu0
      %v4491 = vadd.f32 %v3859, %v4490
      %4492 = vmatprep.mubr.bf16.mxu0 0
      %4493 = vmatmul.mubr.bf16.gmra.mrb[0].mxu0 %v3837
      %v4494 = vpop.f32.mrb[0].mxu0
      %v4495 = vadd.f32 %v3855, %v4494
      %v4496 = vpop.f32.mrb[0].mxu0
      %v4497 = vadd.f32 %v3859, %v4496
      %v4498 = vpop.f32.mrb[0].mxu0
      %v4499 = vadd.f32 %v3855, %v4498
      %v4500 = vpop.f32.mrb[0].mxu0
      %v4501 = vadd.f32 %v3859, %v4500
      %4502 = vmatprep.mubr.bf16.mxu0 0
      %4503 = vmatmul.mubr.bf16.gmra.mrb[0].mxu0 %v3838
      %v4504 = vpop.f32.mrb[0].mxu0
      %v4505 = vadd.f32 %v3855, %v4504
      %v4506 = vpop.f32.mrb[0].mxu0
      %v4507 = vadd.f32 %v3859, %v4506
      %v4508 = vpop.f32.mrb[0].mxu0
      %v4509 = vadd.f32 %v3855, %v4508
      %v4510 = vpop.f32.mrb[0].mxu0
      %v4511 = vadd.f32 %v3859, %v4510
      %4512 = vmatprep.mubr.bf16.mxu0 0
      %4513 = vmatmul.mubr.bf16.gmra.mrb[0].mxu0 %v3839
      %v4514 = vpop.f32.mrb[0].mxu0
      %v4515 = vadd.f32 %v3855, %v4514
      %v4516 = vpop.f32.mrb[0].mxu0
      %v4517 = vadd.f32 %v3859, %v4516
      %v4518 = vpop.f32.mrb[0].mxu0
      %v4519 = vadd.f32 %v3855, %v4518
      %v4520 = vpop.f32.mrb[0].mxu0
      %v4521 = vadd.f32 %v3859, %v4520
      %4522 = vmatprep.mubr.bf16.mxu0 0
      %4523 = vmatmul.mubr.bf16.gmra.mrb[0].mxu0 %v3840
      %v4524 = vpop.f32.mrb[0].mxu0
      %v4525 = vadd.f32 %v3855, %v4524
      %v4526 = vpop.f32.mrb[0].mxu0
      %v4527 = vadd.f32 %v3859, %v4526
      %v4528 = vpop.f32.mrb[0].mxu0
      %v4529 = vadd.f32 %v3855, %v4528
      %v4530 = vpop.f32.mrb[0].mxu0
      %v4531 = vadd.f32 %v3859, %v4530
      %4532 = vmatprep.mubr.bf16.mxu0 0
      %4533 = vmatmul.mubr.bf16.gmra.mrb[0].mxu0 %v3841
      %v4534 = vpop.f32.mrb[0].mxu0
      %v4535 = vadd.f32 %v3855, %v4534
      %v4536 = vpop.f32.mrb[0].mxu0
      %v4537 = vadd.f32 %v3859, %v4536
      %v4538 = vpop.f32.mrb[0].mxu0
      %v4539 = vadd.f32 %v3855, %v4538
      %v4540 = vpop.f32.mrb[0].mxu0
      %v4541 = vadd.f32 %v3859, %v4540
      %4542 = vmatprep.mubr.bf16.mxu0 0
      %4543 = vmatmul.mubr.bf16.gmra.mrb[0].mxu0 %v3842
      %v4544 = vpop.f32.mrb[0].mxu0
      %v4545 = vadd.f32 %v3855, %v4544
      %v4546 = vpop.f32.mrb[0].mxu0
      %v4547 = vadd.f32 %v3859, %v4546
      %v4548 = vpop.f32.mrb[0].mxu0
      %v4549 = vadd.f32 %v3855, %v4548
      %v4550 = vpop.f32.mrb[0].mxu0
      %v4551 = vadd.f32 %v3859, %v4550
      %4552 = vdwg.mxu0
      %4553 = vmatprep.subr.bf16.mxu0 %v4060
      %4554 = vmatpush1.bf16.msra.mxu0 %v4059
      %4555 = vmatprep.subr.bf16.mxu0 %v4067
      %4556 = vmatpush1.bf16.msra.mxu0 %v4066
      %4557 = vmatprep.subr.bf16.mxu0 %v4074
      %4558 = vmatpush1.bf16.msra.mxu0 %v4073
      %4559 = vmatprep.subr.bf16.mxu0 %v4081
      %4560 = vmatpush1.bf16.msra.mxu0 %v4080
      %4561 = vmatprep.subr.bf16.mxu0 %v4088
      %4562 = vmatpush1.bf16.msra.mxu0 %v4087
      %4563 = vmatprep.subr.bf16.mxu0 %v4095
      %4564 = vmatpush1.bf16.msra.mxu0 %v4094
      %4565 = vmatprep.subr.bf16.mxu0 %v4102
      %4566 = vmatpush1.bf16.msra.mxu0 %v4101
      %4567 = vmatprep.subr.bf16.mxu0 %v4109
      %4568 = vmatpush1.bf16.msra.mxu0 %v4108
      %4569 = vmatprep.subr.bf16.mxu0 0
      %4570 = vmatpush1.bf16.msra.mxu0 0
      %4571 = vmatprep.subr.bf16.mxu0 0
      %4572 = vmatpush1.bf16.msra.mxu0 0
      %4573 = vmatprep.subr.bf16.mxu0 0
      %4574 = vmatpush1.bf16.msra.mxu0 0
      %4575 = vmatprep.subr.bf16.mxu0 0
      %4576 = vmatpush1.bf16.msra.mxu0 0
      %4577 = vmatprep.subr.bf16.mxu0 0
      %4578 = vmatpush1.bf16.msra.mxu0 0
      %4579 = vmatprep.subr.bf16.mxu0 0
      %4580 = vmatpush1.bf16.msra.mxu0 0
      %4581 = vmatprep.subr.bf16.mxu0 0
      %4582 = vmatpush1.bf16.msra.mxu0 0
      %4583 = vmatprep.subr.bf16.mxu0 0
      %4584 = vmatpush1.bf16.msra.mxu0 0
      %4585 = vmatprep.mubr.bf16.mxu0 0
      %4586 = vmatmul.mubr.bf16.gmra.mrb[0].mxu0 %v3827
      %v4587 = vpop.f32.mrb[0].mxu0
      %v4588 = vadd.f32 %v3863, %v4587
      %v4589 = vpop.f32.mrb[0].mxu0
      %v4590 = vadd.f32 %v3867, %v4589
      %v4591 = vpop.f32.mrb[0].mxu0
      %v4592 = vadd.f32 %v3863, %v4591
      %v4593 = vpop.f32.mrb[0].mxu0
      %v4594 = vadd.f32 %v3867, %v4593
      %4595 = vmatprep.mubr.bf16.mxu0 0
      %4596 = vmatmul.mubr.bf16.gmra.mrb[0].mxu0 %v3828
      %v4597 = vpop.f32.mrb[0].mxu0
      %v4598 = vadd.f32 %v3863, %v4597
      %v4599 = vpop.f32.mrb[0].mxu0
      %v4600 = vadd.f32 %v3867, %v4599
      %v4601 = vpop.f32.mrb[0].mxu0
      %v4602 = vadd.f32 %v3863, %v4601
      %v4603 = vpop.f32.mrb[0].mxu0
      %v4604 = vadd.f32 %v3867, %v4603
      %4605 = vmatprep.mubr.bf16.mxu0 0
      %4606 = vmatmul.mubr.bf16.gmra.mrb[0].mxu0 %v3829
      %v4607 = vpop.f32.mrb[0].mxu0
      %v4608 = vadd.f32 %v3863, %v4607
      %v4609 = vpop.f32.mrb[0].mxu0
      %v4610 = vadd.f32 %v3867, %v4609
      %v4611 = vpop.f32.mrb[0].mxu0
      %v4612 = vadd.f32 %v3863, %v4611
      %v4613 = vpop.f32.mrb[0].mxu0
      %v4614 = vadd.f32 %v3867, %v4613
      %4615 = vmatprep.mubr.bf16.mxu0 0
      %4616 = vmatmul.mubr.bf16.gmra.mrb[0].mxu0 %v3830
      %v4617 = vpop.f32.mrb[0].mxu0
      %v4618 = vadd.f32 %v3863, %v4617
      %v4619 = vpop.f32.mrb[0].mxu0
      %v4620 = vadd.f32 %v3867, %v4619
      %v4621 = vpop.f32.mrb[0].mxu0
      %v4622 = vadd.f32 %v3863, %v4621
      %v4623 = vpop.f32.mrb[0].mxu0
      %v4624 = vadd.f32 %v3867, %v4623
      %4625 = vmatprep.mubr.bf16.mxu0 0
      %4626 = vmatmul.mubr.bf16.gmra.mrb[0].mxu0 %v3831
      %v4627 = vpop.f32.mrb[0].mxu0
      %v4628 = vadd.f32 %v3863, %v4627
      %v4629 = vpop.f32.mrb[0].mxu0
      %v4630 = vadd.f32 %v3867, %v4629
      %v4631 = vpop.f32.mrb[0].mxu0
      %v4632 = vadd.f32 %v3863, %v4631
      %v4633 = vpop.f32.mrb[0].mxu0
      %v4634 = vadd.f32 %v3867, %v4633
      %4635 = vmatprep.mubr.bf16.mxu0 0
      %4636 = vmatmul.mubr.bf16.gmra.mrb[0].mxu0 %v3832
      %v4637 = vpop.f32.mrb[0].mxu0
      %v4638 = vadd.f32 %v3863, %v4637
      %v4639 = vpop.f32.mrb[0].mxu0
      %v4640 = vadd.f32 %v3867, %v4639
      %v4641 = vpop.f32.mrb[0].mxu0
      %v4642 = vadd.f32 %v3863, %v4641
      %v4643 = vpop.f32.mrb[0].mxu0
      %v4644 = vadd.f32 %v3867, %v4643
      %4645 = vmatprep.mubr.bf16.mxu0 0
      %4646 = vmatmul.mubr.bf16.gmra.mrb[0].mxu0 %v3833
      %v4647 = vpop.f32.mrb[0].mxu0
      %v4648 = vadd.f32 %v3863, %v4647
      %v4649 = vpop.f32.mrb[0].mxu0
      %v4650 = vadd.f32 %v3867, %v4649
      %v4651 = vpop.f32.mrb[0].mxu0
      %v4652 = vadd.f32 %v3863, %v4651
      %v4653 = vpop.f32.mrb[0].mxu0
      %v4654 = vadd.f32 %v3867, %v4653
      %4655 = vmatprep.mubr.bf16.mxu0 0
      %4656 = vmatmul.mubr.bf16.gmra.mrb[0].mxu0 %v3834
      %v4657 = vpop.f32.mrb[0].mxu0
      %v4658 = vadd.f32 %v3863, %v4657
      %v4659 = vpop.f32.mrb[0].mxu0
      %v4660 = vadd.f32 %v3867, %v4659
      %v4661 = vpop.f32.mrb[0].mxu0
      %v4662 = vadd.f32 %v3863, %v4661
      %v4663 = vpop.f32.mrb[0].mxu0
      %v4664 = vadd.f32 %v3867, %v4663
      %4665 = vmatprep.mubr.bf16.mxu0 0
      %4666 = vmatmul.mubr.bf16.gmra.mrb[0].mxu0 %v3835
      %v4667 = vpop.f32.mrb[0].mxu0
      %v4668 = vadd.f32 %v3863, %v4667
      %v4669 = vpop.f32.mrb[0].mxu0
      %v4670 = vadd.f32 %v3867, %v4669
      %v4671 = vpop.f32.mrb[0].mxu0
      %v4672 = vadd.f32 %v3863, %v4671
      %v4673 = vpop.f32.mrb[0].mxu0
      %v4674 = vadd.f32 %v3867, %v4673
      %4675 = vmatprep.mubr.bf16.mxu0 0
      %4676 = vmatmul.mubr.bf16.gmra.mrb[0].mxu0 %v3836
      %v4677 = vpop.f32.mrb[0].mxu0
      %v4678 = vadd.f32 %v3863, %v4677
      %v4679 = vpop.f32.mrb[0].mxu0
      %v4680 = vadd.f32 %v3867, %v4679
      %v4681 = vpop.f32.mrb[0].mxu0
      %v4682 = vadd.f32 %v3863, %v4681
      %v4683 = vpop.f32.mrb[0].mxu0
      %v4684 = vadd.f32 %v3867, %v4683
      %4685 = vmatprep.mubr.bf16.mxu0 0
      %4686 = vmatmul.mubr.bf16.gmra.mrb[0].mxu0 %v3837
      %v4687 = vpop.f32.mrb[0].mxu0
      %v4688 = vadd.f32 %v3863, %v4687
      %v4689 = vpop.f32.mrb[0].mxu0
      %v4690 = vadd.f32 %v3867, %v4689
      %v4691 = vpop.f32.mrb[0].mxu0
      %v4692 = vadd.f32 %v3863, %v4691
      %v4693 = vpop.f32.mrb[0].mxu0
      %v4694 = vadd.f32 %v3867, %v4693
      %4695 = vmatprep.mubr.bf16.mxu0 0
      %4696 = vmatmul.mubr.bf16.gmra.mrb[0].mxu0 %v3838
      %v4697 = vpop.f32.mrb[0].mxu0
      %v4698 = vadd.f32 %v3863, %v4697
      %v4699 = vpop.f32.mrb[0].mxu0
      %v4700 = vadd.f32 %v3867, %v4699
      %v4701 = vpop.f32.mrb[0].mxu0
      %v4702 = vadd.f32 %v3863, %v4701
      %v4703 = vpop.f32.mrb[0].mxu0
      %v4704 = vadd.f32 %v3867, %v4703
      %4705 = vmatprep.mubr.bf16.mxu0 0
      %4706 = vmatmul.mubr.bf16.gmra.mrb[0].mxu0 %v3839
      %v4707 = vpop.f32.mrb[0].mxu0
      %v4708 = vadd.f32 %v3863, %v4707
      %v4709 = vpop.f32.mrb[0].mxu0
      %v4710 = vadd.f32 %v3867, %v4709
      %v4711 = vpop.f32.mrb[0].mxu0
      %v4712 = vadd.f32 %v3863, %v4711
      %v4713 = vpop.f32.mrb[0].mxu0
      %v4714 = vadd.f32 %v3867, %v4713
      %4715 = vmatprep.mubr.bf16.mxu0 0
      %4716 = vmatmul.mubr.bf16.gmra.mrb[0].mxu0 %v3840
      %v4717 = vpop.f32.mrb[0].mxu0
      %v4718 = vadd.f32 %v3863, %v4717
      %v4719 = vpop.f32.mrb[0].mxu0
      %v4720 = vadd.f32 %v3867, %v4719
      %v4721 = vpop.f32.mrb[0].mxu0
      %v4722 = vadd.f32 %v3863, %v4721
      %v4723 = vpop.f32.mrb[0].mxu0
      %v4724 = vadd.f32 %v3867, %v4723
      %4725 = vmatprep.mubr.bf16.mxu0 0
      %4726 = vmatmul.mubr.bf16.gmra.mrb[0].mxu0 %v3841
      %v4727 = vpop.f32.mrb[0].mxu0
      %v4728 = vadd.f32 %v3863, %v4727
      %v4729 = vpop.f32.mrb[0].mxu0
      %v4730 = vadd.f32 %v3867, %v4729
      %v4731 = vpop.f32.mrb[0].mxu0
      %v4732 = vadd.f32 %v3863, %v4731
      %v4733 = vpop.f32.mrb[0].mxu0
      %v4734 = vadd.f32 %v3867, %v4733
      %4735 = vmatprep.mubr.bf16.mxu0 0
      %4736 = vmatmul.mubr.bf16.gmra.mrb[0].mxu0 %v3842
      %v4737 = vpop.f32.mrb[0].mxu0
      %v4738 = vadd.f32 %v3863, %v4737
      %v4739 = vpop.f32.mrb[0].mxu0
      %v4740 = vadd.f32 %v3867, %v4739
      %v4741 = vpop.f32.mrb[0].mxu0
      %v4742 = vadd.f32 %v3863, %v4741
      %v4743 = vpop.f32.mrb[0].mxu0
      %v4744 = vadd.f32 %v3867, %v4743
      %4745 = vdwg.mxu0
      %4746 = vmatprep.subr.bf16.mxu0 0
      %4747 = vmatpush1.bf16.msra.mxu0 %v4061
      %4748 = vmatprep.subr.bf16.mxu0 0
      %4749 = vmatpush1.bf16.msra.mxu0 %v4068
      %4750 = vmatprep.subr.bf16.mxu0 0
      %4751 = vmatpush1.bf16.msra.mxu0 %v4075
      %4752 = vmatprep.subr.bf16.mxu0 0
      %4753 = vmatpush1.bf16.msra.mxu0 %v4082
      %4754 = vmatprep.subr.bf16.mxu0 0
      %4755 = vmatpush1.bf16.msra.mxu0 %v4089
      %4756 = vmatprep.subr.bf16.mxu0 0
      %4757 = vmatpush1.bf16.msra.mxu0 %v4096
      %4758 = vmatprep.subr.bf16.mxu0 0
      %4759 = vmatpush1.bf16.msra.mxu0 %v4103
      %4760 = vmatprep.subr.bf16.mxu0 0
      %4761 = vmatpush1.bf16.msra.mxu0 %v4110
      %4762 = vmatprep.subr.bf16.mxu0 0
      %4763 = vmatpush1.bf16.msra.mxu0 0
      %4764 = vmatprep.subr.bf16.mxu0 0
      %4765 = vmatpush1.bf16.msra.mxu0 0
      %4766 = vmatprep.subr.bf16.mxu0 0
      %4767 = vmatpush1.bf16.msra.mxu0 0
      %4768 = vmatprep.subr.bf16.mxu0 0
      %4769 = vmatpush1.bf16.msra.mxu0 0
      %4770 = vmatprep.subr.bf16.mxu0 0
      %4771 = vmatpush1.bf16.msra.mxu0 0
      %4772 = vmatprep.subr.bf16.mxu0 0
      %4773 = vmatpush1.bf16.msra.mxu0 0
      %4774 = vmatprep.subr.bf16.mxu0 0
      %4775 = vmatpush1.bf16.msra.mxu0 0
      %4776 = vmatprep.subr.bf16.mxu0 0
      %4777 = vmatpush1.bf16.msra.mxu0 0
      %4778 = vmatprep.mubr.bf16.mxu0 0
      %4779 = vmatmul.mubr.bf16.gmra.mrb[0].mxu0 %v3827
      %v4780 = vpop.f32.mrb[0].mxu0
      %v4781 = vadd.f32 %v3871, %v4780
      %v4782 = vpop.f32.mrb[0].mxu0
      %v4783 = vpop.f32.mrb[0].mxu0
      %v4784 = vadd.f32 %v3871, %v4783
      %v4785 = vpop.f32.mrb[0].mxu0
      %4786 = vmatprep.mubr.bf16.mxu0 0
      %4787 = vmatmul.mubr.bf16.gmra.mrb[0].mxu0 %v3828
      %v4788 = vpop.f32.mrb[0].mxu0
      %v4789 = vadd.f32 %v3871, %v4788
      %v4790 = vpop.f32.mrb[0].mxu0
      %v4791 = vpop.f32.mrb[0].mxu0
      %v4792 = vadd.f32 %v3871, %v4791
      %v4793 = vpop.f32.mrb[0].mxu0
      %4794 = vmatprep.mubr.bf16.mxu0 0
      %4795 = vmatmul.mubr.bf16.gmra.mrb[0].mxu0 %v3829
      %v4796 = vpop.f32.mrb[0].mxu0
      %v4797 = vadd.f32 %v3871, %v4796
      %v4798 = vpop.f32.mrb[0].mxu0
      %v4799 = vpop.f32.mrb[0].mxu0
      %v4800 = vadd.f32 %v3871, %v4799
      %v4801 = vpop.f32.mrb[0].mxu0
      %4802 = vmatprep.mubr.bf16.mxu0 0
      %4803 = vmatmul.mubr.bf16.gmra.mrb[0].mxu0 %v3830
      %v4804 = vpop.f32.mrb[0].mxu0
      %v4805 = vadd.f32 %v3871, %v4804
      %v4806 = vpop.f32.mrb[0].mxu0
      %v4807 = vpop.f32.mrb[0].mxu0
      %v4808 = vadd.f32 %v3871, %v4807
      %v4809 = vpop.f32.mrb[0].mxu0
      %4810 = vmatprep.mubr.bf16.mxu0 0
      %4811 = vmatmul.mubr.bf16.gmra.mrb[0].mxu0 %v3831
      %v4812 = vpop.f32.mrb[0].mxu0
      %v4813 = vadd.f32 %v3871, %v4812
      %v4814 = vpop.f32.mrb[0].mxu0
      %v4815 = vpop.f32.mrb[0].mxu0
      %v4816 = vadd.f32 %v3871, %v4815
      %v4817 = vpop.f32.mrb[0].mxu0
      %4818 = vmatprep.mubr.bf16.mxu0 0
      %4819 = vmatmul.mubr.bf16.gmra.mrb[0].mxu0 %v3832
      %v4820 = vpop.f32.mrb[0].mxu0
      %v4821 = vadd.f32 %v3871, %v4820
      %v4822 = vpop.f32.mrb[0].mxu0
      %v4823 = vpop.f32.mrb[0].mxu0
      %v4824 = vadd.f32 %v3871, %v4823
      %v4825 = vpop.f32.mrb[0].mxu0
      %4826 = vmatprep.mubr.bf16.mxu0 0
      %4827 = vmatmul.mubr.bf16.gmra.mrb[0].mxu0 %v3833
      %v4828 = vpop.f32.mrb[0].mxu0
      %v4829 = vadd.f32 %v3871, %v4828
      %v4830 = vpop.f32.mrb[0].mxu0
      %v4831 = vpop.f32.mrb[0].mxu0
      %v4832 = vadd.f32 %v3871, %v4831
      %v4833 = vpop.f32.mrb[0].mxu0
      %4834 = vmatprep.mubr.bf16.mxu0 0
      %4835 = vmatmul.mubr.bf16.gmra.mrb[0].mxu0 %v3834
      %v4836 = vpop.f32.mrb[0].mxu0
      %v4837 = vadd.f32 %v3871, %v4836
      %v4838 = vpop.f32.mrb[0].mxu0
      %v4839 = vpop.f32.mrb[0].mxu0
      %v4840 = vadd.f32 %v3871, %v4839
      %v4841 = vpop.f32.mrb[0].mxu0
      %4842 = vmatprep.mubr.bf16.mxu0 0
      %4843 = vmatmul.mubr.bf16.gmra.mrb[0].mxu0 %v3835
      %v4844 = vpop.f32.mrb[0].mxu0
      %v4845 = vadd.f32 %v3871, %v4844
      %v4846 = vpop.f32.mrb[0].mxu0
      %v4847 = vpop.f32.mrb[0].mxu0
      %v4848 = vadd.f32 %v3871, %v4847
      %v4849 = vpop.f32.mrb[0].mxu0
      %4850 = vmatprep.mubr.bf16.mxu0 0
      %4851 = vmatmul.mubr.bf16.gmra.mrb[0].mxu0 %v3836
      %v4852 = vpop.f32.mrb[0].mxu0
      %v4853 = vadd.f32 %v3871, %v4852
      %v4854 = vpop.f32.mrb[0].mxu0
      %v4855 = vpop.f32.mrb[0].mxu0
      %v4856 = vadd.f32 %v3871, %v4855
      %v4857 = vpop.f32.mrb[0].mxu0
      %4858 = vmatprep.mubr.bf16.mxu0 0
      %4859 = vmatmul.mubr.bf16.gmra.mrb[0].mxu0 %v3837
      %v4860 = vpop.f32.mrb[0].mxu0
      %v4861 = vadd.f32 %v3871, %v4860
      %v4862 = vpop.f32.mrb[0].mxu0
      %v4863 = vpop.f32.mrb[0].mxu0
      %v4864 = vadd.f32 %v3871, %v4863
      %v4865 = vpop.f32.mrb[0].mxu0
      %4866 = vmatprep.mubr.bf16.mxu0 0
      %4867 = vmatmul.mubr.bf16.gmra.mrb[0].mxu0 %v3838
      %v4868 = vpop.f32.mrb[0].mxu0
      %v4869 = vadd.f32 %v3871, %v4868
      %v4870 = vpop.f32.mrb[0].mxu0
      %v4871 = vpop.f32.mrb[0].mxu0
      %v4872 = vadd.f32 %v3871, %v4871
      %v4873 = vpop.f32.mrb[0].mxu0
      %4874 = vmatprep.mubr.bf16.mxu0 0
      %4875 = vmatmul.mubr.bf16.gmra.mrb[0].mxu0 %v3839
      %v4876 = vpop.f32.mrb[0].mxu0
      %v4877 = vadd.f32 %v3871, %v4876
      %v4878 = vpop.f32.mrb[0].mxu0
      %v4879 = vpop.f32.mrb[0].mxu0
      %v4880 = vadd.f32 %v3871, %v4879
      %v4881 = vpop.f32.mrb[0].mxu0
      %4882 = vmatprep.mubr.bf16.mxu0 0
      %4883 = vmatmul.mubr.bf16.gmra.mrb[0].mxu0 %v3840
      %v4884 = vpop.f32.mrb[0].mxu0
      %v4885 = vadd.f32 %v3871, %v4884
      %v4886 = vpop.f32.mrb[0].mxu0
      %v4887 = vpop.f32.mrb[0].mxu0
      %v4888 = vadd.f32 %v3871, %v4887
      %v4889 = vpop.f32.mrb[0].mxu0
      %4890 = vmatprep.mubr.bf16.mxu0 0
      %4891 = vmatmul.mubr.bf16.gmra.mrb[0].mxu0 %v3841
      %v4892 = vpop.f32.mrb[0].mxu0
      %v4893 = vadd.f32 %v3871, %v4892
      %v4894 = vpop.f32.mrb[0].mxu0
      %v4895 = vpop.f32.mrb[0].mxu0
      %v4896 = vadd.f32 %v3871, %v4895
      %v4897 = vpop.f32.mrb[0].mxu0
      %4898 = vmatprep.mubr.bf16.mxu0 0
      %4899 = vmatmul.mubr.bf16.gmra.mrb[0].mxu0 %v3842
      %v4900 = vpop.f32.mrb[0].mxu0
      %v4901 = vadd.f32 %v3871, %v4900
      %v4902 = vpop.f32.mrb[0].mxu0
      %v4903 = vpop.f32.mrb[0].mxu0
      %v4904 = vadd.f32 %v3871, %v4903
      %v4905 = vpop.f32.mrb[0].mxu0
      %4906 = vdwg.mxu0
      %v4907 = vmul.f32 %v4202, 0.5
      %v4908 = vmul.f32 %v4204, 0.5
      %v4909 = vmul.f32 %v4395, 0.5
      %v4910 = vmul.f32 %v4397, 0.5
      %v4911 = vmul.f32 %v4588, 0.5
      %v4912 = vmul.f32 %v4590, 0.5
      %v4913 = vmul.f32 %v4781, 0.5
      %v4914 = vmul.f32 %v4206, 0.5
      %v4915 = vmul.f32 %v4208, 0.5
      %v4916 = vmul.f32 %v4399, 0.5
      %v4917 = vmul.f32 %v4401, 0.5
      %v4918 = vmul.f32 %v4592, 0.5
      %v4919 = vmul.f32 %v4594, 0.5
      %v4920 = vmul.f32 %v4784, 0.5
      %v4921 = vmul.f32 %v4212, 0.5
      %v4922 = vmul.f32 %v4214, 0.5
      %v4923 = vmul.f32 %v4405, 0.5
      %v4924 = vmul.f32 %v4407, 0.5
      %v4925 = vmul.f32 %v4598, 0.5
      %v4926 = vmul.f32 %v4600, 0.5
      %v4927 = vmul.f32 %v4789, 0.5
      %v4928 = vmul.f32 %v4216, 0.5
      %v4929 = vmul.f32 %v4218, 0.5
      %v4930 = vmul.f32 %v4409, 0.5
      %v4931 = vmul.f32 %v4411, 0.5
      %v4932 = vmul.f32 %v4602, 0.5
      %v4933 = vmul.f32 %v4604, 0.5
      %v4934 = vmul.f32 %v4792, 0.5
      %v4935 = vmul.f32 %v4222, 0.5
      %v4936 = vmul.f32 %v4224, 0.5
      %v4937 = vmul.f32 %v4415, 0.5
      %v4938 = vmul.f32 %v4417, 0.5
      %v4939 = vmul.f32 %v4608, 0.5
      %v4940 = vmul.f32 %v4610, 0.5
      %v4941 = vmul.f32 %v4797, 0.5
      %v4942 = vmul.f32 %v4226, 0.5
      %v4943 = vmul.f32 %v4228, 0.5
      %v4944 = vmul.f32 %v4419, 0.5
      %v4945 = vmul.f32 %v4421, 0.5
      %v4946 = vmul.f32 %v4612, 0.5
      %v4947 = vmul.f32 %v4614, 0.5
      %v4948 = vmul.f32 %v4800, 0.5
      %v4949 = vmul.f32 %v4232, 0.5
      %v4950 = vmul.f32 %v4234, 0.5
      %v4951 = vmul.f32 %v4425, 0.5
      %v4952 = vmul.f32 %v4427, 0.5
      %v4953 = vmul.f32 %v4618, 0.5
      %v4954 = vmul.f32 %v4620, 0.5
      %v4955 = vmul.f32 %v4805, 0.5
      %v4956 = vmul.f32 %v4236, 0.5
      %v4957 = vmul.f32 %v4238, 0.5
      %v4958 = vmul.f32 %v4429, 0.5
      %v4959 = vmul.f32 %v4431, 0.5
      %v4960 = vmul.f32 %v4622, 0.5
      %v4961 = vmul.f32 %v4624, 0.5
      %v4962 = vmul.f32 %v4808, 0.5
      %v4963 = vmul.f32 %v4242, 0.5
      %v4964 = vmul.f32 %v4244, 0.5
      %v4965 = vmul.f32 %v4435, 0.5
      %v4966 = vmul.f32 %v4437, 0.5
      %v4967 = vmul.f32 %v4628, 0.5
      %v4968 = vmul.f32 %v4630, 0.5
      %v4969 = vmul.f32 %v4813, 0.5
      %v4970 = vmul.f32 %v4246, 0.5
      %v4971 = vmul.f32 %v4248, 0.5
      %v4972 = vmul.f32 %v4439, 0.5
      %v4973 = vmul.f32 %v4441, 0.5
      %v4974 = vmul.f32 %v4632, 0.5
      %v4975 = vmul.f32 %v4634, 0.5
      %v4976 = vmul.f32 %v4816, 0.5
      %v4977 = vmul.f32 %v4252, 0.5
      %v4978 = vmul.f32 %v4254, 0.5
      %v4979 = vmul.f32 %v4445, 0.5
      %v4980 = vmul.f32 %v4447, 0.5
      %v4981 = vmul.f32 %v4638, 0.5
      %v4982 = vmul.f32 %v4640, 0.5
      %v4983 = vmul.f32 %v4821, 0.5
      %v4984 = vmul.f32 %v4256, 0.5
      %v4985 = vmul.f32 %v4258, 0.5
      %v4986 = vmul.f32 %v4449, 0.5
      %v4987 = vmul.f32 %v4451, 0.5
      %v4988 = vmul.f32 %v4642, 0.5
      %v4989 = vmul.f32 %v4644, 0.5
      %v4990 = vmul.f32 %v4824, 0.5
      %v4991 = vmul.f32 %v4262, 0.5
      %v4992 = vmul.f32 %v4264, 0.5
      %v4993 = vmul.f32 %v4455, 0.5
      %v4994 = vmul.f32 %v4457, 0.5
      %v4995 = vmul.f32 %v4648, 0.5
      %v4996 = vmul.f32 %v4650, 0.5
      %v4997 = vmul.f32 %v4829, 0.5
      %v4998 = vmul.f32 %v4266, 0.5
      %v4999 = vmul.f32 %v4268, 0.5
      %v5000 = vmul.f32 %v4459, 0.5
      %v5001 = vmul.f32 %v4461, 0.5
      %v5002 = vmul.f32 %v4652, 0.5
      %v5003 = vmul.f32 %v4654, 0.5
      %v5004 = vmul.f32 %v4832, 0.5
      %v5005 = vmul.f32 %v4272, 0.5
      %v5006 = vmul.f32 %v4274, 0.5
      %v5007 = vmul.f32 %v4465, 0.5
      %v5008 = vmul.f32 %v4467, 0.5
      %v5009 = vmul.f32 %v4658, 0.5
      %v5010 = vmul.f32 %v4660, 0.5
      %v5011 = vmul.f32 %v4837, 0.5
      %v5012 = vmul.f32 %v4276, 0.5
      %v5013 = vmul.f32 %v4278, 0.5
      %v5014 = vmul.f32 %v4469, 0.5
      %v5015 = vmul.f32 %v4471, 0.5
      %v5016 = vmul.f32 %v4662, 0.5
      %v5017 = vmul.f32 %v4664, 0.5
      %v5018 = vmul.f32 %v4840, 0.5
      %v5019 = vmul.f32 %v4282, 0.5
      %v5020 = vmul.f32 %v4284, 0.5
      %v5021 = vmul.f32 %v4475, 0.5
      %v5022 = vmul.f32 %v4477, 0.5
      %v5023 = vmul.f32 %v4668, 0.5
      %v5024 = vmul.f32 %v4670, 0.5
      %v5025 = vmul.f32 %v4845, 0.5
      %v5026 = vmul.f32 %v4286, 0.5
      %v5027 = vmul.f32 %v4288, 0.5
      %v5028 = vmul.f32 %v4479, 0.5
      %v5029 = vmul.f32 %v4481, 0.5
      %v5030 = vmul.f32 %v4672, 0.5
      %v5031 = vmul.f32 %v4674, 0.5
      %v5032 = vmul.f32 %v4848, 0.5
      %v5033 = vmul.f32 %v4292, 0.5
      %v5034 = vmul.f32 %v4294, 0.5
      %v5035 = vmul.f32 %v4485, 0.5
      %v5036 = vmul.f32 %v4487, 0.5
      %v5037 = vmul.f32 %v4678, 0.5
      %v5038 = vmul.f32 %v4680, 0.5
      %v5039 = vmul.f32 %v4853, 0.5
      %v5040 = vmul.f32 %v4296, 0.5
      %v5041 = vmul.f32 %v4298, 0.5
      %v5042 = vmul.f32 %v4489, 0.5
      %v5043 = vmul.f32 %v4491, 0.5
      %v5044 = vmul.f32 %v4682, 0.5
      %v5045 = vmul.f32 %v4684, 0.5
      %v5046 = vmul.f32 %v4856, 0.5
      %v5047 = vmul.f32 %v4302, 0.5
      %v5048 = vmul.f32 %v4304, 0.5
      %v5049 = vmul.f32 %v4495, 0.5
      %v5050 = vmul.f32 %v4497, 0.5
      %v5051 = vmul.f32 %v4688, 0.5
      %v5052 = vmul.f32 %v4690, 0.5
      %v5053 = vmul.f32 %v4861, 0.5
      %v5054 = vmul.f32 %v4306, 0.5
      %v5055 = vmul.f32 %v4308, 0.5
      %v5056 = vmul.f32 %v4499, 0.5
      %v5057 = vmul.f32 %v4501, 0.5
      %v5058 = vmul.f32 %v4692, 0.5
      %v5059 = vmul.f32 %v4694, 0.5
      %v5060 = vmul.f32 %v4864, 0.5
      %v5061 = vmul.f32 %v4312, 0.5
      %v5062 = vmul.f32 %v4314, 0.5
      %v5063 = vmul.f32 %v4505, 0.5
      %v5064 = vmul.f32 %v4507, 0.5
      %v5065 = vmul.f32 %v4698, 0.5
      %v5066 = vmul.f32 %v4700, 0.5
      %v5067 = vmul.f32 %v4869, 0.5
      %v5068 = vmul.f32 %v4316, 0.5
      %v5069 = vmul.f32 %v4318, 0.5
      %v5070 = vmul.f32 %v4509, 0.5
      %v5071 = vmul.f32 %v4511, 0.5
      %v5072 = vmul.f32 %v4702, 0.5
      %v5073 = vmul.f32 %v4704, 0.5
      %v5074 = vmul.f32 %v4872, 0.5
      %v5075 = vmul.f32 %v4322, 0.5
      %v5076 = vmul.f32 %v4324, 0.5
      %v5077 = vmul.f32 %v4515, 0.5
      %v5078 = vmul.f32 %v4517, 0.5
      %v5079 = vmul.f32 %v4708, 0.5
      %v5080 = vmul.f32 %v4710, 0.5
      %v5081 = vmul.f32 %v4877, 0.5
      %v5082 = vmul.f32 %v4326, 0.5
      %v5083 = vmul.f32 %v4328, 0.5
      %v5084 = vmul.f32 %v4519, 0.5
      %v5085 = vmul.f32 %v4521, 0.5
      %v5086 = vmul.f32 %v4712, 0.5
      %v5087 = vmul.f32 %v4714, 0.5
      %v5088 = vmul.f32 %v4880, 0.5
      %v5089 = vmul.f32 %v4332, 0.5
      %v5090 = vmul.f32 %v4334, 0.5
      %v5091 = vmul.f32 %v4525, 0.5
      %v5092 = vmul.f32 %v4527, 0.5
      %v5093 = vmul.f32 %v4718, 0.5
      %v5094 = vmul.f32 %v4720, 0.5
      %v5095 = vmul.f32 %v4885, 0.5
      %v5096 = vmul.f32 %v4336, 0.5
      %v5097 = vmul.f32 %v4338, 0.5
      %v5098 = vmul.f32 %v4529, 0.5
      %v5099 = vmul.f32 %v4531, 0.5
      %v5100 = vmul.f32 %v4722, 0.5
      %v5101 = vmul.f32 %v4724, 0.5
      %v5102 = vmul.f32 %v4888, 0.5
      %v5103 = vmul.f32 %v4342, 0.5
      %v5104 = vmul.f32 %v4344, 0.5
      %v5105 = vmul.f32 %v4535, 0.5
      %v5106 = vmul.f32 %v4537, 0.5
      %v5107 = vmul.f32 %v4728, 0.5
      %v5108 = vmul.f32 %v4730, 0.5
      %v5109 = vmul.f32 %v4893, 0.5
      %v5110 = vmul.f32 %v4346, 0.5
      %v5111 = vmul.f32 %v4348, 0.5
      %v5112 = vmul.f32 %v4539, 0.5
      %v5113 = vmul.f32 %v4541, 0.5
      %v5114 = vmul.f32 %v4732, 0.5
      %v5115 = vmul.f32 %v4734, 0.5
      %v5116 = vmul.f32 %v4896, 0.5
      %v5117 = vmul.f32 %v4352, 0.5
      %v5118 = vmul.f32 %v4354, 0.5
      %v5119 = vmul.f32 %v4545, 0.5
      %v5120 = vmul.f32 %v4547, 0.5
      %v5121 = vmul.f32 %v4738, 0.5
      %v5122 = vmul.f32 %v4740, 0.5
      %v5123 = vmul.f32 %v4901, 0.5
      %v5124 = vmul.f32 %v4356, 0.5
      %v5125 = vmul.f32 %v4358, 0.5
      %v5126 = vmul.f32 %v4549, 0.5
      %v5127 = vmul.f32 %v4551, 0.5
      %v5128 = vmul.f32 %v4742, 0.5
      %v5129 = vmul.f32 %v4744, 0.5
      %v5130 = vmul.f32 %v4904, 0.5
      %v5131 = vtanh.pop %v4907
      %v5132 = vtanh.pop %v4908
      %v5133 = vtanh.pop %v4909
      %v5134 = vtanh.pop %v4910
      %v5135 = vtanh.pop %v4911
      %v5136 = vtanh.pop %v4912
      %v5137 = vtanh.pop %v4913
      %v5138 = vtanh.pop %v4914
      %v5139 = vtanh.pop %v4915
      %v5140 = vtanh.pop %v4916
      %v5141 = vtanh.pop %v4917
      %v5142 = vtanh.pop %v4918
      %v5143 = vtanh.pop %v4919
      %v5144 = vtanh.pop %v4920
      %v5145 = vtanh.pop %v4921
      %v5146 = vtanh.pop %v4922
      %v5147 = vtanh.pop %v4923
      %v5148 = vtanh.pop %v4924
      %v5149 = vtanh.pop %v4925
      %v5150 = vtanh.pop %v4926
      %v5151 = vtanh.pop %v4927
      %v5152 = vtanh.pop %v4928
      %v5153 = vtanh.pop %v4929
      %v5154 = vtanh.pop %v4930
      %v5155 = vtanh.pop %v4931
      %v5156 = vtanh.pop %v4932
      %v5157 = vtanh.pop %v4933
      %v5158 = vtanh.pop %v4934
      %v5159 = vtanh.pop %v4935
      %v5160 = vtanh.pop %v4936
      %v5161 = vtanh.pop %v4937
      %v5162 = vtanh.pop %v4938
      %v5163 = vtanh.pop %v4939
      %v5164 = vtanh.pop %v4940
      %v5165 = vtanh.pop %v4941
      %v5166 = vtanh.pop %v4942
      %v5167 = vtanh.pop %v4943
      %v5168 = vtanh.pop %v4944
      %v5169 = vtanh.pop %v4945
      %v5170 = vtanh.pop %v4946
      %v5171 = vtanh.pop %v4947
      %v5172 = vtanh.pop %v4948
      %v5173 = vtanh.pop %v4949
      %v5174 = vtanh.pop %v4950
      %v5175 = vtanh.pop %v4951
      %v5176 = vtanh.pop %v4952
      %v5177 = vtanh.pop %v4953
      %v5178 = vtanh.pop %v4954
      %v5179 = vtanh.pop %v4955
      %v5180 = vtanh.pop %v4956
      %v5181 = vtanh.pop %v4957
      %v5182 = vtanh.pop %v4958
      %v5183 = vtanh.pop %v4959
      %v5184 = vtanh.pop %v4960
      %v5185 = vtanh.pop %v4961
      %v5186 = vtanh.pop %v4962
      %v5187 = vtanh.pop %v4963
      %v5188 = vtanh.pop %v4964
      %v5189 = vtanh.pop %v4965
      %v5190 = vtanh.pop %v4966
      %v5191 = vtanh.pop %v4967
      %v5192 = vtanh.pop %v4968
      %v5193 = vtanh.pop %v4969
      %v5194 = vtanh.pop %v4970
      %v5195 = vtanh.pop %v4971
      %v5196 = vtanh.pop %v4972
      %v5197 = vtanh.pop %v4973
      %v5198 = vtanh.pop %v4974
      %v5199 = vtanh.pop %v4975
      %v5200 = vtanh.pop %v4976
      %v5201 = vtanh.pop %v4977
      %v5202 = vtanh.pop %v4978
      %v5203 = vtanh.pop %v4979
      %v5204 = vtanh.pop %v4980
      %v5205 = vtanh.pop %v4981
      %v5206 = vtanh.pop %v4982
      %v5207 = vtanh.pop %v4983
      %v5208 = vtanh.pop %v4984
      %v5209 = vtanh.pop %v4985
      %v5210 = vtanh.pop %v4986
      %v5211 = vtanh.pop %v4987
      %v5212 = vtanh.pop %v4988
      %v5213 = vtanh.pop %v4989
      %v5214 = vtanh.pop %v4990
      %v5215 = vtanh.pop %v4991
      %v5216 = vtanh.pop %v4992
      %v5217 = vtanh.pop %v4993
      %v5218 = vtanh.pop %v4994
      %v5219 = vtanh.pop %v4995
      %v5220 = vtanh.pop %v4996
      %v5221 = vtanh.pop %v4997
      %v5222 = vtanh.pop %v4998
      %v5223 = vtanh.pop %v4999
      %v5224 = vtanh.pop %v5000
      %v5225 = vtanh.pop %v5001
      %v5226 = vtanh.pop %v5002
      %v5227 = vtanh.pop %v5003
      %v5228 = vtanh.pop %v5004
      %v5229 = vtanh.pop %v5005
      %v5230 = vtanh.pop %v5006
      %v5231 = vtanh.pop %v5007
      %v5232 = vtanh.pop %v5008
      %v5233 = vtanh.pop %v5009
      %v5234 = vtanh.pop %v5010
      %v5235 = vtanh.pop %v5011
      %v5236 = vtanh.pop %v5012
      %v5237 = vtanh.pop %v5013
      %v5238 = vtanh.pop %v5014
      %v5239 = vtanh.pop %v5015
      %v5240 = vtanh.pop %v5016
      %v5241 = vtanh.pop %v5017
      %v5242 = vtanh.pop %v5018
      %v5243 = vtanh.pop %v5019
      %v5244 = vtanh.pop %v5020
      %v5245 = vtanh.pop %v5021
      %v5246 = vtanh.pop %v5022
      %v5247 = vtanh.pop %v5023
      %v5248 = vtanh.pop %v5024
      %v5249 = vtanh.pop %v5025
      %v5250 = vtanh.pop %v5026
      %v5251 = vtanh.pop %v5027
      %v5252 = vtanh.pop %v5028
      %v5253 = vtanh.pop %v5029
      %v5254 = vtanh.pop %v5030
      %v5255 = vtanh.pop %v5031
      %v5256 = vtanh.pop %v5032
      %v5257 = vtanh.pop %v5033
      %v5258 = vtanh.pop %v5034
      %v5259 = vtanh.pop %v5035
      %v5260 = vtanh.pop %v5036
      %v5261 = vtanh.pop %v5037
      %v5262 = vtanh.pop %v5038
      %v5263 = vtanh.pop %v5039
      %v5264 = vtanh.pop %v5040
      %v5265 = vtanh.pop %v5041
      %v5266 = vtanh.pop %v5042
      %v5267 = vtanh.pop %v5043
      %v5268 = vtanh.pop %v5044
      %v5269 = vtanh.pop %v5045
      %v5270 = vtanh.pop %v5046
      %v5271 = vtanh.pop %v5047
      %v5272 = vtanh.pop %v5048
      %v5273 = vtanh.pop %v5049
      %v5274 = vtanh.pop %v5050
      %v5275 = vtanh.pop %v5051
      %v5276 = vtanh.pop %v5052
      %v5277 = vtanh.pop %v5053
      %v5278 = vtanh.pop %v5054
      %v5279 = vtanh.pop %v5055
      %v5280 = vtanh.pop %v5056
      %v5281 = vtanh.pop %v5057
      %v5282 = vtanh.pop %v5058
      %v5283 = vtanh.pop %v5059
      %v5284 = vtanh.pop %v5060
      %v5285 = vtanh.pop %v5061
      %v5286 = vtanh.pop %v5062
      %v5287 = vtanh.pop %v5063
      %v5288 = vtanh.pop %v5064
      %v5289 = vtanh.pop %v5065
      %v5290 = vtanh.pop %v5066
      %v5291 = vtanh.pop %v5067
      %v5292 = vtanh.pop %v5068
      %v5293 = vtanh.pop %v5069
      %v5294 = vtanh.pop %v5070
      %v5295 = vtanh.pop %v5071
      %v5296 = vtanh.pop %v5072
      %v5297 = vtanh.pop %v5073
      %v5298 = vtanh.pop %v5074
      %v5299 = vtanh.pop %v5075
      %v5300 = vtanh.pop %v5076
      %v5301 = vtanh.pop %v5077
      %v5302 = vtanh.pop %v5078
      %v5303 = vtanh.pop %v5079
      %v5304 = vtanh.pop %v5080
      %v5305 = vtanh.pop %v5081
      %v5306 = vtanh.pop %v5082
      %v5307 = vtanh.pop %v5083
      %v5308 = vtanh.pop %v5084
      %v5309 = vtanh.pop %v5085
      %v5310 = vtanh.pop %v5086
      %v5311 = vtanh.pop %v5087
      %v5312 = vtanh.pop %v5088
      %v5313 = vtanh.pop %v5089
      %v5314 = vtanh.pop %v5090
      %v5315 = vtanh.pop %v5091
      %v5316 = vtanh.pop %v5092
      %v5317 = vtanh.pop %v5093
      %v5318 = vtanh.pop %v5094
      %v5319 = vtanh.pop %v5095
      %v5320 = vtanh.pop %v5096
      %v5321 = vtanh.pop %v5097
      %v5322 = vtanh.pop %v5098
      %v5323 = vtanh.pop %v5099
      %v5324 = vtanh.pop %v5100
      %v5325 = vtanh.pop %v5101
      %v5326 = vtanh.pop %v5102
      %v5327 = vtanh.pop %v5103
      %v5328 = vtanh.pop %v5104
      %v5329 = vtanh.pop %v5105
      %v5330 = vtanh.pop %v5106
      %v5331 = vtanh.pop %v5107
      %v5332 = vtanh.pop %v5108
      %v5333 = vtanh.pop %v5109
      %v5334 = vtanh.pop %v5110
      %v5335 = vtanh.pop %v5111
      %v5336 = vtanh.pop %v5112
      %v5337 = vtanh.pop %v5113
      %v5338 = vtanh.pop %v5114
      %v5339 = vtanh.pop %v5115
      %v5340 = vtanh.pop %v5116
      %v5341 = vtanh.pop %v5117
      %v5342 = vtanh.pop %v5118
      %v5343 = vtanh.pop %v5119
      %v5344 = vtanh.pop %v5120
      %v5345 = vtanh.pop %v5121
      %v5346 = vtanh.pop %v5122
      %v5347 = vtanh.pop %v5123
      %v5348 = vtanh.pop %v5124
      %v5349 = vtanh.pop %v5125
      %v5350 = vtanh.pop %v5126
      %v5351 = vtanh.pop %v5127
      %v5352 = vtanh.pop %v5128
      %v5353 = vtanh.pop %v5129
      %v5354 = vtanh.pop %v5130
      %v5355 = vadd.f32 %v5131, 1.0
      %v5356 = vadd.f32 %v5132, 1.0
      %v5357 = vadd.f32 %v5133, 1.0
      %v5358 = vadd.f32 %v5134, 1.0
      %v5359 = vadd.f32 %v5135, 1.0
      %v5360 = vadd.f32 %v5136, 1.0
      %v5361 = vadd.f32 %v5137, 1.0
      %v5362 = vadd.f32 %v5138, 1.0
      %v5363 = vadd.f32 %v5139, 1.0
      %v5364 = vadd.f32 %v5140, 1.0
      %v5365 = vadd.f32 %v5141, 1.0
      %v5366 = vadd.f32 %v5142, 1.0
      %v5367 = vadd.f32 %v5143, 1.0
      %v5368 = vadd.f32 %v5144, 1.0
      %v5369 = vadd.f32 %v5145, 1.0
      %v5370 = vadd.f32 %v5146, 1.0
      %v5371 = vadd.f32 %v5147, 1.0
      %v5372 = vadd.f32 %v5148, 1.0
      %v5373 = vadd.f32 %v5149, 1.0
      %v5374 = vadd.f32 %v5150, 1.0
      %v5375 = vadd.f32 %v5151, 1.0
      %v5376 = vadd.f32 %v5152, 1.0
      %v5377 = vadd.f32 %v5153, 1.0
      %v5378 = vadd.f32 %v5154, 1.0
      %v5379 = vadd.f32 %v5155, 1.0
      %v5380 = vadd.f32 %v5156, 1.0
      %v5381 = vadd.f32 %v5157, 1.0
      %v5382 = vadd.f32 %v5158, 1.0
      %v5383 = vadd.f32 %v5159, 1.0
      %v5384 = vadd.f32 %v5160, 1.0
      %v5385 = vadd.f32 %v5161, 1.0
      %v5386 = vadd.f32 %v5162, 1.0
      %v5387 = vadd.f32 %v5163, 1.0
      %v5388 = vadd.f32 %v5164, 1.0
      %v5389 = vadd.f32 %v5165, 1.0
      %v5390 = vadd.f32 %v5166, 1.0
      %v5391 = vadd.f32 %v5167, 1.0
      %v5392 = vadd.f32 %v5168, 1.0
      %v5393 = vadd.f32 %v5169, 1.0
      %v5394 = vadd.f32 %v5170, 1.0
      %v5395 = vadd.f32 %v5171, 1.0
      %v5396 = vadd.f32 %v5172, 1.0
      %v5397 = vadd.f32 %v5173, 1.0
      %v5398 = vadd.f32 %v5174, 1.0
      %v5399 = vadd.f32 %v5175, 1.0
      %v5400 = vadd.f32 %v5176, 1.0
      %v5401 = vadd.f32 %v5177, 1.0
      %v5402 = vadd.f32 %v5178, 1.0
      %v5403 = vadd.f32 %v5179, 1.0
      %v5404 = vadd.f32 %v5180, 1.0
      %v5405 = vadd.f32 %v5181, 1.0
      %v5406 = vadd.f32 %v5182, 1.0
      %v5407 = vadd.f32 %v5183, 1.0
      %v5408 = vadd.f32 %v5184, 1.0
      %v5409 = vadd.f32 %v5185, 1.0
      %v5410 = vadd.f32 %v5186, 1.0
      %v5411 = vadd.f32 %v5187, 1.0
      %v5412 = vadd.f32 %v5188, 1.0
      %v5413 = vadd.f32 %v5189, 1.0
      %v5414 = vadd.f32 %v5190, 1.0
      %v5415 = vadd.f32 %v5191, 1.0
      %v5416 = vadd.f32 %v5192, 1.0
      %v5417 = vadd.f32 %v5193, 1.0
      %v5418 = vadd.f32 %v5194, 1.0
      %v5419 = vadd.f32 %v5195, 1.0
      %v5420 = vadd.f32 %v5196, 1.0
      %v5421 = vadd.f32 %v5197, 1.0
      %v5422 = vadd.f32 %v5198, 1.0
      %v5423 = vadd.f32 %v5199, 1.0
      %v5424 = vadd.f32 %v5200, 1.0
      %v5425 = vadd.f32 %v5201, 1.0
      %v5426 = vadd.f32 %v5202, 1.0
      %v5427 = vadd.f32 %v5203, 1.0
      %v5428 = vadd.f32 %v5204, 1.0
      %v5429 = vadd.f32 %v5205, 1.0
      %v5430 = vadd.f32 %v5206, 1.0
      %v5431 = vadd.f32 %v5207, 1.0
      %v5432 = vadd.f32 %v5208, 1.0
      %v5433 = vadd.f32 %v5209, 1.0
      %v5434 = vadd.f32 %v5210, 1.0
      %v5435 = vadd.f32 %v5211, 1.0
      %v5436 = vadd.f32 %v5212, 1.0
      %v5437 = vadd.f32 %v5213, 1.0
      %v5438 = vadd.f32 %v5214, 1.0
      %v5439 = vadd.f32 %v5215, 1.0
      %v5440 = vadd.f32 %v5216, 1.0
      %v5441 = vadd.f32 %v5217, 1.0
      %v5442 = vadd.f32 %v5218, 1.0
      %v5443 = vadd.f32 %v5219, 1.0
      %v5444 = vadd.f32 %v5220, 1.0
      %v5445 = vadd.f32 %v5221, 1.0
      %v5446 = vadd.f32 %v5222, 1.0
      %v5447 = vadd.f32 %v5223, 1.0
      %v5448 = vadd.f32 %v5224, 1.0
      %v5449 = vadd.f32 %v5225, 1.0
      %v5450 = vadd.f32 %v5226, 1.0
      %v5451 = vadd.f32 %v5227, 1.0
      %v5452 = vadd.f32 %v5228, 1.0
      %v5453 = vadd.f32 %v5229, 1.0
      %v5454 = vadd.f32 %v5230, 1.0
      %v5455 = vadd.f32 %v5231, 1.0
      %v5456 = vadd.f32 %v5232, 1.0
      %v5457 = vadd.f32 %v5233, 1.0
      %v5458 = vadd.f32 %v5234, 1.0
      %v5459 = vadd.f32 %v5235, 1.0
      %v5460 = vadd.f32 %v5236, 1.0
      %v5461 = vadd.f32 %v5237, 1.0
      %v5462 = vadd.f32 %v5238, 1.0
      %v5463 = vadd.f32 %v5239, 1.0
      %v5464 = vadd.f32 %v5240, 1.0
      %v5465 = vadd.f32 %v5241, 1.0
      %v5466 = vadd.f32 %v5242, 1.0
      %v5467 = vadd.f32 %v5243, 1.0
      %v5468 = vadd.f32 %v5244, 1.0
      %v5469 = vadd.f32 %v5245, 1.0
      %v5470 = vadd.f32 %v5246, 1.0
      %v5471 = vadd.f32 %v5247, 1.0
      %v5472 = vadd.f32 %v5248, 1.0
      %v5473 = vadd.f32 %v5249, 1.0
      %v5474 = vadd.f32 %v5250, 1.0
      %v5475 = vadd.f32 %v5251, 1.0
      %v5476 = vadd.f32 %v5252, 1.0
      %v5477 = vadd.f32 %v5253, 1.0
      %v5478 = vadd.f32 %v5254, 1.0
      %v5479 = vadd.f32 %v5255, 1.0
      %v5480 = vadd.f32 %v5256, 1.0
      %v5481 = vadd.f32 %v5257, 1.0
      %v5482 = vadd.f32 %v5258, 1.0
      %v5483 = vadd.f32 %v5259, 1.0
      %v5484 = vadd.f32 %v5260, 1.0
      %v5485 = vadd.f32 %v5261, 1.0
      %v5486 = vadd.f32 %v5262, 1.0
      %v5487 = vadd.f32 %v5263, 1.0
      %v5488 = vadd.f32 %v5264, 1.0
      %v5489 = vadd.f32 %v5265, 1.0
      %v5490 = vadd.f32 %v5266, 1.0
      %v5491 = vadd.f32 %v5267, 1.0
      %v5492 = vadd.f32 %v5268, 1.0
      %v5493 = vadd.f32 %v5269, 1.0
      %v5494 = vadd.f32 %v5270, 1.0
      %v5495 = vadd.f32 %v5271, 1.0
      %v5496 = vadd.f32 %v5272, 1.0
      %v5497 = vadd.f32 %v5273, 1.0
      %v5498 = vadd.f32 %v5274, 1.0
      %v5499 = vadd.f32 %v5275, 1.0
      %v5500 = vadd.f32 %v5276, 1.0
      %v5501 = vadd.f32 %v5277, 1.0
      %v5502 = vadd.f32 %v5278, 1.0
      %v5503 = vadd.f32 %v5279, 1.0
      %v5504 = vadd.f32 %v5280, 1.0
      %v5505 = vadd.f32 %v5281, 1.0
      %v5506 = vadd.f32 %v5282, 1.0
      %v5507 = vadd.f32 %v5283, 1.0
      %v5508 = vadd.f32 %v5284, 1.0
      %v5509 = vadd.f32 %v5285, 1.0
      %v5510 = vadd.f32 %v5286, 1.0
      %v5511 = vadd.f32 %v5287, 1.0
      %v5512 = vadd.f32 %v5288, 1.0
      %v5513 = vadd.f32 %v5289, 1.0
      %v5514 = vadd.f32 %v5290, 1.0
      %v5515 = vadd.f32 %v5291, 1.0
      %v5516 = vadd.f32 %v5292, 1.0
      %v5517 = vadd.f32 %v5293, 1.0
      %v5518 = vadd.f32 %v5294, 1.0
      %v5519 = vadd.f32 %v5295, 1.0
      %v5520 = vadd.f32 %v5296, 1.0
      %v5521 = vadd.f32 %v5297, 1.0
      %v5522 = vadd.f32 %v5298, 1.0
      %v5523 = vadd.f32 %v5299, 1.0
      %v5524 = vadd.f32 %v5300, 1.0
      %v5525 = vadd.f32 %v5301, 1.0
      %v5526 = vadd.f32 %v5302, 1.0
      %v5527 = vadd.f32 %v5303, 1.0
      %v5528 = vadd.f32 %v5304, 1.0
      %v5529 = vadd.f32 %v5305, 1.0
      %v5530 = vadd.f32 %v5306, 1.0
      %v5531 = vadd.f32 %v5307, 1.0
      %v5532 = vadd.f32 %v5308, 1.0
      %v5533 = vadd.f32 %v5309, 1.0
      %v5534 = vadd.f32 %v5310, 1.0
      %v5535 = vadd.f32 %v5311, 1.0
      %v5536 = vadd.f32 %v5312, 1.0
      %v5537 = vadd.f32 %v5313, 1.0
      %v5538 = vadd.f32 %v5314, 1.0
      %v5539 = vadd.f32 %v5315, 1.0
      %v5540 = vadd.f32 %v5316, 1.0
      %v5541 = vadd.f32 %v5317, 1.0
      %v5542 = vadd.f32 %v5318, 1.0
      %v5543 = vadd.f32 %v5319, 1.0
      %v5544 = vadd.f32 %v5320, 1.0
      %v5545 = vadd.f32 %v5321, 1.0
      %v5546 = vadd.f32 %v5322, 1.0
      %v5547 = vadd.f32 %v5323, 1.0
      %v5548 = vadd.f32 %v5324, 1.0
      %v5549 = vadd.f32 %v5325, 1.0
      %v5550 = vadd.f32 %v5326, 1.0
      %v5551 = vadd.f32 %v5327, 1.0
      %v5552 = vadd.f32 %v5328, 1.0
      %v5553 = vadd.f32 %v5329, 1.0
      %v5554 = vadd.f32 %v5330, 1.0
      %v5555 = vadd.f32 %v5331, 1.0
      %v5556 = vadd.f32 %v5332, 1.0
      %v5557 = vadd.f32 %v5333, 1.0
      %v5558 = vadd.f32 %v5334, 1.0
      %v5559 = vadd.f32 %v5335, 1.0
      %v5560 = vadd.f32 %v5336, 1.0
      %v5561 = vadd.f32 %v5337, 1.0
      %v5562 = vadd.f32 %v5338, 1.0
      %v5563 = vadd.f32 %v5339, 1.0
      %v5564 = vadd.f32 %v5340, 1.0
      %v5565 = vadd.f32 %v5341, 1.0
      %v5566 = vadd.f32 %v5342, 1.0
      %v5567 = vadd.f32 %v5343, 1.0
      %v5568 = vadd.f32 %v5344, 1.0
      %v5569 = vadd.f32 %v5345, 1.0
      %v5570 = vadd.f32 %v5346, 1.0
      %v5571 = vadd.f32 %v5347, 1.0
      %v5572 = vadd.f32 %v5348, 1.0
      %v5573 = vadd.f32 %v5349, 1.0
      %v5574 = vadd.f32 %v5350, 1.0
      %v5575 = vadd.f32 %v5351, 1.0
      %v5576 = vadd.f32 %v5352, 1.0
      %v5577 = vadd.f32 %v5353, 1.0
      %v5578 = vadd.f32 %v5354, 1.0
      %v5579 = vmul.f32 %v5355, 0.5
      %v5580 = vmul.f32 %v5356, 0.5
      %v5581 = vmul.f32 %v5357, 0.5
      %v5582 = vmul.f32 %v5358, 0.5
      %v5583 = vmul.f32 %v5359, 0.5
      %v5584 = vmul.f32 %v5360, 0.5
      %v5585 = vmul.f32 %v5361, 0.5
      %v5586 = vmul.f32 %v5362, 0.5
      %v5587 = vmul.f32 %v5363, 0.5
      %v5588 = vmul.f32 %v5364, 0.5
      %v5589 = vmul.f32 %v5365, 0.5
      %v5590 = vmul.f32 %v5366, 0.5
      %v5591 = vmul.f32 %v5367, 0.5
      %v5592 = vmul.f32 %v5368, 0.5
      %v5593 = vmul.f32 %v5369, 0.5
      %v5594 = vmul.f32 %v5370, 0.5
      %v5595 = vmul.f32 %v5371, 0.5
      %v5596 = vmul.f32 %v5372, 0.5
      %v5597 = vmul.f32 %v5373, 0.5
      %v5598 = vmul.f32 %v5374, 0.5
      %v5599 = vmul.f32 %v5375, 0.5
      %v5600 = vmul.f32 %v5376, 0.5
      %v5601 = vmul.f32 %v5377, 0.5
      %v5602 = vmul.f32 %v5378, 0.5
      %v5603 = vmul.f32 %v5379, 0.5
      %v5604 = vmul.f32 %v5380, 0.5
      %v5605 = vmul.f32 %v5381, 0.5
      %v5606 = vmul.f32 %v5382, 0.5
      %v5607 = vmul.f32 %v5383, 0.5
      %v5608 = vmul.f32 %v5384, 0.5
      %v5609 = vmul.f32 %v5385, 0.5
      %v5610 = vmul.f32 %v5386, 0.5
      %v5611 = vmul.f32 %v5387, 0.5
      %v5612 = vmul.f32 %v5388, 0.5
      %v5613 = vmul.f32 %v5389, 0.5
      %v5614 = vmul.f32 %v5390, 0.5
      %v5615 = vmul.f32 %v5391, 0.5
      %v5616 = vmul.f32 %v5392, 0.5
      %v5617 = vmul.f32 %v5393, 0.5
      %v5618 = vmul.f32 %v5394, 0.5
      %v5619 = vmul.f32 %v5395, 0.5
      %v5620 = vmul.f32 %v5396, 0.5
      %v5621 = vmul.f32 %v5397, 0.5
      %v5622 = vmul.f32 %v5398, 0.5
      %v5623 = vmul.f32 %v5399, 0.5
      %v5624 = vmul.f32 %v5400, 0.5
      %v5625 = vmul.f32 %v5401, 0.5
      %v5626 = vmul.f32 %v5402, 0.5
      %v5627 = vmul.f32 %v5403, 0.5
      %v5628 = vmul.f32 %v5404, 0.5
      %v5629 = vmul.f32 %v5405, 0.5
      %v5630 = vmul.f32 %v5406, 0.5
      %v5631 = vmul.f32 %v5407, 0.5
      %v5632 = vmul.f32 %v5408, 0.5
      %v5633 = vmul.f32 %v5409, 0.5
      %v5634 = vmul.f32 %v5410, 0.5
      %v5635 = vmul.f32 %v5411, 0.5
      %v5636 = vmul.f32 %v5412, 0.5
      %v5637 = vmul.f32 %v5413, 0.5
      %v5638 = vmul.f32 %v5414, 0.5
      %v5639 = vmul.f32 %v5415, 0.5
      %v5640 = vmul.f32 %v5416, 0.5
      %v5641 = vmul.f32 %v5417, 0.5
      %v5642 = vmul.f32 %v5418, 0.5
      %v5643 = vmul.f32 %v5419, 0.5
      %v5644 = vmul.f32 %v5420, 0.5
      %v5645 = vmul.f32 %v5421, 0.5
      %v5646 = vmul.f32 %v5422, 0.5
      %v5647 = vmul.f32 %v5423, 0.5
      %v5648 = vmul.f32 %v5424, 0.5
      %v5649 = vmul.f32 %v5425, 0.5
      %v5650 = vmul.f32 %v5426, 0.5
      %v5651 = vmul.f32 %v5427, 0.5
      %v5652 = vmul.f32 %v5428, 0.5
      %v5653 = vmul.f32 %v5429, 0.5
      %v5654 = vmul.f32 %v5430, 0.5
      %v5655 = vmul.f32 %v5431, 0.5
      %v5656 = vmul.f32 %v5432, 0.5
      %v5657 = vmul.f32 %v5433, 0.5
      %v5658 = vmul.f32 %v5434, 0.5
      %v5659 = vmul.f32 %v5435, 0.5
      %v5660 = vmul.f32 %v5436, 0.5
      %v5661 = vmul.f32 %v5437, 0.5
      %v5662 = vmul.f32 %v5438, 0.5
      %v5663 = vmul.f32 %v5439, 0.5
      %v5664 = vmul.f32 %v5440, 0.5
      %v5665 = vmul.f32 %v5441, 0.5
      %v5666 = vmul.f32 %v5442, 0.5
      %v5667 = vmul.f32 %v5443, 0.5
      %v5668 = vmul.f32 %v5444, 0.5
      %v5669 = vmul.f32 %v5445, 0.5
      %v5670 = vmul.f32 %v5446, 0.5
      %v5671 = vmul.f32 %v5447, 0.5
      %v5672 = vmul.f32 %v5448, 0.5
      %v5673 = vmul.f32 %v5449, 0.5
      %v5674 = vmul.f32 %v5450, 0.5
      %v5675 = vmul.f32 %v5451, 0.5
      %v5676 = vmul.f32 %v5452, 0.5
      %v5677 = vmul.f32 %v5453, 0.5
      %v5678 = vmul.f32 %v5454, 0.5
      %v5679 = vmul.f32 %v5455, 0.5
      %v5680 = vmul.f32 %v5456, 0.5
      %v5681 = vmul.f32 %v5457, 0.5
      %v5682 = vmul.f32 %v5458, 0.5
      %v5683 = vmul.f32 %v5459, 0.5
      %v5684 = vmul.f32 %v5460, 0.5
      %v5685 = vmul.f32 %v5461, 0.5
      %v5686 = vmul.f32 %v5462, 0.5
      %v5687 = vmul.f32 %v5463, 0.5
      %v5688 = vmul.f32 %v5464, 0.5
      %v5689 = vmul.f32 %v5465, 0.5
      %v5690 = vmul.f32 %v5466, 0.5
      %v5691 = vmul.f32 %v5467, 0.5
      %v5692 = vmul.f32 %v5468, 0.5
      %v5693 = vmul.f32 %v5469, 0.5
      %v5694 = vmul.f32 %v5470, 0.5
      %v5695 = vmul.f32 %v5471, 0.5
      %v5696 = vmul.f32 %v5472, 0.5
      %v5697 = vmul.f32 %v5473, 0.5
      %v5698 = vmul.f32 %v5474, 0.5
      %v5699 = vmul.f32 %v5475, 0.5
      %v5700 = vmul.f32 %v5476, 0.5
      %v5701 = vmul.f32 %v5477, 0.5
      %v5702 = vmul.f32 %v5478, 0.5
      %v5703 = vmul.f32 %v5479, 0.5
      %v5704 = vmul.f32 %v5480, 0.5
      %v5705 = vmul.f32 %v5481, 0.5
      %v5706 = vmul.f32 %v5482, 0.5
      %v5707 = vmul.f32 %v5483, 0.5
      %v5708 = vmul.f32 %v5484, 0.5
      %v5709 = vmul.f32 %v5485, 0.5
      %v5710 = vmul.f32 %v5486, 0.5
      %v5711 = vmul.f32 %v5487, 0.5
      %v5712 = vmul.f32 %v5488, 0.5
      %v5713 = vmul.f32 %v5489, 0.5
      %v5714 = vmul.f32 %v5490, 0.5
      %v5715 = vmul.f32 %v5491, 0.5
      %v5716 = vmul.f32 %v5492, 0.5
      %v5717 = vmul.f32 %v5493, 0.5
      %v5718 = vmul.f32 %v5494, 0.5
      %v5719 = vmul.f32 %v5495, 0.5
      %v5720 = vmul.f32 %v5496, 0.5
      %v5721 = vmul.f32 %v5497, 0.5
      %v5722 = vmul.f32 %v5498, 0.5
      %v5723 = vmul.f32 %v5499, 0.5
      %v5724 = vmul.f32 %v5500, 0.5
      %v5725 = vmul.f32 %v5501, 0.5
      %v5726 = vmul.f32 %v5502, 0.5
      %v5727 = vmul.f32 %v5503, 0.5
      %v5728 = vmul.f32 %v5504, 0.5
      %v5729 = vmul.f32 %v5505, 0.5
      %v5730 = vmul.f32 %v5506, 0.5
      %v5731 = vmul.f32 %v5507, 0.5
      %v5732 = vmul.f32 %v5508, 0.5
      %v5733 = vmul.f32 %v5509, 0.5
      %v5734 = vmul.f32 %v5510, 0.5
      %v5735 = vmul.f32 %v5511, 0.5
      %v5736 = vmul.f32 %v5512, 0.5
      %v5737 = vmul.f32 %v5513, 0.5
      %v5738 = vmul.f32 %v5514, 0.5
      %v5739 = vmul.f32 %v5515, 0.5
      %v5740 = vmul.f32 %v5516, 0.5
      %v5741 = vmul.f32 %v5517, 0.5
      %v5742 = vmul.f32 %v5518, 0.5
      %v5743 = vmul.f32 %v5519, 0.5
      %v5744 = vmul.f32 %v5520, 0.5
      %v5745 = vmul.f32 %v5521, 0.5
      %v5746 = vmul.f32 %v5522, 0.5
      %v5747 = vmul.f32 %v5523, 0.5
      %v5748 = vmul.f32 %v5524, 0.5
      %v5749 = vmul.f32 %v5525, 0.5
      %v5750 = vmul.f32 %v5526, 0.5
      %v5751 = vmul.f32 %v5527, 0.5
      %v5752 = vmul.f32 %v5528, 0.5
      %v5753 = vmul.f32 %v5529, 0.5
      %v5754 = vmul.f32 %v5530, 0.5
      %v5755 = vmul.f32 %v5531, 0.5
      %v5756 = vmul.f32 %v5532, 0.5
      %v5757 = vmul.f32 %v5533, 0.5
      %v5758 = vmul.f32 %v5534, 0.5
      %v5759 = vmul.f32 %v5535, 0.5
      %v5760 = vmul.f32 %v5536, 0.5
      %v5761 = vmul.f32 %v5537, 0.5
      %v5762 = vmul.f32 %v5538, 0.5
      %v5763 = vmul.f32 %v5539, 0.5
      %v5764 = vmul.f32 %v5540, 0.5
      %v5765 = vmul.f32 %v5541, 0.5
      %v5766 = vmul.f32 %v5542, 0.5
      %v5767 = vmul.f32 %v5543, 0.5
      %v5768 = vmul.f32 %v5544, 0.5
      %v5769 = vmul.f32 %v5545, 0.5
      %v5770 = vmul.f32 %v5546, 0.5
      %v5771 = vmul.f32 %v5547, 0.5
      %v5772 = vmul.f32 %v5548, 0.5
      %v5773 = vmul.f32 %v5549, 0.5
      %v5774 = vmul.f32 %v5550, 0.5
      %v5775 = vmul.f32 %v5551, 0.5
      %v5776 = vmul.f32 %v5552, 0.5
      %v5777 = vmul.f32 %v5553, 0.5
      %v5778 = vmul.f32 %v5554, 0.5
      %v5779 = vmul.f32 %v5555, 0.5
      %v5780 = vmul.f32 %v5556, 0.5
      %v5781 = vmul.f32 %v5557, 0.5
      %v5782 = vmul.f32 %v5558, 0.5
      %v5783 = vmul.f32 %v5559, 0.5
      %v5784 = vmul.f32 %v5560, 0.5
      %v5785 = vmul.f32 %v5561, 0.5
      %v5786 = vmul.f32 %v5562, 0.5
      %v5787 = vmul.f32 %v5563, 0.5
      %v5788 = vmul.f32 %v5564, 0.5
      %v5789 = vmul.f32 %v5565, 0.5
      %v5790 = vmul.f32 %v5566, 0.5
      %v5791 = vmul.f32 %v5567, 0.5
      %v5792 = vmul.f32 %v5568, 0.5
      %v5793 = vmul.f32 %v5569, 0.5
      %v5794 = vmul.f32 %v5570, 0.5
      %v5795 = vmul.f32 %v5571, 0.5
      %v5796 = vmul.f32 %v5572, 0.5
      %v5797 = vmul.f32 %v5573, 0.5
      %v5798 = vmul.f32 %v5574, 0.5
      %v5799 = vmul.f32 %v5575, 0.5
      %v5800 = vmul.f32 %v5576, 0.5
      %v5801 = vmul.f32 %v5577, 0.5
      %v5802 = vmul.f32 %v5578, 0.5
      %5803 = vst [vmem:[%s596] sm:$0xff] %v5579
      %5804 = vst [vmem:[%s596 + $0x8] sm:$0xff] %v5580
      %5805 = vst [vmem:[%s596 + $0x10] sm:$0xff] %v5581
      %5806 = vst [vmem:[%s596 + $0x18] sm:$0xff] %v5582
      %5807 = vst [vmem:[%s596 + $0x20] sm:$0xff] %v5583
      %5808 = vst [vmem:[%s596 + $0x28] sm:$0xff] %v5584
      %5809 = vst.msk [vmem:[%s596 + $0x30] sm:$0xff] %vm1334, %v5585
      %5810 = vst [vmem:[%s596 + $0x38] sm:$0xff] %v5586
      %5811 = vst [vmem:[%s596 + $0x40] sm:$0xff] %v5587
      %5812 = vst [vmem:[%s596 + $0x48] sm:$0xff] %v5588
      %5813 = vst [vmem:[%s596 + $0x50] sm:$0xff] %v5589
      %5814 = vst [vmem:[%s596 + $0x58] sm:$0xff] %v5590
      %5815 = vst [vmem:[%s596 + $0x60] sm:$0xff] %v5591
      %5816 = vst.msk [vmem:[%s596 + $0x68] sm:$0xff] %vm1334, %v5592
      %5817 = vst [vmem:[%s596 + $0x70] sm:$0xff] %v5593
      %5818 = vst [vmem:[%s596 + $0x78] sm:$0xff] %v5594
      %5819 = vst [vmem:[%s596 + $0x80] sm:$0xff] %v5595
      %5820 = vst [vmem:[%s596 + $0x88] sm:$0xff] %v5596
      %5821 = vst [vmem:[%s596 + $0x90] sm:$0xff] %v5597
      %5822 = vst [vmem:[%s596 + $0x98] sm:$0xff] %v5598
      %5823 = vst.msk [vmem:[%s596 + $0xa0] sm:$0xff] %vm1334, %v5599
      %5824 = vst [vmem:[%s596 + $0xa8] sm:$0xff] %v5600
      %5825 = vst [vmem:[%s596 + $0xb0] sm:$0xff] %v5601
      %5826 = vst [vmem:[%s596 + $0xb8] sm:$0xff] %v5602
      %5827 = vst [vmem:[%s596 + $0xc0] sm:$0xff] %v5603
      %5828 = vst [vmem:[%s596 + $0xc8] sm:$0xff] %v5604
      %5829 = vst [vmem:[%s596 + $0xd0] sm:$0xff] %v5605
      %5830 = vst.msk [vmem:[%s596 + $0xd8] sm:$0xff] %vm1334, %v5606
      %5831 = vst [vmem:[%s596 + $0xe0] sm:$0xff] %v5607
      %5832 = vst [vmem:[%s596 + $0xe8] sm:$0xff] %v5608
      %5833 = vst [vmem:[%s596 + $0xf0] sm:$0xff] %v5609
      %5834 = vst [vmem:[%s596 + $0xf8] sm:$0xff] %v5610
      %5835 = vst [vmem:[%s596 + $0x100] sm:$0xff] %v5611
      %5836 = vst [vmem:[%s596 + $0x108] sm:$0xff] %v5612
      %5837 = vst.msk [vmem:[%s596 + $0x110] sm:$0xff] %vm1334, %v5613
      %5838 = vst [vmem:[%s596 + $0x118] sm:$0xff] %v5614
      %5839 = vst [vmem:[%s596 + $0x120] sm:$0xff] %v5615
      %5840 = vst [vmem:[%s596 + $0x128] sm:$0xff] %v5616
      %5841 = vst [vmem:[%s596 + $0x130] sm:$0xff] %v5617
      %5842 = vst [vmem:[%s596 + $0x138] sm:$0xff] %v5618
      %5843 = vst [vmem:[%s596 + $0x140] sm:$0xff] %v5619
      %5844 = vst.msk [vmem:[%s596 + $0x148] sm:$0xff] %vm1334, %v5620
      %5845 = vst [vmem:[%s596 + $0x150] sm:$0xff] %v5621
      %5846 = vst [vmem:[%s596 + $0x158] sm:$0xff] %v5622
      %5847 = vst [vmem:[%s596 + $0x160] sm:$0xff] %v5623
      %5848 = vst [vmem:[%s596 + $0x168] sm:$0xff] %v5624
      %5849 = vst [vmem:[%s596 + $0x170] sm:$0xff] %v5625
      %5850 = vst [vmem:[%s596 + $0x178] sm:$0xff] %v5626
      %5851 = vst.msk [vmem:[%s596 + $0x180] sm:$0xff] %vm1334, %v5627
      %5852 = vst [vmem:[%s596 + $0x188] sm:$0xff] %v5628
      %5853 = vst [vmem:[%s596 + $0x190] sm:$0xff] %v5629
      %5854 = vst [vmem:[%s596 + $0x198] sm:$0xff] %v5630
      %5855 = vst [vmem:[%s596 + $0x1a0] sm:$0xff] %v5631
      %5856 = vst [vmem:[%s596 + $0x1a8] sm:$0xff] %v5632
      %5857 = vst [vmem:[%s596 + $0x1b0] sm:$0xff] %v5633
      %5858 = vst.msk [vmem:[%s596 + $0x1b8] sm:$0xff] %vm1334, %v5634
      %5859 = vst [vmem:[%s596 + $0x1c0] sm:$0xff] %v5635
      %5860 = vst [vmem:[%s596 + $0x1c8] sm:$0xff] %v5636
      %5861 = vst [vmem:[%s596 + $0x1d0] sm:$0xff] %v5637
      %5862 = vst [vmem:[%s596 + $0x1d8] sm:$0xff] %v5638
      %5863 = vst [vmem:[%s596 + $0x1e0] sm:$0xff] %v5639
      %5864 = vst [vmem:[%s596 + $0x1e8] sm:$0xff] %v5640
      %5865 = vst.msk [vmem:[%s596 + $0x1f0] sm:$0xff] %vm1334, %v5641
      %5866 = vst [vmem:[%s596 + $0x1f8] sm:$0xff] %v5642
      %5867 = vst [vmem:[%s596 + $0x200] sm:$0xff] %v5643
      %5868 = vst [vmem:[%s596 + $0x208] sm:$0xff] %v5644
      %5869 = vst [vmem:[%s596 + $0x210] sm:$0xff] %v5645
      %5870 = vst [vmem:[%s596 + $0x218] sm:$0xff] %v5646
      %5871 = vst [vmem:[%s596 + $0x220] sm:$0xff] %v5647
      %5872 = vst.msk [vmem:[%s596 + $0x228] sm:$0xff] %vm1334, %v5648
      %5873 = vst [vmem:[%s596 + $0x230] sm:$0xff] %v5649
      %5874 = vst [vmem:[%s596 + $0x238] sm:$0xff] %v5650
      %5875 = vst [vmem:[%s596 + $0x240] sm:$0xff] %v5651
      %5876 = vst [vmem:[%s596 + $0x248] sm:$0xff] %v5652
      %5877 = vst [vmem:[%s596 + $0x250] sm:$0xff] %v5653
      %5878 = vst [vmem:[%s596 + $0x258] sm:$0xff] %v5654
      %5879 = vst.msk [vmem:[%s596 + $0x260] sm:$0xff] %vm1334, %v5655
      %5880 = vst [vmem:[%s596 + $0x268] sm:$0xff] %v5656
      %5881 = vst [vmem:[%s596 + $0x270] sm:$0xff] %v5657
      %5882 = vst [vmem:[%s596 + $0x278] sm:$0xff] %v5658
      %5883 = vst [vmem:[%s596 + $0x280] sm:$0xff] %v5659
      %5884 = vst [vmem:[%s596 + $0x288] sm:$0xff] %v5660
      %5885 = vst [vmem:[%s596 + $0x290] sm:$0xff] %v5661
      %5886 = vst.msk [vmem:[%s596 + $0x298] sm:$0xff] %vm1334, %v5662
      %5887 = vst [vmem:[%s596 + $0x2a0] sm:$0xff] %v5663
      %5888 = vst [vmem:[%s596 + $0x2a8] sm:$0xff] %v5664
      %5889 = vst [vmem:[%s596 + $0x2b0] sm:$0xff] %v5665
      %5890 = vst [vmem:[%s596 + $0x2b8] sm:$0xff] %v5666
      %5891 = vst [vmem:[%s596 + $0x2c0] sm:$0xff] %v5667
      %5892 = vst [vmem:[%s596 + $0x2c8] sm:$0xff] %v5668
      %5893 = vst.msk [vmem:[%s596 + $0x2d0] sm:$0xff] %vm1334, %v5669
      %5894 = vst [vmem:[%s596 + $0x2d8] sm:$0xff] %v5670
      %5895 = vst [vmem:[%s596 + $0x2e0] sm:$0xff] %v5671
      %5896 = vst [vmem:[%s596 + $0x2e8] sm:$0xff] %v5672
      %5897 = vst [vmem:[%s596 + $0x2f0] sm:$0xff] %v5673
      %5898 = vst [vmem:[%s596 + $0x2f8] sm:$0xff] %v5674
      %5899 = vst [vmem:[%s596 + $0x300] sm:$0xff] %v5675
      %5900 = vst.msk [vmem:[%s596 + $0x308] sm:$0xff] %vm1334, %v5676
      %5901 = vst [vmem:[%s596 + $0x310] sm:$0xff] %v5677
      %5902 = vst [vmem:[%s596 + $0x318] sm:$0xff] %v5678
      %5903 = vst [vmem:[%s596 + $0x320] sm:$0xff] %v5679
      %5904 = vst [vmem:[%s596 + $0x328] sm:$0xff] %v5680
      %5905 = vst [vmem:[%s596 + $0x330] sm:$0xff] %v5681
      %5906 = vst [vmem:[%s596 + $0x338] sm:$0xff] %v5682
      %5907 = vst.msk [vmem:[%s596 + $0x340] sm:$0xff] %vm1334, %v5683
      %5908 = vst [vmem:[%s596 + $0x348] sm:$0xff] %v5684
      %5909 = vst [vmem:[%s596 + $0x350] sm:$0xff] %v5685
      %5910 = vst [vmem:[%s596 + $0x358] sm:$0xff] %v5686
      %5911 = vst [vmem:[%s596 + $0x360] sm:$0xff] %v5687
      %5912 = vst [vmem:[%s596 + $0x368] sm:$0xff] %v5688
      %5913 = vst [vmem:[%s596 + $0x370] sm:$0xff] %v5689
      %5914 = vst.msk [vmem:[%s596 + $0x378] sm:$0xff] %vm1334, %v5690
      %5915 = vst [vmem:[%s596 + $0x380] sm:$0xff] %v5691
      %5916 = vst [vmem:[%s596 + $0x388] sm:$0xff] %v5692
      %5917 = vst [vmem:[%s596 + $0x390] sm:$0xff] %v5693
      %5918 = vst [vmem:[%s596 + $0x398] sm:$0xff] %v5694
      %5919 = vst [vmem:[%s596 + $0x3a0] sm:$0xff] %v5695
      %5920 = vst [vmem:[%s596 + $0x3a8] sm:$0xff] %v5696
      %5921 = vst.msk [vmem:[%s596 + $0x3b0] sm:$0xff] %vm1334, %v5697
      %5922 = vst [vmem:[%s596 + $0x3b8] sm:$0xff] %v5698
      %5923 = vst [vmem:[%s596 + $0x3c0] sm:$0xff] %v5699
      %5924 = vst [vmem:[%s596 + $0x3c8] sm:$0xff] %v5700
      %5925 = vst [vmem:[%s596 + $0x3d0] sm:$0xff] %v5701
      %5926 = vst [vmem:[%s596 + $0x3d8] sm:$0xff] %v5702
      %5927 = vst [vmem:[%s596 + $0x3e0] sm:$0xff] %v5703
      %5928 = vst.msk [vmem:[%s596 + $0x3e8] sm:$0xff] %vm1334, %v5704
      %5929 = vst [vmem:[%s596 + $0x3f0] sm:$0xff] %v5705
      %5930 = vst [vmem:[%s596 + $0x3f8] sm:$0xff] %v5706
      %5931 = vst [vmem:[%s596 + $0x400] sm:$0xff] %v5707
      %5932 = vst [vmem:[%s596 + $0x408] sm:$0xff] %v5708
      %5933 = vst [vmem:[%s596 + $0x410] sm:$0xff] %v5709
      %5934 = vst [vmem:[%s596 + $0x418] sm:$0xff] %v5710
      %5935 = vst.msk [vmem:[%s596 + $0x420] sm:$0xff] %vm1334, %v5711
      %5936 = vst [vmem:[%s596 + $0x428] sm:$0xff] %v5712
      %5937 = vst [vmem:[%s596 + $0x430] sm:$0xff] %v5713
      %5938 = vst [vmem:[%s596 + $0x438] sm:$0xff] %v5714
      %5939 = vst [vmem:[%s596 + $0x440] sm:$0xff] %v5715
      %5940 = vst [vmem:[%s596 + $0x448] sm:$0xff] %v5716
      %5941 = vst [vmem:[%s596 + $0x450] sm:$0xff] %v5717
      %5942 = vst.msk [vmem:[%s596 + $0x458] sm:$0xff] %vm1334, %v5718
      %5943 = vst [vmem:[%s596 + $0x460] sm:$0xff] %v5719
      %5944 = vst [vmem:[%s596 + $0x468] sm:$0xff] %v5720
      %5945 = vst [vmem:[%s596 + $0x470] sm:$0xff] %v5721
      %5946 = vst [vmem:[%s596 + $0x478] sm:$0xff] %v5722
      %5947 = vst [vmem:[%s596 + $0x480] sm:$0xff] %v5723
      %5948 = vst [vmem:[%s596 + $0x488] sm:$0xff] %v5724
      %5949 = vst.msk [vmem:[%s596 + $0x490] sm:$0xff] %vm1334, %v5725
      %5950 = vst [vmem:[%s596 + $0x498] sm:$0xff] %v5726
      %5951 = vst [vmem:[%s596 + $0x4a0] sm:$0xff] %v5727
      %5952 = vst [vmem:[%s596 + $0x4a8] sm:$0xff] %v5728
      %5953 = vst [vmem:[%s596 + $0x4b0] sm:$0xff] %v5729
      %5954 = vst [vmem:[%s596 + $0x4b8] sm:$0xff] %v5730
      %5955 = vst [vmem:[%s596 + $0x4c0] sm:$0xff] %v5731
      %5956 = vst.msk [vmem:[%s596 + $0x4c8] sm:$0xff] %vm1334, %v5732
      %5957 = vst [vmem:[%s596 + $0x4d0] sm:$0xff] %v5733
      %5958 = vst [vmem:[%s596 + $0x4d8] sm:$0xff] %v5734
      %5959 = vst [vmem:[%s596 + $0x4e0] sm:$0xff] %v5735
      %5960 = vst [vmem:[%s596 + $0x4e8] sm:$0xff] %v5736
      %5961 = vst [vmem:[%s596 + $0x4f0] sm:$0xff] %v5737
      %5962 = vst [vmem:[%s596 + $0x4f8] sm:$0xff] %v5738
      %5963 = vst.msk [vmem:[%s596 + $0x500] sm:$0xff] %vm1334, %v5739
      %5964 = vst [vmem:[%s596 + $0x508] sm:$0xff] %v5740
      %5965 = vst [vmem:[%s596 + $0x510] sm:$0xff] %v5741
      %5966 = vst [vmem:[%s596 + $0x518] sm:$0xff] %v5742
      %5967 = vst [vmem:[%s596 + $0x520] sm:$0xff] %v5743
      %5968 = vst [vmem:[%s596 + $0x528] sm:$0xff] %v5744
      %5969 = vst [vmem:[%s596 + $0x530] sm:$0xff] %v5745
      %5970 = vst.msk [vmem:[%s596 + $0x538] sm:$0xff] %vm1334, %v5746
      %5971 = vst [vmem:[%s596 + $0x540] sm:$0xff] %v5747
      %5972 = vst [vmem:[%s596 + $0x548] sm:$0xff] %v5748
      %5973 = vst [vmem:[%s596 + $0x550] sm:$0xff] %v5749
      %5974 = vst [vmem:[%s596 + $0x558] sm:$0xff] %v5750
      %5975 = vst [vmem:[%s596 + $0x560] sm:$0xff] %v5751
      %5976 = vst [vmem:[%s596 + $0x568] sm:$0xff] %v5752
      %5977 = vst.msk [vmem:[%s596 + $0x570] sm:$0xff] %vm1334, %v5753
      %5978 = vst [vmem:[%s596 + $0x578] sm:$0xff] %v5754
      %5979 = vst [vmem:[%s596 + $0x580] sm:$0xff] %v5755
      %5980 = vst [vmem:[%s596 + $0x588] sm:$0xff] %v5756
      %5981 = vst [vmem:[%s596 + $0x590] sm:$0xff] %v5757
      %5982 = vst [vmem:[%s596 + $0x598] sm:$0xff] %v5758
      %5983 = vst [vmem:[%s596 + $0x5a0] sm:$0xff] %v5759
      %5984 = vst.msk [vmem:[%s596 + $0x5a8] sm:$0xff] %vm1334, %v5760
      %5985 = vst [vmem:[%s596 + $0x5b0] sm:$0xff] %v5761
      %5986 = vst [vmem:[%s596 + $0x5b8] sm:$0xff] %v5762
      %5987 = vst [vmem:[%s596 + $0x5c0] sm:$0xff] %v5763
      %5988 = vst [vmem:[%s596 + $0x5c8] sm:$0xff] %v5764
      %5989 = vst [vmem:[%s596 + $0x5d0] sm:$0xff] %v5765
      %5990 = vst [vmem:[%s596 + $0x5d8] sm:$0xff] %v5766
      %5991 = vst.msk [vmem:[%s596 + $0x5e0] sm:$0xff] %vm1334, %v5767
      %5992 = vst [vmem:[%s596 + $0x5e8] sm:$0xff] %v5768
      %5993 = vst [vmem:[%s596 + $0x5f0] sm:$0xff] %v5769
      %5994 = vst [vmem:[%s596 + $0x5f8] sm:$0xff] %v5770
      %5995 = vst [vmem:[%s596 + $0x600] sm:$0xff] %v5771
      %5996 = vst [vmem:[%s596 + $0x608] sm:$0xff] %v5772
      %5997 = vst [vmem:[%s596 + $0x610] sm:$0xff] %v5773
      %5998 = vst.msk [vmem:[%s596 + $0x618] sm:$0xff] %vm1334, %v5774
      %5999 = vst [vmem:[%s596 + $0x620] sm:$0xff] %v5775
      %6000 = vst [vmem:[%s596 + $0x628] sm:$0xff] %v5776
      %6001 = vst [vmem:[%s596 + $0x630] sm:$0xff] %v5777
      %6002 = vst [vmem:[%s596 + $0x638] sm:$0xff] %v5778
      %6003 = vst [vmem:[%s596 + $0x640] sm:$0xff] %v5779
      %6004 = vst [vmem:[%s596 + $0x648] sm:$0xff] %v5780
      %6005 = vst.msk [vmem:[%s596 + $0x650] sm:$0xff] %vm1334, %v5781
      %6006 = vst [vmem:[%s596 + $0x658] sm:$0xff] %v5782
      %6007 = vst [vmem:[%s596 + $0x660] sm:$0xff] %v5783
      %6008 = vst [vmem:[%s596 + $0x668] sm:$0xff] %v5784
      %6009 = vst [vmem:[%s596 + $0x670] sm:$0xff] %v5785
      %6010 = vst [vmem:[%s596 + $0x678] sm:$0xff] %v5786
      %6011 = vst [vmem:[%s596 + $0x680] sm:$0xff] %v5787
      %6012 = vst.msk [vmem:[%s596 + $0x688] sm:$0xff] %vm1334, %v5788
      %6013 = vst [vmem:[%s596 + $0x690] sm:$0xff] %v5789
      %6014 = vst [vmem:[%s596 + $0x698] sm:$0xff] %v5790
      %6015 = vst [vmem:[%s596 + $0x6a0] sm:$0xff] %v5791
      %6016 = vst [vmem:[%s596 + $0x6a8] sm:$0xff] %v5792
      %6017 = vst [vmem:[%s596 + $0x6b0] sm:$0xff] %v5793
      %6018 = vst [vmem:[%s596 + $0x6b8] sm:$0xff] %v5794
      %6019 = vst.msk [vmem:[%s596 + $0x6c0] sm:$0xff] %vm1334, %v5795
      %6020 = vst [vmem:[%s596 + $0x6c8] sm:$0xff] %v5796
      %6021 = vst [vmem:[%s596 + $0x6d0] sm:$0xff] %v5797
      %6022 = vst [vmem:[%s596 + $0x6d8] sm:$0xff] %v5798
      %6023 = vst [vmem:[%s596 + $0x6e0] sm:$0xff] %v5799
      %6024 = vst [vmem:[%s596 + $0x6e8] sm:$0xff] %v5800
      %6025 = vst [vmem:[%s596 + $0x6f0] sm:$0xff] %v5801
      %6026 = vst.msk [vmem:[%s596 + $0x6f8] sm:$0xff] %vm1334, %v5802
      %s6027 = smul.u32 32, %s30
      %p6028 = scmp.lt.s32.totalorder %s6027, 63
      %s6029 = scalar_select %p6028, %s6027, 63
      %s6030 = smul.addr %s6029, 8
      %s6031 = scalar_lea.vmem %s17, %s6030
      %s6032 = smul.u32 32, %s30
      %p6033 = scmp.lt.s32.totalorder %s6032, 63
      %s6034 = scalar_select %p6033, %s6032, 63
      %s6035 = smul.addr %s6034, 7
      %s6036 = smul.addr %s6035, 8
      %s6037 = scalar_lea.vmem %s18, %s6036
      // Predicated region
      $region89: #{autoencode_forward.1} parent=87 // pred_check
        %p6038 = pneg %p410
      $region90: #{autoencode_forward.1} parent=87 // pred_check_branch
        %6040 = sbr.rel (%p6038) target = $region92
      $region91: #{autoencode_forward.1} parent=87 // pred_region
        %s6041 = smul.u32 32, %s30
      $region92: #{autoencode_forward.1} parent=87 // pred_fallthru
        _
      // Predicated region
      $region93: #{autoencode_forward.1} parent=87 // pred_check
        %p6042 = pneg %p436
      $region94: #{autoencode_forward.1} parent=87 // pred_check_branch
        %6044 = sbr.rel (%p6042) target = $region96
      $region95: #{autoencode_forward.1} parent=87 // pred_region
        %s6045 = smul.u32 32, %s30
      $region96: #{autoencode_forward.1} parent=87 // pred_fallthru
        _
    $region88: #{autoencode_forward.1} parent=5 // pred_fallthru
      _
    %p6046 = scmp.le.s32.totalorder 2, %s25
    // Predicated region
    $region97: #{autoencode_forward.1} parent=5 // pred_check
      %p6047 = pneg %p6046
    $region98: #{autoencode_forward.1} parent=5 // pred_check_branch
      %6049 = sbr.rel (%p6047) target = $region100
    $region99: #{autoencode_forward.1} parent=5 // pred_region
      %s6050 = ssub.s32 %s25, 2
      // Predicated region
      $region101: #{autoencode_forward.1} parent=99 // pred_check
        %p6051 = pneg %p416
      $region102: #{autoencode_forward.1} parent=99 // pred_check_branch
        %6053 = sbr.rel (%p6051) target = $region104
      $region103: #{autoencode_forward.1} parent=99 // pred_region
        %s6054 = smul.u32 32, %s31
        %p6055 = scmp.lt.s32.totalorder %s6054, 63
        %s6056 = scalar_select %p6055, %s6054, 63
        %s6057 = smul.addr %s6056, 8
        %s6058 = scalar_lea.vmem %s17, %s6057
      $region104: #{autoencode_forward.1} parent=99 // pred_fallthru
        _
      // Predicated region
      $region105: #{autoencode_forward.1} parent=99 // pred_check
        %p6059 = pneg %p442
      $region106: #{autoencode_forward.1} parent=99 // pred_check_branch
        %6061 = sbr.rel (%p6059) target = $region108
      $region107: #{autoencode_forward.1} parent=99 // pred_region
        %s6062 = smul.u32 32, %s31
        %p6063 = scmp.lt.s32.totalorder %s6062, 63
        %s6064 = scalar_select %p6063, %s6062, 63
        %s6065 = smul.addr %s6064, 7
        %s6066 = smul.addr %s6065, 8
        %s6067 = scalar_lea.vmem %s18, %s6066
      $region108: #{autoencode_forward.1} parent=99 // pred_fallthru
        _
    $region100: #{autoencode_forward.1} parent=5 // pred_fallthru
      _
  $region6: #{autoencode_forward.1} parent=0 // loop_footer
    %s29 = sadd.s32 1, %s25
  $region7: #{autoencode_forward.1} parent=0 // loop_footer_branch
    %24 = sbr.rel target = $region3
  $region8: #{autoencode_forward.1} parent=0 // loop_exit
    _

</llo_original>
